<compile_context>
chip_gen: v5e
topology: v5e:2x2
jax: 0.10.0
libtpu: 0.0.40
codegen_flags: <defaults>
</compile_context>

<pallas_src>
import functools
import math

import jax
import jax.numpy as jnp
from jax.experimental import pallas as pl
from jax.experimental.pallas import tpu as pltpu

# ----------------------------- model config ---------------------------------
VOCAB = 50
MAXPOS = 32
SEQ = 8
HIDDEN = 32          # config.hidden_size
NUM_HEADS = 2
HEAD_DIM = HIDDEN // NUM_HEADS
INTER = 64           # intermediate_size
NUM_LAYERS = 2
UTTER_DIM = 16
PAD_ID = 1
LN_EPS = 1e-5


# ------------------------------ fused kernel --------------------------------
def _utter_encoder_kernel(
    emb_ref, mask_ref, vmask_ref,
    emb_ln_ref, wqkv_ref, bqkv_ref, wo_ref, bo_ref, ln1_ref,
    w1_ref, b1_ref, w2_ref, b2_ref, ln2_ref,
    map_w_ref, map_b_ref,
    gih_ref, ghh_ref, gbih_ref, gbhh_ref, gsel_ref,
    o_ref,
    *, num_layers, num_heads, head_dim, ln_eps):
  """Whole UtterEncoder forward (all conversations) in ONE grid step."""
  R, H = emb_ref.shape                 # R = B*T*S token rows, (t, b, s) order
  N, _, S = mask_ref.shape             # N = T*B utterances, (t, b) row order
  T, B, D2 = vmask_ref.shape           # D2 = 2 * utter_dim
  D = D2 // 2
  scale = 1.0 / math.sqrt(head_dim)

  def layernorm(x, gb):                # gb: [2, H] = (gamma; beta)
    mu = jnp.mean(x, axis=-1, keepdims=True)
    var = jnp.mean((x - mu) ** 2, axis=-1, keepdims=True)
    return (x - mu) * jax.lax.rsqrt(var + ln_eps) * gb[0:1, :] + gb[1:2, :]

  def dense(x, w_bf16, b):             # weights arrive pre-cast to bf16
    return jnp.dot(x.astype(jnp.bfloat16), w_bf16,
                   preferred_element_type=jnp.float32) + b

  # ---- embedding layernorm: every token row of every conversation at once ---
  x = layernorm(emb_ref[...].astype(jnp.float32), emb_ln_ref[...])      # [R, H]
  mask_b = mask_ref[...]                                                # [N, 1, S]

  # ---- transformer layers (statically unrolled) -----------------------------
  for l in range(num_layers):
    qkv = dense(x, wqkv_ref[l], bqkv_ref[l])                            # [R, 3H]
    q = (qkv[:, :H] * scale).reshape(N, S, H)                           # scale folded in
    k = qkv[:, H:2 * H].reshape(N, S, H)
    v = qkv[:, 2 * H:].reshape(N, S, H)

    attn = bo_ref[l]                                                    # [1, H]
    for h in range(num_heads):
      sl = slice(h * head_dim, (h + 1) * head_dim)
      qh = q[:, :, sl].astype(jnp.bfloat16)
      kh = k[:, :, sl].astype(jnp.bfloat16)
      vh = v[:, :, sl].astype(jnp.bfloat16)
      sc = jnp.einsum("nqd,nkd->nqk", qh, kh,
                      preferred_element_type=jnp.float32) + mask_b      # [N, S, S]
      sc = sc - jnp.max(sc, axis=-1, keepdims=True)
      p = jnp.exp(sc)
      p = p * pl.reciprocal(jnp.sum(p, axis=-1, keepdims=True), approx=True)
      ctx = jnp.einsum("nqk,nkd->nqd", p.astype(jnp.bfloat16), vh,
                       preferred_element_type=jnp.float32)              # [N, S, hd]
      # head concat removed: accumulate the per-head output projection instead
      attn = attn + jnp.dot(ctx.reshape(R, head_dim).astype(jnp.bfloat16),
                            wo_ref[l, h], preferred_element_type=jnp.float32)
    x = layernorm(attn + x, ln1_ref[l])                                 # residual fused

    inter = dense(x, w1_ref[l], b1_ref[l])
    # TODO(synk): RoBERTa uses exact erf-GELU; tanh approximation used for
    # Mosaic-safe lowering (numerically very close).
    inter = jax.nn.gelu(inter, approximate=True)
    x = layernorm(dense(inter, w2_ref[l], b2_ref[l]) + x, ln2_ref[l])

  # ---- torch.max over tokens + nn.Linear(hidden, utter_dim) -----------------
  pooled = jnp.max(x.reshape(N, S, H), axis=1)                          # [N, H]
  mapped = dense(pooled, map_w_ref[...], map_b_ref[...])                # [N, D]

  # ---- bidirectional GRU: whole batch + both directions, 1 matmul / step ----
  # Gate column layout everywhere: [r_f | r_b | z_f | z_b | n_f | n_b] (D each).
  gi = (jnp.dot(mapped.astype(jnp.bfloat16), gih_ref[...],
                preferred_element_type=jnp.float32)
        + gbih_ref[...]).reshape(T, B, 3 * D2)                          # [T, B, 6D]
  gsel = gsel_ref[...]                                                  # 1.0 on fwd-gate cols

  hc = jnp.zeros((B, D2), jnp.float32)                                  # [h_fwd | h_bwd]
  step_out = [None] * T
  # TODO(synk): switch to lax.fori_loop + VMEM scratch if max_T grows large.
  for s in range(T):
    # fwd direction consumes time s, bwd direction consumes time T-1-s
    gi_s = gsel * gi[s] + (1.0 - gsel) * gi[T - 1 - s]                  # [B, 6D]
    gh = jnp.dot(hc.astype(jnp.bfloat16), ghh_ref[...],                 # block-diag W_hh
                 preferred_element_type=jnp.float32) + gbhh_ref[...]
    r = jax.nn.sigmoid(gi_s[:, :D2] + gh[:, :D2])
    z = jax.nn.sigmoid(gi_s[:, D2:2 * D2] + gh[:, D2:2 * D2])
    n = jnp.tanh(gi_s[:, 2 * D2:] + r * gh[:, 2 * D2:])
    hn = (1.0 - z) * n + z * hc
    vm = vmask_ref[s]                                                   # [B, 2D] validity
    hc = vm * hn + (1.0 - vm) * hc                                      # packed-seq carry
    step_out[s] = vm * hn                                               # zero at padding

  # out[t] = [h_fwd(t) | h_bwd(t)]; bwd(t) was produced at loop step T-1-t.
  fwd = jnp.stack([step_out[t][:, :D] for t in range(T)], axis=0)       # [T, B, D]
  bwd = jnp.stack([step_out[T - 1 - t][:, D:] for t in range(T)], axis=0)
  o_ref[...] = jnp.concatenate([fwd, bwd], axis=-1).astype(o_ref.dtype)


# ------------------------------ forward wrapper ------------------------------
def utter_encoder_forward(params, conv_utterance, attention_mask, conv_len,
                          type="utt"):
  if type == "csk":
    # TODO(synk): 'csk' branch (max-pool without mapping) not implemented in
    # the fused kernel; only the default 'utt' path is supported here.
    raise NotImplementedError("csk path not implemented")

  B = len(conv_utterance)
  max_T = max(int(c.shape[0]) for c in conv_utterance)
  S = int(conv_utterance[0].shape[1])
  L, H, D = NUM_LAYERS, HIDDEN, UTTER_DIM
  N, R = B * max_T, B * max_T * S

  # Batch the conversations: pad utterance counts, stack to [B, T, S].
  ids = jnp.stack([
      jnp.pad(c, ((0, max_T - c.shape[0]), (0, 0)), constant_values=PAD_ID)
      for c in conv_utterance])
  amsk = jnp.stack([
      jnp.pad(a, ((0, max_T - a.shape[0]), (0, 0)))
      for a in attention_mask]).astype(jnp.float32)

  # RoBERTa-style position ids + embedding gathers (plain-JAX glue).
  not_pad = (ids != PAD_ID).astype(jnp.int32)
  position_ids = jnp.cumsum(not_pad, axis=-1) * not_pad + PAD_ID
  emb = (jnp.take(params["word_emb"], ids, axis=0)
         + jnp.take(params["pos_emb"], position_ids, axis=0)
         + params["type_emb"][0][None, None, None, :])                  # [B, T, S, H]

  # Time-major (t, b) row order so the GRU input projection comes out [T, B, .]
  emb_flat = jnp.transpose(emb, (1, 0, 2, 3)).reshape(R, H)             # [B*T*S, H]
  mask_add = jnp.transpose((1.0 - amsk) * -1e9, (1, 0, 2)).reshape(N, 1, S)

  # Per-timestep GRU validity masks (fwd half = time s, bwd half = time T-1-s).
  conv_len = jnp.asarray(conv_len, jnp.int32)
  t_idx = jnp.arange(max_T)
  valid_f = (t_idx[:, None] < conv_len[None, :]).astype(jnp.float32)            # [T, B]
  valid_b = ((max_T - 1 - t_idx)[:, None] < conv_len[None, :]).astype(jnp.float32)
  vmask = jnp.concatenate([jnp.repeat(valid_f[:, :, None], D, axis=-1),
                           jnp.repeat(valid_b[:, :, None], D, axis=-1)],
                          axis=-1)                                       # [T, B, 2D]

  # ---- host-side weight prep: bf16 MXU operands, per-head Wo, fused bi-GRU --
  bf16 = jnp.bfloat16
  wqkv = params["wqkv"].astype(bf16)
  wo = params["wo"].reshape(L, NUM_HEADS, HEAD_DIM, H).astype(bf16)
  w1 = params["w1"].astype(bf16)
  w2 = params["w2"].astype(bf16)
  map_w = params["map_w"].astype(bf16)

  def gate_cat(f, b):      # two [..., 3D] -> [..., 6D] in [r_f r_b z_f z_b n_f n_b]
    return jnp.concatenate([f[..., :D], b[..., :D],
                            f[..., D:2 * D], b[..., D:2 * D],
                            f[..., 2 * D:], b[..., 2 * D:]], axis=-1)

  wih, whh = params["gru_wih"], params["gru_whh"]
  bih, bhh = params["gru_bih"], params["gru_bhh"]
  zero_d = jnp.zeros((D, 3 * D), jnp.float32)
  gih = gate_cat(wih[0], wih[1]).astype(bf16)                            # [D, 6D]
  ghh = jnp.concatenate([gate_cat(whh[0], zero_d),
                         gate_cat(zero_d, whh[1])], axis=0).astype(bf16)  # [2D, 6D]
  gbih = gate_cat(bih[0], bih[1])                                        # [1, 6D]
  gbhh = gate_cat(bhh[0], bhh[1])
  gsel = gate_cat(jnp.ones((1, 3 * D), jnp.float32),
                  jnp.zeros((1, 3 * D), jnp.float32))                    # fwd-col selector

  def fullspec(shape):                                                   # whole array, 1 step
    n = len(shape)
    return pl.BlockSpec(shape, lambda i, _n=n: (0,) * _n)

  inputs = (emb_flat, mask_add, vmask,
            params["emb_ln"], wqkv, params["bqkv"], wo, params["bo"],
            params["ln1"], w1, params["b1"], w2, params["b2"], params["ln2"],
            map_w, params["map_b"], gih, ghh, gbih, gbhh, gsel)

  grid_spec = pltpu.PrefetchScalarGridSpec(
      num_scalar_prefetch=0,
      grid=(1,),                                    # single grid step: batch folded in
      in_specs=[fullspec(x.shape) for x in inputs],
      out_specs=pl.BlockSpec((max_T, B, 2 * D), lambda i: (0, 0, 0)),
  )

  fused = pl.pallas_call(
      functools.partial(_utter_encoder_kernel, num_layers=NUM_LAYERS,
                        num_heads=NUM_HEADS, head_dim=HEAD_DIM, ln_eps=LN_EPS),
      out_shape=jax.ShapeDtypeStruct((max_T, B, 2 * D), jnp.float32),
      grid_spec=grid_spec,
  )
  out_tbd = fused(*inputs)                          # [T, B, 2*utter_dim]
  return jnp.transpose(out_tbd, (1, 0, 2))          # batch-first like the module


# ------------------------------ parameter init -------------------------------
def init_params(key):
  keys = iter(jax.random.split(key, 32))

  def nrm(shape, scale=0.02):
    return (scale * jax.random.normal(next(keys), shape)).astype(jnp.float32)

  L, H, D = NUM_LAYERS, HIDDEN, UTTER_DIM

  def ln_pair(n_layers=None):
    gb = jnp.stack([jnp.ones((H,), jnp.float32), jnp.zeros((H,), jnp.float32)])
    return gb if n_layers is None else jnp.tile(gb[None], (n_layers, 1, 1))

  return {
      "word_emb": nrm((VOCAB, H)),
      "pos_emb": nrm((MAXPOS, H)),
      "type_emb": nrm((2, H)),
      "emb_ln": ln_pair(),
      # Wq/Wk/Wv concatenated into one [H, 3H] per layer (single MXU push)
      "wqkv": nrm((L, H, 3 * H)),
      "bqkv": jnp.zeros((L, 1, 3 * H), jnp.float32),
      "wo": nrm((L, H, H)),
      "bo": jnp.zeros((L, 1, H), jnp.float32),
      "ln1": ln_pair(L),
      "w1": nrm((L, H, INTER)),
      "b1": jnp.zeros((L, 1, INTER), jnp.float32),
      "w2": nrm((L, INTER, H)),
      "b2": jnp.zeros((L, 1, H), jnp.float32),
      "ln2": ln_pair(L),
      # nn.Linear(hidden, utter_dim) stored transposed as [H, utter_dim]
      "map_w": nrm((H, D)),
      "map_b": jnp.zeros((1, D), jnp.float32),
      # GRU weights pre-transposed [in, 3H]; index 0 = forward, 1 = backward
      "gru_wih": nrm((2, D, 3 * D), 0.1),
      "gru_whh": nrm((2, D, 3 * D), 0.1),
      "gru_bih": jnp.zeros((2, 1, 3 * D), jnp.float32),
      "gru_bhh": jnp.zeros((2, 1, 3 * D), jnp.float32),
  }


# ----------------------------------- main ------------------------------------
if __name__ == "__main__":
  key = jax.random.PRNGKey(0)
  params = init_params(key)

  # Two conversations: 3 utterances and 2 utterances, each SEQ=8 tokens.
  k1, k2 = jax.random.split(jax.random.PRNGKey(0), 2)
  lens1 = jnp.array([8, 6, 5])
  lens2 = jnp.array([7, 4])

  def make_conv(k, num_utt, lens):
    ids = jax.random.randint(k, (num_utt, SEQ), 2, VOCAB, dtype=jnp.int32)
    mask = (jnp.arange(SEQ)[None, :] < lens[:, None]).astype(jnp.float32)
    ids = jnp.where(mask > 0, ids, PAD_ID)
    return ids, mask

  cutt1, amsk1 = make_conv(k1, 3, lens1)
  cutt2, amsk2 = make_conv(k2, 2, lens2)

  conv_utterance = [cutt1, cutt2]
  attention_mask = [amsk1, amsk2]
  conv_len = jnp.array([3, 2], dtype=jnp.int32)

  out = utter_encoder_forward(params, conv_utterance, attention_mask, conv_len,
                              type="utt")
  out = jax.block_until_ready(out)
  assert out.shape == (2, 3, 2 * UTTER_DIM), out.shape
  assert bool(jnp.all(jnp.isfinite(out)))
  print("KERNEL_OK")
</pallas_src>

<mosaic_0001>
module attributes {stable_mosaic.version = 11 : i64} {
  func.func @_utter_encoder_kernel(%arg0: i32, %arg1: memref<48x32xf32, #tpu.memory_space<vmem>>, %arg2: memref<6x1x8xf32, #tpu.memory_space<vmem>>, %arg3: memref<3x2x32xf32, #tpu.memory_space<vmem>>, %arg4: memref<2x32xf32, #tpu.memory_space<vmem>>, %arg5: memref<2x32x96xbf16, #tpu.memory_space<vmem>>, %arg6: memref<2x1x96xf32, #tpu.memory_space<vmem>>, %arg7: memref<2x2x16x32xbf16, #tpu.memory_space<vmem>>, %arg8: memref<2x1x32xf32, #tpu.memory_space<vmem>>, %arg9: memref<2x2x32xf32, #tpu.memory_space<vmem>>, %arg10: memref<2x32x64xbf16, #tpu.memory_space<vmem>>, %arg11: memref<2x1x64xf32, #tpu.memory_space<vmem>>, %arg12: memref<2x64x32xbf16, #tpu.memory_space<vmem>>, %arg13: memref<2x1x32xf32, #tpu.memory_space<vmem>>, %arg14: memref<2x2x32xf32, #tpu.memory_space<vmem>>, %arg15: memref<32x16xbf16, #tpu.memory_space<vmem>>, %arg16: memref<1x16xf32, #tpu.memory_space<vmem>>, %arg17: memref<16x96xbf16, #tpu.memory_space<vmem>>, %arg18: memref<32x96xbf16, #tpu.memory_space<vmem>>, %arg19: memref<1x96xf32, #tpu.memory_space<vmem>>, %arg20: memref<1x96xf32, #tpu.memory_space<vmem>>, %arg21: memref<1x96xf32, #tpu.memory_space<vmem>>, %arg22: memref<3x2x32xf32, #tpu.memory_space<vmem>>) attributes {dimension_semantics = [#tpu.dimension_semantics<arbitrary>], iteration_bounds = array<i64: 1>, scalar_prefetch = 0 : i64, scratch_operands = 0 : i64, tpu.core_type = #tpu.core_type<tc>, window_params = [{pipeline_mode = #tpu.pipeline_mode<synchronous>, transform_indices = @transform_0, window_bounds = array<i64: 48, 32>}, {pipeline_mode = #tpu.pipeline_mode<synchronous>, transform_indices = @transform_1, window_bounds = array<i64: 6, 1, 8>}, {pipeline_mode = #tpu.pipeline_mode<synchronous>, transform_indices = @transform_2, window_bounds = array<i64: 3, 2, 32>}, {pipeline_mode = #tpu.pipeline_mode<synchronous>, transform_indices = @transform_3, window_bounds = array<i64: 2, 32>}, {pipeline_mode = #tpu.pipeline_mode<synchronous>, transform_indices = @transform_4, window_bounds = array<i64: 2, 32, 96>}, {pipeline_mode = #tpu.pipeline_mode<synchronous>, transform_indices = @transform_5, window_bounds = array<i64: 2, 1, 96>}, {pipeline_mode = #tpu.pipeline_mode<synchronous>, transform_indices = @transform_6, window_bounds = array<i64: 2, 2, 16, 32>}, {pipeline_mode = #tpu.pipeline_mode<synchronous>, transform_indices = @transform_7, window_bounds = array<i64: 2, 1, 32>}, {pipeline_mode = #tpu.pipeline_mode<synchronous>, transform_indices = @transform_8, window_bounds = array<i64: 2, 2, 32>}, {pipeline_mode = #tpu.pipeline_mode<synchronous>, transform_indices = @transform_9, window_bounds = array<i64: 2, 32, 64>}, {pipeline_mode = #tpu.pipeline_mode<synchronous>, transform_indices = @transform_10, window_bounds = array<i64: 2, 1, 64>}, {pipeline_mode = #tpu.pipeline_mode<synchronous>, transform_indices = @transform_11, window_bounds = array<i64: 2, 64, 32>}, {pipeline_mode = #tpu.pipeline_mode<synchronous>, transform_indices = @transform_12, window_bounds = array<i64: 2, 1, 32>}, {pipeline_mode = #tpu.pipeline_mode<synchronous>, transform_indices = @transform_13, window_bounds = array<i64: 2, 2, 32>}, {pipeline_mode = #tpu.pipeline_mode<synchronous>, transform_indices = @transform_14, window_bounds = array<i64: 32, 16>}, {pipeline_mode = #tpu.pipeline_mode<synchronous>, transform_indices = @transform_15, window_bounds = array<i64: 1, 16>}, {pipeline_mode = #tpu.pipeline_mode<synchronous>, transform_indices = @transform_16, window_bounds = array<i64: 16, 96>}, {pipeline_mode = #tpu.pipeline_mode<synchronous>, transform_indices = @transform_17, window_bounds = array<i64: 32, 96>}, {pipeline_mode = #tpu.pipeline_mode<synchronous>, transform_indices = @transform_18, window_bounds = array<i64: 1, 96>}, {pipeline_mode = #tpu.pipeline_mode<synchronous>, transform_indices = @transform_19, window_bounds = array<i64: 1, 96>}, {pipeline_mode = #tpu.pipeline_mode<synchronous>, transform_indices = @transform_20, window_bounds = array<i64: 1, 96>}, {pipeline_mode = #tpu.pipeline_mode<synchronous>, transform_indices = @transform_21, window_bounds = array<i64: 3, 2, 32>}]} {
    %c0 = arith.constant 0 : index
    %c0_0 = arith.constant 0 : index
    %0 = vector.load %arg1[%c0, %c0_0] : memref<48x32xf32, #tpu.memory_space<vmem>>, vector<48x32xf32>
    %c0_1 = arith.constant 0 : index
    %c0_2 = arith.constant 0 : index
    %1 = vector.load %arg4[%c0_1, %c0_2] : memref<2x32xf32, #tpu.memory_space<vmem>>, vector<2x32xf32>
    %cst = arith.constant dense<0.000000e+00> : vector<48xf32>
    %2 = vector.multi_reduction <add>, %0, %cst [1] : vector<48x32xf32> to vector<48xf32>
    %3 = vector.shape_cast %2 : vector<48xf32> to vector<48x1xf32>
    %cst_3 = arith.constant 3.200000e+01 : f32
    %4 = vector.broadcast %cst_3 : f32 to vector<48x1xf32>
    %5 = arith.divf %3, %4 : vector<48x1xf32>
    %6 = vector.broadcast %5 : vector<48x1xf32> to vector<48x32xf32>
    %7 = arith.subf %0, %6 : vector<48x32xf32>
    %8 = arith.mulf %7, %7 : vector<48x32xf32>
    %cst_4 = arith.constant dense<0.000000e+00> : vector<48xf32>
    %9 = vector.multi_reduction <add>, %8, %cst_4 [1] : vector<48x32xf32> to vector<48xf32>
    %10 = vector.shape_cast %9 : vector<48xf32> to vector<48x1xf32>
    %cst_5 = arith.constant 3.200000e+01 : f32
    %11 = vector.broadcast %cst_5 : f32 to vector<48x1xf32>
    %12 = arith.divf %10, %11 : vector<48x1xf32>
    %13 = vector.broadcast %5 : vector<48x1xf32> to vector<48x32xf32>
    %14 = arith.subf %0, %13 : vector<48x32xf32>
    %cst_6 = arith.constant 9.99999974E-6 : f32
    %15 = vector.broadcast %cst_6 : f32 to vector<48x1xf32>
    %16 = arith.addf %12, %15 : vector<48x1xf32>
    %17 = math.rsqrt %16 : vector<48x1xf32>
    %18 = vector.broadcast %17 : vector<48x1xf32> to vector<48x32xf32>
    %19 = arith.mulf %14, %18 : vector<48x32xf32>
    %20 = vector.extract_strided_slice %1 {offsets = [0, 0], sizes = [1, 32], strides = [1, 1]} : vector<2x32xf32> to vector<1x32xf32>
    %21 = vector.broadcast %20 : vector<1x32xf32> to vector<48x32xf32>
    %22 = arith.mulf %19, %21 : vector<48x32xf32>
    %23 = vector.extract_strided_slice %1 {offsets = [1, 0], sizes = [1, 32], strides = [1, 1]} : vector<2x32xf32> to vector<1x32xf32>
    %24 = vector.broadcast %23 : vector<1x32xf32> to vector<48x32xf32>
    %25 = arith.addf %22, %24 : vector<48x32xf32>
    %c0_7 = arith.constant 0 : index
    %c0_8 = arith.constant 0 : index
    %c0_9 = arith.constant 0 : index
    %26 = vector.load %arg2[%c0_7, %c0_8, %c0_9] : memref<6x1x8xf32, #tpu.memory_space<vmem>>, vector<6x1x8xf32>
    %c0_10 = arith.constant 0 : index
    %c0_11 = arith.constant 0 : index
    %c0_12 = arith.constant 0 : index
    %27 = vector.load %arg5[%c0_10, %c0_11, %c0_12] : memref<2x32x96xbf16, #tpu.memory_space<vmem>>, vector<1x32x96xbf16>
    %28 = vector.shape_cast %27 : vector<1x32x96xbf16> to vector<32x96xbf16>
    %c0_13 = arith.constant 0 : index
    %c0_14 = arith.constant 0 : index
    %c0_15 = arith.constant 0 : index
    %29 = vector.load %arg6[%c0_13, %c0_14, %c0_15] : memref<2x1x96xf32, #tpu.memory_space<vmem>>, vector<1x1x96xf32>
    %30 = vector.shape_cast %29 : vector<1x1x96xf32> to vector<1x96xf32>
    %31 = arith.truncf %25 : vector<48x32xf32> to vector<48x32xbf16>
    %cst_16 = arith.constant dense<0.000000e+00> : vector<48x96xf32>
    %32 = tpu.matmul %31, %28, %cst_16 {dimension_numbers = #tpu.dot_dimension_numbers<[1], [0], [0], [1], [0, 0, 1, 1], [], []>} : vector<48x32xbf16>, vector<32x96xbf16>, vector<48x96xf32> -> vector<48x96xf32>
    %33 = vector.broadcast %30 : vector<1x96xf32> to vector<48x96xf32>
    %34 = arith.addf %32, %33 : vector<48x96xf32>
    %35 = vector.extract_strided_slice %34 {offsets = [0, 0], sizes = [48, 32], strides = [1, 1]} : vector<48x96xf32> to vector<48x32xf32>
    %cst_17 = arith.constant 2.500000e-01 : f32
    %36 = vector.broadcast %cst_17 : f32 to vector<48x32xf32>
    %37 = arith.mulf %35, %36 : vector<48x32xf32>
    %38 = vector.shape_cast %37 : vector<48x32xf32> to vector<6x8x32xf32>
    %39 = vector.extract_strided_slice %34 {offsets = [0, 32], sizes = [48, 32], strides = [1, 1]} : vector<48x96xf32> to vector<48x32xf32>
    %40 = vector.shape_cast %39 : vector<48x32xf32> to vector<6x8x32xf32>
    %41 = vector.extract_strided_slice %34 {offsets = [0, 64], sizes = [48, 32], strides = [1, 1]} : vector<48x96xf32> to vector<48x32xf32>
    %42 = vector.shape_cast %41 : vector<48x32xf32> to vector<6x8x32xf32>
    %c0_18 = arith.constant 0 : index
    %c0_19 = arith.constant 0 : index
    %c0_20 = arith.constant 0 : index
    %43 = vector.load %arg8[%c0_18, %c0_19, %c0_20] : memref<2x1x32xf32, #tpu.memory_space<vmem>>, vector<1x1x32xf32>
    %44 = vector.shape_cast %43 : vector<1x1x32xf32> to vector<1x32xf32>
    %45 = vector.extract_strided_slice %38 {offsets = [0, 0, 0], sizes = [6, 8, 16], strides = [1, 1, 1]} : vector<6x8x32xf32> to vector<6x8x16xf32>
    %46 = arith.truncf %45 : vector<6x8x16xf32> to vector<6x8x16xbf16>
    %47 = vector.extract_strided_slice %40 {offsets = [0, 0, 0], sizes = [6, 8, 16], strides = [1, 1, 1]} : vector<6x8x32xf32> to vector<6x8x16xf32>
    %48 = arith.truncf %47 : vector<6x8x16xf32> to vector<6x8x16xbf16>
    %49 = vector.extract_strided_slice %42 {offsets = [0, 0, 0], sizes = [6, 8, 16], strides = [1, 1, 1]} : vector<6x8x32xf32> to vector<6x8x16xf32>
    %50 = arith.truncf %49 : vector<6x8x16xf32> to vector<6x8x16xbf16>
    "tpu.trace_start"() <{level = 10 : i32, message = "nqd,nkd->nqk"}> : () -> ()
    %cst_21 = arith.constant dense<0.000000e+00> : vector<6x8x8xf32>
    %51 = tpu.matmul %46, %48, %cst_21 {dimension_numbers = #tpu.dot_dimension_numbers<[2], [2], [1], [1], [0, 0, 0, 1, 1, 1], [0], [0]>} : vector<6x8x16xbf16>, vector<6x8x16xbf16>, vector<6x8x8xf32> -> vector<6x8x8xf32>
    "tpu.trace_stop"() : () -> ()
    %52 = vector.broadcast %26 : vector<6x1x8xf32> to vector<6x8x8xf32>
    %53 = arith.addf %51, %52 : vector<6x8x8xf32>
    %cst_22 = arith.constant dense<0xFF800000> : vector<6x8xf32>
    %54 = vector.multi_reduction <maximumf>, %53, %cst_22 [2] : vector<6x8x8xf32> to vector<6x8xf32>
    %55 = vector.shape_cast %54 : vector<6x8xf32> to vector<6x8x1xf32>
    %56 = vector.broadcast %55 : vector<6x8x1xf32> to vector<6x8x8xf32>
    %57 = arith.subf %53, %56 : vector<6x8x8xf32>
    %58 = math.exp %57 : vector<6x8x8xf32>
    %cst_23 = arith.constant dense<0.000000e+00> : vector<6x8xf32>
    %59 = vector.multi_reduction <add>, %58, %cst_23 [2] : vector<6x8x8xf32> to vector<6x8xf32>
    %60 = vector.shape_cast %59 : vector<6x8xf32> to vector<6x8x1xf32>
    %61 = tpu.reciprocal %60 {approx = true} : vector<6x8x1xf32> -> vector<6x8x1xf32>
    %62 = vector.broadcast %61 : vector<6x8x1xf32> to vector<6x8x8xf32>
    %63 = arith.mulf %58, %62 : vector<6x8x8xf32>
    %64 = arith.truncf %63 : vector<6x8x8xf32> to vector<6x8x8xbf16>
    "tpu.trace_start"() <{level = 10 : i32, message = "nqk,nkd->nqd"}> : () -> ()
    %cst_24 = arith.constant dense<0.000000e+00> : vector<6x8x16xf32>
    %65 = tpu.matmul %64, %50, %cst_24 {dimension_numbers = #tpu.dot_dimension_numbers<[2], [1], [1], [2], [0, 0, 0, 1, 1, 2], [0], [0]>} : vector<6x8x8xbf16>, vector<6x8x16xbf16>, vector<6x8x16xf32> -> vector<6x8x16xf32>
    "tpu.trace_stop"() : () -> ()
    %66 = vector.shape_cast %65 : vector<6x8x16xf32> to vector<48x16xf32>
    %67 = arith.truncf %66 : vector<48x16xf32> to vector<48x16xbf16>
    %c0_25 = arith.constant 0 : index
    %c0_26 = arith.constant 0 : index
    %c0_27 = arith.constant 0 : index
    %c0_28 = arith.constant 0 : index
    %68 = vector.load %arg7[%c0_25, %c0_26, %c0_27, %c0_28] : memref<2x2x16x32xbf16, #tpu.memory_space<vmem>>, vector<1x1x16x32xbf16>
    %69 = vector.shape_cast %68 : vector<1x1x16x32xbf16> to vector<16x32xbf16>
    %cst_29 = arith.constant dense<0.000000e+00> : vector<48x32xf32>
    %70 = tpu.matmul %67, %69, %cst_29 {dimension_numbers = #tpu.dot_dimension_numbers<[1], [0], [0], [1], [0, 0, 1, 1], [], []>} : vector<48x16xbf16>, vector<16x32xbf16>, vector<48x32xf32> -> vector<48x32xf32>
    %71 = vector.broadcast %44 : vector<1x32xf32> to vector<48x32xf32>
    %72 = arith.addf %71, %70 : vector<48x32xf32>
    %73 = vector.extract_strided_slice %38 {offsets = [0, 0, 16], sizes = [6, 8, 16], strides = [1, 1, 1]} : vector<6x8x32xf32> to vector<6x8x16xf32>
    %74 = arith.truncf %73 : vector<6x8x16xf32> to vector<6x8x16xbf16>
    %75 = vector.extract_strided_slice %40 {offsets = [0, 0, 16], sizes = [6, 8, 16], strides = [1, 1, 1]} : vector<6x8x32xf32> to vector<6x8x16xf32>
    %76 = arith.truncf %75 : vector<6x8x16xf32> to vector<6x8x16xbf16>
    %77 = vector.extract_strided_slice %42 {offsets = [0, 0, 16], sizes = [6, 8, 16], strides = [1, 1, 1]} : vector<6x8x32xf32> to vector<6x8x16xf32>
    %78 = arith.truncf %77 : vector<6x8x16xf32> to vector<6x8x16xbf16>
    "tpu.trace_start"() <{level = 10 : i32, message = "nqd,nkd->nqk"}> : () -> ()
    %cst_30 = arith.constant dense<0.000000e+00> : vector<6x8x8xf32>
    %79 = tpu.matmul %74, %76, %cst_30 {dimension_numbers = #tpu.dot_dimension_numbers<[2], [2], [1], [1], [0, 0, 0, 1, 1, 1], [0], [0]>} : vector<6x8x16xbf16>, vector<6x8x16xbf16>, vector<6x8x8xf32> -> vector<6x8x8xf32>
    "tpu.trace_stop"() : () -> ()
    %80 = vector.broadcast %26 : vector<6x1x8xf32> to vector<6x8x8xf32>
    %81 = arith.addf %79, %80 : vector<6x8x8xf32>
    %cst_31 = arith.constant dense<0xFF800000> : vector<6x8xf32>
    %82 = vector.multi_reduction <maximumf>, %81, %cst_31 [2] : vector<6x8x8xf32> to vector<6x8xf32>
    %83 = vector.shape_cast %82 : vector<6x8xf32> to vector<6x8x1xf32>
    %84 = vector.broadcast %83 : vector<6x8x1xf32> to vector<6x8x8xf32>
    %85 = arith.subf %81, %84 : vector<6x8x8xf32>
    %86 = math.exp %85 : vector<6x8x8xf32>
    %cst_32 = arith.constant dense<0.000000e+00> : vector<6x8xf32>
    %87 = vector.multi_reduction <add>, %86, %cst_32 [2] : vector<6x8x8xf32> to vector<6x8xf32>
    %88 = vector.shape_cast %87 : vector<6x8xf32> to vector<6x8x1xf32>
    %89 = tpu.reciprocal %88 {approx = true} : vector<6x8x1xf32> -> vector<6x8x1xf32>
    %90 = vector.broadcast %89 : vector<6x8x1xf32> to vector<6x8x8xf32>
    %91 = arith.mulf %86, %90 : vector<6x8x8xf32>
    %92 = arith.truncf %91 : vector<6x8x8xf32> to vector<6x8x8xbf16>
    "tpu.trace_start"() <{level = 10 : i32, message = "nqk,nkd->nqd"}> : () -> ()
    %cst_33 = arith.constant dense<0.000000e+00> : vector<6x8x16xf32>
    %93 = tpu.matmul %92, %78, %cst_33 {dimension_numbers = #tpu.dot_dimension_numbers<[2], [1], [1], [2], [0, 0, 0, 1, 1, 2], [0], [0]>} : vector<6x8x8xbf16>, vector<6x8x16xbf16>, vector<6x8x16xf32> -> vector<6x8x16xf32>
    "tpu.trace_stop"() : () -> ()
    %94 = vector.shape_cast %93 : vector<6x8x16xf32> to vector<48x16xf32>
    %95 = arith.truncf %94 : vector<48x16xf32> to vector<48x16xbf16>
    %c0_34 = arith.constant 0 : index
    %c1 = arith.constant 1 : index
    %c0_35 = arith.constant 0 : index
    %c0_36 = arith.constant 0 : index
    %96 = vector.load %arg7[%c0_34, %c1, %c0_35, %c0_36] : memref<2x2x16x32xbf16, #tpu.memory_space<vmem>>, vector<1x1x16x32xbf16>
    %97 = vector.shape_cast %96 : vector<1x1x16x32xbf16> to vector<16x32xbf16>
    %cst_37 = arith.constant dense<0.000000e+00> : vector<48x32xf32>
    %98 = tpu.matmul %95, %97, %cst_37 {dimension_numbers = #tpu.dot_dimension_numbers<[1], [0], [0], [1], [0, 0, 1, 1], [], []>} : vector<48x16xbf16>, vector<16x32xbf16>, vector<48x32xf32> -> vector<48x32xf32>
    %99 = arith.addf %72, %98 : vector<48x32xf32>
    %100 = arith.addf %99, %25 : vector<48x32xf32>
    %c0_38 = arith.constant 0 : index
    %c0_39 = arith.constant 0 : index
    %c0_40 = arith.constant 0 : index
    %101 = vector.load %arg9[%c0_38, %c0_39, %c0_40] : memref<2x2x32xf32, #tpu.memory_space<vmem>>, vector<1x2x32xf32>
    %102 = vector.shape_cast %101 : vector<1x2x32xf32> to vector<2x32xf32>
    %cst_41 = arith.constant dense<0.000000e+00> : vector<48xf32>
    %103 = vector.multi_reduction <add>, %100, %cst_41 [1] : vector<48x32xf32> to vector<48xf32>
    %104 = vector.shape_cast %103 : vector<48xf32> to vector<48x1xf32>
    %cst_42 = arith.constant 3.200000e+01 : f32
    %105 = vector.broadcast %cst_42 : f32 to vector<48x1xf32>
    %106 = arith.divf %104, %105 : vector<48x1xf32>
    %107 = vector.broadcast %106 : vector<48x1xf32> to vector<48x32xf32>
    %108 = arith.subf %100, %107 : vector<48x32xf32>
    %109 = arith.mulf %108, %108 : vector<48x32xf32>
    %cst_43 = arith.constant dense<0.000000e+00> : vector<48xf32>
    %110 = vector.multi_reduction <add>, %109, %cst_43 [1] : vector<48x32xf32> to vector<48xf32>
    %111 = vector.shape_cast %110 : vector<48xf32> to vector<48x1xf32>
    %cst_44 = arith.constant 3.200000e+01 : f32
    %112 = vector.broadcast %cst_44 : f32 to vector<48x1xf32>
    %113 = arith.divf %111, %112 : vector<48x1xf32>
    %114 = vector.broadcast %106 : vector<48x1xf32> to vector<48x32xf32>
    %115 = arith.subf %100, %114 : vector<48x32xf32>
    %cst_45 = arith.constant 9.99999974E-6 : f32
    %116 = vector.broadcast %cst_45 : f32 to vector<48x1xf32>
    %117 = arith.addf %113, %116 : vector<48x1xf32>
    %118 = math.rsqrt %117 : vector<48x1xf32>
    %119 = vector.broadcast %118 : vector<48x1xf32> to vector<48x32xf32>
    %120 = arith.mulf %115, %119 : vector<48x32xf32>
    %121 = vector.extract_strided_slice %102 {offsets = [0, 0], sizes = [1, 32], strides = [1, 1]} : vector<2x32xf32> to vector<1x32xf32>
    %122 = vector.broadcast %121 : vector<1x32xf32> to vector<48x32xf32>
    %123 = arith.mulf %120, %122 : vector<48x32xf32>
    %124 = vector.extract_strided_slice %102 {offsets = [1, 0], sizes = [1, 32], strides = [1, 1]} : vector<2x32xf32> to vector<1x32xf32>
    %125 = vector.broadcast %124 : vector<1x32xf32> to vector<48x32xf32>
    %126 = arith.addf %123, %125 : vector<48x32xf32>
    %c0_46 = arith.constant 0 : index
    %c0_47 = arith.constant 0 : index
    %c0_48 = arith.constant 0 : index
    %127 = vector.load %arg10[%c0_46, %c0_47, %c0_48] : memref<2x32x64xbf16, #tpu.memory_space<vmem>>, vector<1x32x64xbf16>
    %128 = vector.shape_cast %127 : vector<1x32x64xbf16> to vector<32x64xbf16>
    %c0_49 = arith.constant 0 : index
    %c0_50 = arith.constant 0 : index
    %c0_51 = arith.constant 0 : index
    %129 = vector.load %arg11[%c0_49, %c0_50, %c0_51] : memref<2x1x64xf32, #tpu.memory_space<vmem>>, vector<1x1x64xf32>
    %130 = vector.shape_cast %129 : vector<1x1x64xf32> to vector<1x64xf32>
    %131 = arith.truncf %126 : vector<48x32xf32> to vector<48x32xbf16>
    %cst_52 = arith.constant dense<0.000000e+00> : vector<48x64xf32>
    %132 = tpu.matmul %131, %128, %cst_52 {dimension_numbers = #tpu.dot_dimension_numbers<[1], [0], [0], [1], [0, 0, 1, 1], [], []>} : vector<48x32xbf16>, vector<32x64xbf16>, vector<48x64xf32> -> vector<48x64xf32>
    %133 = vector.broadcast %130 : vector<1x64xf32> to vector<48x64xf32>
    %134 = arith.addf %132, %133 : vector<48x64xf32>
    %135 = arith.mulf %134, %134 : vector<48x64xf32>
    %136 = arith.mulf %134, %135 : vector<48x64xf32>
    %cst_53 = arith.constant 4.471500e-02 : f32
    %137 = vector.broadcast %cst_53 : f32 to vector<48x64xf32>
    %138 = arith.mulf %137, %136 : vector<48x64xf32>
    %139 = arith.addf %134, %138 : vector<48x64xf32>
    %cst_54 = arith.constant 0.797884583 : f32
    %140 = vector.broadcast %cst_54 : f32 to vector<48x64xf32>
    %141 = arith.mulf %140, %139 : vector<48x64xf32>
    %142 = math.tanh %141 : vector<48x64xf32>
    %cst_55 = arith.constant 1.000000e+00 : f32
    %143 = vector.broadcast %cst_55 : f32 to vector<48x64xf32>
    %144 = arith.addf %143, %142 : vector<48x64xf32>
    %cst_56 = arith.constant 5.000000e-01 : f32
    %145 = vector.broadcast %cst_56 : f32 to vector<48x64xf32>
    %146 = arith.mulf %145, %144 : vector<48x64xf32>
    %147 = arith.mulf %134, %146 : vector<48x64xf32>
    %c0_57 = arith.constant 0 : index
    %c0_58 = arith.constant 0 : index
    %c0_59 = arith.constant 0 : index
    %148 = vector.load %arg12[%c0_57, %c0_58, %c0_59] : memref<2x64x32xbf16, #tpu.memory_space<vmem>>, vector<1x64x32xbf16>
    %149 = vector.shape_cast %148 : vector<1x64x32xbf16> to vector<64x32xbf16>
    %c0_60 = arith.constant 0 : index
    %c0_61 = arith.constant 0 : index
    %c0_62 = arith.constant 0 : index
    %150 = vector.load %arg13[%c0_60, %c0_61, %c0_62] : memref<2x1x32xf32, #tpu.memory_space<vmem>>, vector<1x1x32xf32>
    %151 = vector.shape_cast %150 : vector<1x1x32xf32> to vector<1x32xf32>
    %152 = arith.truncf %147 : vector<48x64xf32> to vector<48x64xbf16>
    %cst_63 = arith.constant dense<0.000000e+00> : vector<48x32xf32>
    %153 = tpu.matmul %152, %149, %cst_63 {dimension_numbers = #tpu.dot_dimension_numbers<[1], [0], [0], [1], [0, 0, 1, 1], [], []>} : vector<48x64xbf16>, vector<64x32xbf16>, vector<48x32xf32> -> vector<48x32xf32>
    %154 = vector.broadcast %151 : vector<1x32xf32> to vector<48x32xf32>
    %155 = arith.addf %153, %154 : vector<48x32xf32>
    %156 = arith.addf %155, %126 : vector<48x32xf32>
    %c0_64 = arith.constant 0 : index
    %c0_65 = arith.constant 0 : index
    %c0_66 = arith.constant 0 : index
    %157 = vector.load %arg14[%c0_64, %c0_65, %c0_66] : memref<2x2x32xf32, #tpu.memory_space<vmem>>, vector<1x2x32xf32>
    %158 = vector.shape_cast %157 : vector<1x2x32xf32> to vector<2x32xf32>
    %cst_67 = arith.constant dense<0.000000e+00> : vector<48xf32>
    %159 = vector.multi_reduction <add>, %156, %cst_67 [1] : vector<48x32xf32> to vector<48xf32>
    %160 = vector.shape_cast %159 : vector<48xf32> to vector<48x1xf32>
    %cst_68 = arith.constant 3.200000e+01 : f32
    %161 = vector.broadcast %cst_68 : f32 to vector<48x1xf32>
    %162 = arith.divf %160, %161 : vector<48x1xf32>
    %163 = vector.broadcast %162 : vector<48x1xf32> to vector<48x32xf32>
    %164 = arith.subf %156, %163 : vector<48x32xf32>
    %165 = arith.mulf %164, %164 : vector<48x32xf32>
    %cst_69 = arith.constant dense<0.000000e+00> : vector<48xf32>
    %166 = vector.multi_reduction <add>, %165, %cst_69 [1] : vector<48x32xf32> to vector<48xf32>
    %167 = vector.shape_cast %166 : vector<48xf32> to vector<48x1xf32>
    %cst_70 = arith.constant 3.200000e+01 : f32
    %168 = vector.broadcast %cst_70 : f32 to vector<48x1xf32>
    %169 = arith.divf %167, %168 : vector<48x1xf32>
    %170 = vector.broadcast %162 : vector<48x1xf32> to vector<48x32xf32>
    %171 = arith.subf %156, %170 : vector<48x32xf32>
    %cst_71 = arith.constant 9.99999974E-6 : f32
    %172 = vector.broadcast %cst_71 : f32 to vector<48x1xf32>
    %173 = arith.addf %169, %172 : vector<48x1xf32>
    %174 = math.rsqrt %173 : vector<48x1xf32>
    %175 = vector.broadcast %174 : vector<48x1xf32> to vector<48x32xf32>
    %176 = arith.mulf %171, %175 : vector<48x32xf32>
    %177 = vector.extract_strided_slice %158 {offsets = [0, 0], sizes = [1, 32], strides = [1, 1]} : vector<2x32xf32> to vector<1x32xf32>
    %178 = vector.broadcast %177 : vector<1x32xf32> to vector<48x32xf32>
    %179 = arith.mulf %176, %178 : vector<48x32xf32>
    %180 = vector.extract_strided_slice %158 {offsets = [1, 0], sizes = [1, 32], strides = [1, 1]} : vector<2x32xf32> to vector<1x32xf32>
    %181 = vector.broadcast %180 : vector<1x32xf32> to vector<48x32xf32>
    %182 = arith.addf %179, %181 : vector<48x32xf32>
    %c1_72 = arith.constant 1 : index
    %c0_73 = arith.constant 0 : index
    %c0_74 = arith.constant 0 : index
    %183 = vector.load %arg5[%c1_72, %c0_73, %c0_74] : memref<2x32x96xbf16, #tpu.memory_space<vmem>>, vector<1x32x96xbf16>
    %184 = vector.shape_cast %183 : vector<1x32x96xbf16> to vector<32x96xbf16>
    %c1_75 = arith.constant 1 : index
    %c0_76 = arith.constant 0 : index
    %c0_77 = arith.constant 0 : index
    %185 = vector.load %arg6[%c1_75, %c0_76, %c0_77] : memref<2x1x96xf32, #tpu.memory_space<vmem>>, vector<1x1x96xf32>
    %186 = vector.shape_cast %185 : vector<1x1x96xf32> to vector<1x96xf32>
    %187 = arith.truncf %182 : vector<48x32xf32> to vector<48x32xbf16>
    %cst_78 = arith.constant dense<0.000000e+00> : vector<48x96xf32>
    %188 = tpu.matmul %187, %184, %cst_78 {dimension_numbers = #tpu.dot_dimension_numbers<[1], [0], [0], [1], [0, 0, 1, 1], [], []>} : vector<48x32xbf16>, vector<32x96xbf16>, vector<48x96xf32> -> vector<48x96xf32>
    %189 = vector.broadcast %186 : vector<1x96xf32> to vector<48x96xf32>
    %190 = arith.addf %188, %189 : vector<48x96xf32>
    %191 = vector.extract_strided_slice %190 {offsets = [0, 0], sizes = [48, 32], strides = [1, 1]} : vector<48x96xf32> to vector<48x32xf32>
    %cst_79 = arith.constant 2.500000e-01 : f32
    %192 = vector.broadcast %cst_79 : f32 to vector<48x32xf32>
    %193 = arith.mulf %191, %192 : vector<48x32xf32>
    %194 = vector.shape_cast %193 : vector<48x32xf32> to vector<6x8x32xf32>
    %195 = vector.extract_strided_slice %190 {offsets = [0, 32], sizes = [48, 32], strides = [1, 1]} : vector<48x96xf32> to vector<48x32xf32>
    %196 = vector.shape_cast %195 : vector<48x32xf32> to vector<6x8x32xf32>
    %197 = vector.extract_strided_slice %190 {offsets = [0, 64], sizes = [48, 32], strides = [1, 1]} : vector<48x96xf32> to vector<48x32xf32>
    %198 = vector.shape_cast %197 : vector<48x32xf32> to vector<6x8x32xf32>
    %c1_80 = arith.constant 1 : index
    %c0_81 = arith.constant 0 : index
    %c0_82 = arith.constant 0 : index
    %199 = vector.load %arg8[%c1_80, %c0_81, %c0_82] : memref<2x1x32xf32, #tpu.memory_space<vmem>>, vector<1x1x32xf32>
    %200 = vector.shape_cast %199 : vector<1x1x32xf32> to vector<1x32xf32>
    %201 = vector.extract_strided_slice %194 {offsets = [0, 0, 0], sizes = [6, 8, 16], strides = [1, 1, 1]} : vector<6x8x32xf32> to vector<6x8x16xf32>
    %202 = arith.truncf %201 : vector<6x8x16xf32> to vector<6x8x16xbf16>
    %203 = vector.extract_strided_slice %196 {offsets = [0, 0, 0], sizes = [6, 8, 16], strides = [1, 1, 1]} : vector<6x8x32xf32> to vector<6x8x16xf32>
    %204 = arith.truncf %203 : vector<6x8x16xf32> to vector<6x8x16xbf16>
    %205 = vector.extract_strided_slice %198 {offsets = [0, 0, 0], sizes = [6, 8, 16], strides = [1, 1, 1]} : vector<6x8x32xf32> to vector<6x8x16xf32>
    %206 = arith.truncf %205 : vector<6x8x16xf32> to vector<6x8x16xbf16>
    "tpu.trace_start"() <{level = 10 : i32, message = "nqd,nkd->nqk"}> : () -> ()
    %cst_83 = arith.constant dense<0.000000e+00> : vector<6x8x8xf32>
    %207 = tpu.matmul %202, %204, %cst_83 {dimension_numbers = #tpu.dot_dimension_numbers<[2], [2], [1], [1], [0, 0, 0, 1, 1, 1], [0], [0]>} : vector<6x8x16xbf16>, vector<6x8x16xbf16>, vector<6x8x8xf32> -> vector<6x8x8xf32>
    "tpu.trace_stop"() : () -> ()
    %208 = vector.broadcast %26 : vector<6x1x8xf32> to vector<6x8x8xf32>
    %209 = arith.addf %207, %208 : vector<6x8x8xf32>
    %cst_84 = arith.constant dense<0xFF800000> : vector<6x8xf32>
    %210 = vector.multi_reduction <maximumf>, %209, %cst_84 [2] : vector<6x8x8xf32> to vector<6x8xf32>
    %211 = vector.shape_cast %210 : vector<6x8xf32> to vector<6x8x1xf32>
    %212 = vector.broadcast %211 : vector<6x8x1xf32> to vector<6x8x8xf32>
    %213 = arith.subf %209, %212 : vector<6x8x8xf32>
    %214 = math.exp %213 : vector<6x8x8xf32>
    %cst_85 = arith.constant dense<0.000000e+00> : vector<6x8xf32>
    %215 = vector.multi_reduction <add>, %214, %cst_85 [2] : vector<6x8x8xf32> to vector<6x8xf32>
    %216 = vector.shape_cast %215 : vector<6x8xf32> to vector<6x8x1xf32>
    %217 = tpu.reciprocal %216 {approx = true} : vector<6x8x1xf32> -> vector<6x8x1xf32>
    %218 = vector.broadcast %217 : vector<6x8x1xf32> to vector<6x8x8xf32>
    %219 = arith.mulf %214, %218 : vector<6x8x8xf32>
    %220 = arith.truncf %219 : vector<6x8x8xf32> to vector<6x8x8xbf16>
    "tpu.trace_start"() <{level = 10 : i32, message = "nqk,nkd->nqd"}> : () -> ()
    %cst_86 = arith.constant dense<0.000000e+00> : vector<6x8x16xf32>
    %221 = tpu.matmul %220, %206, %cst_86 {dimension_numbers = #tpu.dot_dimension_numbers<[2], [1], [1], [2], [0, 0, 0, 1, 1, 2], [0], [0]>} : vector<6x8x8xbf16>, vector<6x8x16xbf16>, vector<6x8x16xf32> -> vector<6x8x16xf32>
    "tpu.trace_stop"() : () -> ()
    %222 = vector.shape_cast %221 : vector<6x8x16xf32> to vector<48x16xf32>
    %223 = arith.truncf %222 : vector<48x16xf32> to vector<48x16xbf16>
    %c1_87 = arith.constant 1 : index
    %c0_88 = arith.constant 0 : index
    %c0_89 = arith.constant 0 : index
    %c0_90 = arith.constant 0 : index
    %224 = vector.load %arg7[%c1_87, %c0_88, %c0_89, %c0_90] : memref<2x2x16x32xbf16, #tpu.memory_space<vmem>>, vector<1x1x16x32xbf16>
    %225 = vector.shape_cast %224 : vector<1x1x16x32xbf16> to vector<16x32xbf16>
    %cst_91 = arith.constant dense<0.000000e+00> : vector<48x32xf32>
    %226 = tpu.matmul %223, %225, %cst_91 {dimension_numbers = #tpu.dot_dimension_numbers<[1], [0], [0], [1], [0, 0, 1, 1], [], []>} : vector<48x16xbf16>, vector<16x32xbf16>, vector<48x32xf32> -> vector<48x32xf32>
    %227 = vector.broadcast %200 : vector<1x32xf32> to vector<48x32xf32>
    %228 = arith.addf %227, %226 : vector<48x32xf32>
    %229 = vector.extract_strided_slice %194 {offsets = [0, 0, 16], sizes = [6, 8, 16], strides = [1, 1, 1]} : vector<6x8x32xf32> to vector<6x8x16xf32>
    %230 = arith.truncf %229 : vector<6x8x16xf32> to vector<6x8x16xbf16>
    %231 = vector.extract_strided_slice %196 {offsets = [0, 0, 16], sizes = [6, 8, 16], strides = [1, 1, 1]} : vector<6x8x32xf32> to vector<6x8x16xf32>
    %232 = arith.truncf %231 : vector<6x8x16xf32> to vector<6x8x16xbf16>
    %233 = vector.extract_strided_slice %198 {offsets = [0, 0, 16], sizes = [6, 8, 16], strides = [1, 1, 1]} : vector<6x8x32xf32> to vector<6x8x16xf32>
    %234 = arith.truncf %233 : vector<6x8x16xf32> to vector<6x8x16xbf16>
    "tpu.trace_start"() <{level = 10 : i32, message = "nqd,nkd->nqk"}> : () -> ()
    %cst_92 = arith.constant dense<0.000000e+00> : vector<6x8x8xf32>
    %235 = tpu.matmul %230, %232, %cst_92 {dimension_numbers = #tpu.dot_dimension_numbers<[2], [2], [1], [1], [0, 0, 0, 1, 1, 1], [0], [0]>} : vector<6x8x16xbf16>, vector<6x8x16xbf16>, vector<6x8x8xf32> -> vector<6x8x8xf32>
    "tpu.trace_stop"() : () -> ()
    %236 = vector.broadcast %26 : vector<6x1x8xf32> to vector<6x8x8xf32>
    %237 = arith.addf %235, %236 : vector<6x8x8xf32>
    %cst_93 = arith.constant dense<0xFF800000> : vector<6x8xf32>
    %238 = vector.multi_reduction <maximumf>, %237, %cst_93 [2] : vector<6x8x8xf32> to vector<6x8xf32>
    %239 = vector.shape_cast %238 : vector<6x8xf32> to vector<6x8x1xf32>
    %240 = vector.broadcast %239 : vector<6x8x1xf32> to vector<6x8x8xf32>
    %241 = arith.subf %237, %240 : vector<6x8x8xf32>
    %242 = math.exp %241 : vector<6x8x8xf32>
    %cst_94 = arith.constant dense<0.000000e+00> : vector<6x8xf32>
    %243 = vector.multi_reduction <add>, %242, %cst_94 [2] : vector<6x8x8xf32> to vector<6x8xf32>
    %244 = vector.shape_cast %243 : vector<6x8xf32> to vector<6x8x1xf32>
    %245 = tpu.reciprocal %244 {approx = true} : vector<6x8x1xf32> -> vector<6x8x1xf32>
    %246 = vector.broadcast %245 : vector<6x8x1xf32> to vector<6x8x8xf32>
    %247 = arith.mulf %242, %246 : vector<6x8x8xf32>
    %248 = arith.truncf %247 : vector<6x8x8xf32> to vector<6x8x8xbf16>
    "tpu.trace_start"() <{level = 10 : i32, message = "nqk,nkd->nqd"}> : () -> ()
    %cst_95 = arith.constant dense<0.000000e+00> : vector<6x8x16xf32>
    %249 = tpu.matmul %248, %234, %cst_95 {dimension_numbers = #tpu.dot_dimension_numbers<[2], [1], [1], [2], [0, 0, 0, 1, 1, 2], [0], [0]>} : vector<6x8x8xbf16>, vector<6x8x16xbf16>, vector<6x8x16xf32> -> vector<6x8x16xf32>
    "tpu.trace_stop"() : () -> ()
    %250 = vector.shape_cast %249 : vector<6x8x16xf32> to vector<48x16xf32>
    %251 = arith.truncf %250 : vector<48x16xf32> to vector<48x16xbf16>
    %c1_96 = arith.constant 1 : index
    %c1_97 = arith.constant 1 : index
    %c0_98 = arith.constant 0 : index
    %c0_99 = arith.constant 0 : index
    %252 = vector.load %arg7[%c1_96, %c1_97, %c0_98, %c0_99] : memref<2x2x16x32xbf16, #tpu.memory_space<vmem>>, vector<1x1x16x32xbf16>
    %253 = vector.shape_cast %252 : vector<1x1x16x32xbf16> to vector<16x32xbf16>
    %cst_100 = arith.constant dense<0.000000e+00> : vector<48x32xf32>
    %254 = tpu.matmul %251, %253, %cst_100 {dimension_numbers = #tpu.dot_dimension_numbers<[1], [0], [0], [1], [0, 0, 1, 1], [], []>} : vector<48x16xbf16>, vector<16x32xbf16>, vector<48x32xf32> -> vector<48x32xf32>
    %255 = arith.addf %228, %254 : vector<48x32xf32>
    %256 = arith.addf %255, %182 : vector<48x32xf32>
    %c1_101 = arith.constant 1 : index
    %c0_102 = arith.constant 0 : index
    %c0_103 = arith.constant 0 : index
    %257 = vector.load %arg9[%c1_101, %c0_102, %c0_103] : memref<2x2x32xf32, #tpu.memory_space<vmem>>, vector<1x2x32xf32>
    %258 = vector.shape_cast %257 : vector<1x2x32xf32> to vector<2x32xf32>
    %cst_104 = arith.constant dense<0.000000e+00> : vector<48xf32>
    %259 = vector.multi_reduction <add>, %256, %cst_104 [1] : vector<48x32xf32> to vector<48xf32>
    %260 = vector.shape_cast %259 : vector<48xf32> to vector<48x1xf32>
    %cst_105 = arith.constant 3.200000e+01 : f32
    %261 = vector.broadcast %cst_105 : f32 to vector<48x1xf32>
    %262 = arith.divf %260, %261 : vector<48x1xf32>
    %263 = vector.broadcast %262 : vector<48x1xf32> to vector<48x32xf32>
    %264 = arith.subf %256, %263 : vector<48x32xf32>
    %265 = arith.mulf %264, %264 : vector<48x32xf32>
    %cst_106 = arith.constant dense<0.000000e+00> : vector<48xf32>
    %266 = vector.multi_reduction <add>, %265, %cst_106 [1] : vector<48x32xf32> to vector<48xf32>
    %267 = vector.shape_cast %266 : vector<48xf32> to vector<48x1xf32>
    %cst_107 = arith.constant 3.200000e+01 : f32
    %268 = vector.broadcast %cst_107 : f32 to vector<48x1xf32>
    %269 = arith.divf %267, %268 : vector<48x1xf32>
    %270 = vector.broadcast %262 : vector<48x1xf32> to vector<48x32xf32>
    %271 = arith.subf %256, %270 : vector<48x32xf32>
    %cst_108 = arith.constant 9.99999974E-6 : f32
    %272 = vector.broadcast %cst_108 : f32 to vector<48x1xf32>
    %273 = arith.addf %269, %272 : vector<48x1xf32>
    %274 = math.rsqrt %273 : vector<48x1xf32>
    %275 = vector.broadcast %274 : vector<48x1xf32> to vector<48x32xf32>
    %276 = arith.mulf %271, %275 : vector<48x32xf32>
    %277 = vector.extract_strided_slice %258 {offsets = [0, 0], sizes = [1, 32], strides = [1, 1]} : vector<2x32xf32> to vector<1x32xf32>
    %278 = vector.broadcast %277 : vector<1x32xf32> to vector<48x32xf32>
    %279 = arith.mulf %276, %278 : vector<48x32xf32>
    %280 = vector.extract_strided_slice %258 {offsets = [1, 0], sizes = [1, 32], strides = [1, 1]} : vector<2x32xf32> to vector<1x32xf32>
    %281 = vector.broadcast %280 : vector<1x32xf32> to vector<48x32xf32>
    %282 = arith.addf %279, %281 : vector<48x32xf32>
    %c1_109 = arith.constant 1 : index
    %c0_110 = arith.constant 0 : index
    %c0_111 = arith.constant 0 : index
    %283 = vector.load %arg10[%c1_109, %c0_110, %c0_111] : memref<2x32x64xbf16, #tpu.memory_space<vmem>>, vector<1x32x64xbf16>
    %284 = vector.shape_cast %283 : vector<1x32x64xbf16> to vector<32x64xbf16>
    %c1_112 = arith.constant 1 : index
    %c0_113 = arith.constant 0 : index
    %c0_114 = arith.constant 0 : index
    %285 = vector.load %arg11[%c1_112, %c0_113, %c0_114] : memref<2x1x64xf32, #tpu.memory_space<vmem>>, vector<1x1x64xf32>
    %286 = vector.shape_cast %285 : vector<1x1x64xf32> to vector<1x64xf32>
    %287 = arith.truncf %282 : vector<48x32xf32> to vector<48x32xbf16>
    %cst_115 = arith.constant dense<0.000000e+00> : vector<48x64xf32>
    %288 = tpu.matmul %287, %284, %cst_115 {dimension_numbers = #tpu.dot_dimension_numbers<[1], [0], [0], [1], [0, 0, 1, 1], [], []>} : vector<48x32xbf16>, vector<32x64xbf16>, vector<48x64xf32> -> vector<48x64xf32>
    %289 = vector.broadcast %286 : vector<1x64xf32> to vector<48x64xf32>
    %290 = arith.addf %288, %289 : vector<48x64xf32>
    %291 = arith.mulf %290, %290 : vector<48x64xf32>
    %292 = arith.mulf %290, %291 : vector<48x64xf32>
    %cst_116 = arith.constant 4.471500e-02 : f32
    %293 = vector.broadcast %cst_116 : f32 to vector<48x64xf32>
    %294 = arith.mulf %293, %292 : vector<48x64xf32>
    %295 = arith.addf %290, %294 : vector<48x64xf32>
    %cst_117 = arith.constant 0.797884583 : f32
    %296 = vector.broadcast %cst_117 : f32 to vector<48x64xf32>
    %297 = arith.mulf %296, %295 : vector<48x64xf32>
    %298 = math.tanh %297 : vector<48x64xf32>
    %cst_118 = arith.constant 1.000000e+00 : f32
    %299 = vector.broadcast %cst_118 : f32 to vector<48x64xf32>
    %300 = arith.addf %299, %298 : vector<48x64xf32>
    %cst_119 = arith.constant 5.000000e-01 : f32
    %301 = vector.broadcast %cst_119 : f32 to vector<48x64xf32>
    %302 = arith.mulf %301, %300 : vector<48x64xf32>
    %303 = arith.mulf %290, %302 : vector<48x64xf32>
    %c1_120 = arith.constant 1 : index
    %c0_121 = arith.constant 0 : index
    %c0_122 = arith.constant 0 : index
    %304 = vector.load %arg12[%c1_120, %c0_121, %c0_122] : memref<2x64x32xbf16, #tpu.memory_space<vmem>>, vector<1x64x32xbf16>
    %305 = vector.shape_cast %304 : vector<1x64x32xbf16> to vector<64x32xbf16>
    %c1_123 = arith.constant 1 : index
    %c0_124 = arith.constant 0 : index
    %c0_125 = arith.constant 0 : index
    %306 = vector.load %arg13[%c1_123, %c0_124, %c0_125] : memref<2x1x32xf32, #tpu.memory_space<vmem>>, vector<1x1x32xf32>
    %307 = vector.shape_cast %306 : vector<1x1x32xf32> to vector<1x32xf32>
    %308 = arith.truncf %303 : vector<48x64xf32> to vector<48x64xbf16>
    %cst_126 = arith.constant dense<0.000000e+00> : vector<48x32xf32>
    %309 = tpu.matmul %308, %305, %cst_126 {dimension_numbers = #tpu.dot_dimension_numbers<[1], [0], [0], [1], [0, 0, 1, 1], [], []>} : vector<48x64xbf16>, vector<64x32xbf16>, vector<48x32xf32> -> vector<48x32xf32>
    %310 = vector.broadcast %307 : vector<1x32xf32> to vector<48x32xf32>
    %311 = arith.addf %309, %310 : vector<48x32xf32>
    %312 = arith.addf %311, %282 : vector<48x32xf32>
    %c1_127 = arith.constant 1 : index
    %c0_128 = arith.constant 0 : index
    %c0_129 = arith.constant 0 : index
    %313 = vector.load %arg14[%c1_127, %c0_128, %c0_129] : memref<2x2x32xf32, #tpu.memory_space<vmem>>, vector<1x2x32xf32>
    %314 = vector.shape_cast %313 : vector<1x2x32xf32> to vector<2x32xf32>
    %cst_130 = arith.constant dense<0.000000e+00> : vector<48xf32>
    %315 = vector.multi_reduction <add>, %312, %cst_130 [1] : vector<48x32xf32> to vector<48xf32>
    %316 = vector.shape_cast %315 : vector<48xf32> to vector<48x1xf32>
    %cst_131 = arith.constant 3.200000e+01 : f32
    %317 = vector.broadcast %cst_131 : f32 to vector<48x1xf32>
    %318 = arith.divf %316, %317 : vector<48x1xf32>
    %319 = vector.broadcast %318 : vector<48x1xf32> to vector<48x32xf32>
    %320 = arith.subf %312, %319 : vector<48x32xf32>
    %321 = arith.mulf %320, %320 : vector<48x32xf32>
    %cst_132 = arith.constant dense<0.000000e+00> : vector<48xf32>
    %322 = vector.multi_reduction <add>, %321, %cst_132 [1] : vector<48x32xf32> to vector<48xf32>
    %323 = vector.shape_cast %322 : vector<48xf32> to vector<48x1xf32>
    %cst_133 = arith.constant 3.200000e+01 : f32
    %324 = vector.broadcast %cst_133 : f32 to vector<48x1xf32>
    %325 = arith.divf %323, %324 : vector<48x1xf32>
    %326 = vector.broadcast %318 : vector<48x1xf32> to vector<48x32xf32>
    %327 = arith.subf %312, %326 : vector<48x32xf32>
    %cst_134 = arith.constant 9.99999974E-6 : f32
    %328 = vector.broadcast %cst_134 : f32 to vector<48x1xf32>
    %329 = arith.addf %325, %328 : vector<48x1xf32>
    %330 = math.rsqrt %329 : vector<48x1xf32>
    %331 = vector.broadcast %330 : vector<48x1xf32> to vector<48x32xf32>
    %332 = arith.mulf %327, %331 : vector<48x32xf32>
    %333 = vector.extract_strided_slice %314 {offsets = [0, 0], sizes = [1, 32], strides = [1, 1]} : vector<2x32xf32> to vector<1x32xf32>
    %334 = vector.broadcast %333 : vector<1x32xf32> to vector<48x32xf32>
    %335 = arith.mulf %332, %334 : vector<48x32xf32>
    %336 = vector.extract_strided_slice %314 {offsets = [1, 0], sizes = [1, 32], strides = [1, 1]} : vector<2x32xf32> to vector<1x32xf32>
    %337 = vector.broadcast %336 : vector<1x32xf32> to vector<48x32xf32>
    %338 = arith.addf %335, %337 : vector<48x32xf32>
    %339 = vector.shape_cast %338 : vector<48x32xf32> to vector<6x8x32xf32>
    %cst_135 = arith.constant dense<0xFF800000> : vector<6x32xf32>
    %340 = vector.multi_reduction <maximumf>, %339, %cst_135 [1] : vector<6x8x32xf32> to vector<6x32xf32>
    %c0_136 = arith.constant 0 : index
    %c0_137 = arith.constant 0 : index
    %341 = vector.load %arg15[%c0_136, %c0_137] : memref<32x16xbf16, #tpu.memory_space<vmem>>, vector<32x16xbf16>
    %c0_138 = arith.constant 0 : index
    %c0_139 = arith.constant 0 : index
    %342 = vector.load %arg16[%c0_138, %c0_139] : memref<1x16xf32, #tpu.memory_space<vmem>>, vector<1x16xf32>
    %343 = arith.truncf %340 : vector<6x32xf32> to vector<6x32xbf16>
    %cst_140 = arith.constant dense<0.000000e+00> : vector<6x16xf32>
    %344 = tpu.matmul %343, %341, %cst_140 {dimension_numbers = #tpu.dot_dimension_numbers<[1], [0], [0], [1], [0, 0, 1, 1], [], []>} : vector<6x32xbf16>, vector<32x16xbf16>, vector<6x16xf32> -> vector<6x16xf32>
    %345 = vector.broadcast %342 : vector<1x16xf32> to vector<6x16xf32>
    %346 = arith.addf %344, %345 : vector<6x16xf32>
    %347 = arith.truncf %346 : vector<6x16xf32> to vector<6x16xbf16>
    %c0_141 = arith.constant 0 : index
    %c0_142 = arith.constant 0 : index
    %348 = vector.load %arg17[%c0_141, %c0_142] : memref<16x96xbf16, #tpu.memory_space<vmem>>, vector<16x96xbf16>
    %cst_143 = arith.constant dense<0.000000e+00> : vector<6x96xf32>
    %349 = tpu.matmul %347, %348, %cst_143 {dimension_numbers = #tpu.dot_dimension_numbers<[1], [0], [0], [1], [0, 0, 1, 1], [], []>} : vector<6x16xbf16>, vector<16x96xbf16>, vector<6x96xf32> -> vector<6x96xf32>
    %c0_144 = arith.constant 0 : index
    %c0_145 = arith.constant 0 : index
    %350 = vector.load %arg19[%c0_144, %c0_145] : memref<1x96xf32, #tpu.memory_space<vmem>>, vector<1x96xf32>
    %351 = vector.broadcast %350 : vector<1x96xf32> to vector<6x96xf32>
    %352 = arith.addf %349, %351 : vector<6x96xf32>
    %353 = vector.shape_cast %352 : vector<6x96xf32> to vector<3x2x96xf32>
    %c0_146 = arith.constant 0 : index
    %c0_147 = arith.constant 0 : index
    %354 = vector.load %arg21[%c0_146, %c0_147] : memref<1x96xf32, #tpu.memory_space<vmem>>, vector<1x96xf32>
    %cst_148 = arith.constant 0.000000e+00 : f32
    %355 = vector.broadcast %cst_148 : f32 to vector<2x32xf32>
    %356 = vector.extract_strided_slice %353 {offsets = [0, 0, 0], sizes = [1, 2, 96], strides = [1, 1, 1]} : vector<3x2x96xf32> to vector<1x2x96xf32>
    %357 = vector.shape_cast %356 : vector<1x2x96xf32> to vector<2x96xf32>
    %358 = vector.broadcast %354 : vector<1x96xf32> to vector<2x96xf32>
    %359 = arith.mulf %358, %357 : vector<2x96xf32>
    %cst_149 = arith.constant 1.000000e+00 : f32
    %360 = vector.broadcast %cst_149 : f32 to vector<1x96xf32>
    %361 = arith.subf %360, %354 : vector<1x96xf32>
    %362 = vector.extract_strided_slice %353 {offsets = [2, 0, 0], sizes = [1, 2, 96], strides = [1, 1, 1]} : vector<3x2x96xf32> to vector<1x2x96xf32>
    %363 = vector.shape_cast %362 : vector<1x2x96xf32> to vector<2x96xf32>
    %364 = vector.broadcast %361 : vector<1x96xf32> to vector<2x96xf32>
    %365 = arith.mulf %364, %363 : vector<2x96xf32>
    %366 = arith.addf %359, %365 : vector<2x96xf32>
    %367 = arith.truncf %355 : vector<2x32xf32> to vector<2x32xbf16>
    %c0_150 = arith.constant 0 : index
    %c0_151 = arith.constant 0 : index
    %368 = vector.load %arg18[%c0_150, %c0_151] : memref<32x96xbf16, #tpu.memory_space<vmem>>, vector<32x96xbf16>
    %cst_152 = arith.constant dense<0.000000e+00> : vector<2x96xf32>
    %369 = tpu.matmul %367, %368, %cst_152 {dimension_numbers = #tpu.dot_dimension_numbers<[1], [0], [0], [1], [0, 0, 1, 1], [], []>} : vector<2x32xbf16>, vector<32x96xbf16>, vector<2x96xf32> -> vector<2x96xf32>
    %c0_153 = arith.constant 0 : index
    %c0_154 = arith.constant 0 : index
    %370 = vector.load %arg20[%c0_153, %c0_154] : memref<1x96xf32, #tpu.memory_space<vmem>>, vector<1x96xf32>
    %371 = vector.broadcast %370 : vector<1x96xf32> to vector<2x96xf32>
    %372 = arith.addf %369, %371 : vector<2x96xf32>
    %373 = vector.extract_strided_slice %366 {offsets = [0, 0], sizes = [2, 32], strides = [1, 1]} : vector<2x96xf32> to vector<2x32xf32>
    %374 = vector.extract_strided_slice %372 {offsets = [0, 0], sizes = [2, 32], strides = [1, 1]} : vector<2x96xf32> to vector<2x32xf32>
    %375 = arith.addf %373, %374 : vector<2x32xf32>
    %376 = arith.negf %375 : vector<2x32xf32>
    %377 = math.exp %376 : vector<2x32xf32>
    %cst_155 = arith.constant 1.000000e+00 : f32
    %378 = vector.broadcast %cst_155 : f32 to vector<2x32xf32>
    %379 = arith.addf %378, %377 : vector<2x32xf32>
    %380 = arith.divf %378, %379 : vector<2x32xf32>
    %381 = vector.extract_strided_slice %366 {offsets = [0, 32], sizes = [2, 32], strides = [1, 1]} : vector<2x96xf32> to vector<2x32xf32>
    %382 = vector.extract_strided_slice %372 {offsets = [0, 32], sizes = [2, 32], strides = [1, 1]} : vector<2x96xf32> to vector<2x32xf32>
    %383 = arith.addf %381, %382 : vector<2x32xf32>
    %384 = arith.negf %383 : vector<2x32xf32>
    %385 = math.exp %384 : vector<2x32xf32>
    %cst_156 = arith.constant 1.000000e+00 : f32
    %386 = vector.broadcast %cst_156 : f32 to vector<2x32xf32>
    %387 = arith.addf %386, %385 : vector<2x32xf32>
    %388 = arith.divf %386, %387 : vector<2x32xf32>
    %389 = vector.extract_strided_slice %366 {offsets = [0, 64], sizes = [2, 32], strides = [1, 1]} : vector<2x96xf32> to vector<2x32xf32>
    %390 = vector.extract_strided_slice %372 {offsets = [0, 64], sizes = [2, 32], strides = [1, 1]} : vector<2x96xf32> to vector<2x32xf32>
    %391 = arith.mulf %380, %390 : vector<2x32xf32>
    %392 = arith.addf %389, %391 : vector<2x32xf32>
    %393 = math.tanh %392 : vector<2x32xf32>
    %cst_157 = arith.constant 1.000000e+00 : f32
    %394 = vector.broadcast %cst_157 : f32 to vector<2x32xf32>
    %395 = arith.subf %394, %388 : vector<2x32xf32>
    %396 = arith.mulf %395, %393 : vector<2x32xf32>
    %397 = arith.mulf %388, %355 : vector<2x32xf32>
    %398 = arith.addf %396, %397 : vector<2x32xf32>
    %c0_158 = arith.constant 0 : index
    %c0_159 = arith.constant 0 : index
    %c0_160 = arith.constant 0 : index
    %399 = vector.load %arg3[%c0_158, %c0_159, %c0_160] : memref<3x2x32xf32, #tpu.memory_space<vmem>>, vector<1x2x32xf32>
    %400 = vector.shape_cast %399 : vector<1x2x32xf32> to vector<2x32xf32>
    %401 = arith.mulf %400, %398 : vector<2x32xf32>
    %cst_161 = arith.constant 1.000000e+00 : f32
    %402 = vector.broadcast %cst_161 : f32 to vector<2x32xf32>
    %403 = arith.subf %402, %400 : vector<2x32xf32>
    %404 = arith.mulf %403, %355 : vector<2x32xf32>
    %405 = arith.addf %401, %404 : vector<2x32xf32>
    %406 = arith.mulf %400, %398 : vector<2x32xf32>
    %407 = vector.extract_strided_slice %353 {offsets = [1, 0, 0], sizes = [1, 2, 96], strides = [1, 1, 1]} : vector<3x2x96xf32> to vector<1x2x96xf32>
    %408 = vector.shape_cast %407 : vector<1x2x96xf32> to vector<2x96xf32>
    %409 = vector.broadcast %354 : vector<1x96xf32> to vector<2x96xf32>
    %410 = arith.mulf %409, %408 : vector<2x96xf32>
    %cst_162 = arith.constant 1.000000e+00 : f32
    %411 = vector.broadcast %cst_162 : f32 to vector<1x96xf32>
    %412 = arith.subf %411, %354 : vector<1x96xf32>
    %413 = vector.extract_strided_slice %353 {offsets = [1, 0, 0], sizes = [1, 2, 96], strides = [1, 1, 1]} : vector<3x2x96xf32> to vector<1x2x96xf32>
    %414 = vector.shape_cast %413 : vector<1x2x96xf32> to vector<2x96xf32>
    %415 = vector.broadcast %412 : vector<1x96xf32> to vector<2x96xf32>
    %416 = arith.mulf %415, %414 : vector<2x96xf32>
    %417 = arith.addf %410, %416 : vector<2x96xf32>
    %418 = arith.truncf %405 : vector<2x32xf32> to vector<2x32xbf16>
    %c0_163 = arith.constant 0 : index
    %c0_164 = arith.constant 0 : index
    %419 = vector.load %arg18[%c0_163, %c0_164] : memref<32x96xbf16, #tpu.memory_space<vmem>>, vector<32x96xbf16>
    %cst_165 = arith.constant dense<0.000000e+00> : vector<2x96xf32>
    %420 = tpu.matmul %418, %419, %cst_165 {dimension_numbers = #tpu.dot_dimension_numbers<[1], [0], [0], [1], [0, 0, 1, 1], [], []>} : vector<2x32xbf16>, vector<32x96xbf16>, vector<2x96xf32> -> vector<2x96xf32>
    %c0_166 = arith.constant 0 : index
    %c0_167 = arith.constant 0 : index
    %421 = vector.load %arg20[%c0_166, %c0_167] : memref<1x96xf32, #tpu.memory_space<vmem>>, vector<1x96xf32>
    %422 = vector.broadcast %421 : vector<1x96xf32> to vector<2x96xf32>
    %423 = arith.addf %420, %422 : vector<2x96xf32>
    %424 = vector.extract_strided_slice %417 {offsets = [0, 0], sizes = [2, 32], strides = [1, 1]} : vector<2x96xf32> to vector<2x32xf32>
    %425 = vector.extract_strided_slice %423 {offsets = [0, 0], sizes = [2, 32], strides = [1, 1]} : vector<2x96xf32> to vector<2x32xf32>
    %426 = arith.addf %424, %425 : vector<2x32xf32>
    %427 = arith.negf %426 : vector<2x32xf32>
    %428 = math.exp %427 : vector<2x32xf32>
    %cst_168 = arith.constant 1.000000e+00 : f32
    %429 = vector.broadcast %cst_168 : f32 to vector<2x32xf32>
    %430 = arith.addf %429, %428 : vector<2x32xf32>
    %431 = arith.divf %429, %430 : vector<2x32xf32>
    %432 = vector.extract_strided_slice %417 {offsets = [0, 32], sizes = [2, 32], strides = [1, 1]} : vector<2x96xf32> to vector<2x32xf32>
    %433 = vector.extract_strided_slice %423 {offsets = [0, 32], sizes = [2, 32], strides = [1, 1]} : vector<2x96xf32> to vector<2x32xf32>
    %434 = arith.addf %432, %433 : vector<2x32xf32>
    %435 = arith.negf %434 : vector<2x32xf32>
    %436 = math.exp %435 : vector<2x32xf32>
    %cst_169 = arith.constant 1.000000e+00 : f32
    %437 = vector.broadcast %cst_169 : f32 to vector<2x32xf32>
    %438 = arith.addf %437, %436 : vector<2x32xf32>
    %439 = arith.divf %437, %438 : vector<2x32xf32>
    %440 = vector.extract_strided_slice %417 {offsets = [0, 64], sizes = [2, 32], strides = [1, 1]} : vector<2x96xf32> to vector<2x32xf32>
    %441 = vector.extract_strided_slice %423 {offsets = [0, 64], sizes = [2, 32], strides = [1, 1]} : vector<2x96xf32> to vector<2x32xf32>
    %442 = arith.mulf %431, %441 : vector<2x32xf32>
    %443 = arith.addf %440, %442 : vector<2x32xf32>
    %444 = math.tanh %443 : vector<2x32xf32>
    %cst_170 = arith.constant 1.000000e+00 : f32
    %445 = vector.broadcast %cst_170 : f32 to vector<2x32xf32>
    %446 = arith.subf %445, %439 : vector<2x32xf32>
    %447 = arith.mulf %446, %444 : vector<2x32xf32>
    %448 = arith.mulf %439, %405 : vector<2x32xf32>
    %449 = arith.addf %447, %448 : vector<2x32xf32>
    %c1_171 = arith.constant 1 : index
    %c0_172 = arith.constant 0 : index
    %c0_173 = arith.constant 0 : index
    %450 = vector.load %arg3[%c1_171, %c0_172, %c0_173] : memref<3x2x32xf32, #tpu.memory_space<vmem>>, vector<1x2x32xf32>
    %451 = vector.shape_cast %450 : vector<1x2x32xf32> to vector<2x32xf32>
    %452 = arith.mulf %451, %449 : vector<2x32xf32>
    %cst_174 = arith.constant 1.000000e+00 : f32
    %453 = vector.broadcast %cst_174 : f32 to vector<2x32xf32>
    %454 = arith.subf %453, %451 : vector<2x32xf32>
    %455 = arith.mulf %454, %405 : vector<2x32xf32>
    %456 = arith.addf %452, %455 : vector<2x32xf32>
    %457 = arith.mulf %451, %449 : vector<2x32xf32>
    %458 = vector.extract_strided_slice %353 {offsets = [2, 0, 0], sizes = [1, 2, 96], strides = [1, 1, 1]} : vector<3x2x96xf32> to vector<1x2x96xf32>
    %459 = vector.shape_cast %458 : vector<1x2x96xf32> to vector<2x96xf32>
    %460 = vector.broadcast %354 : vector<1x96xf32> to vector<2x96xf32>
    %461 = arith.mulf %460, %459 : vector<2x96xf32>
    %cst_175 = arith.constant 1.000000e+00 : f32
    %462 = vector.broadcast %cst_175 : f32 to vector<1x96xf32>
    %463 = arith.subf %462, %354 : vector<1x96xf32>
    %464 = vector.extract_strided_slice %353 {offsets = [0, 0, 0], sizes = [1, 2, 96], strides = [1, 1, 1]} : vector<3x2x96xf32> to vector<1x2x96xf32>
    %465 = vector.shape_cast %464 : vector<1x2x96xf32> to vector<2x96xf32>
    %466 = vector.broadcast %463 : vector<1x96xf32> to vector<2x96xf32>
    %467 = arith.mulf %466, %465 : vector<2x96xf32>
    %468 = arith.addf %461, %467 : vector<2x96xf32>
    %469 = arith.truncf %456 : vector<2x32xf32> to vector<2x32xbf16>
    %c0_176 = arith.constant 0 : index
    %c0_177 = arith.constant 0 : index
    %470 = vector.load %arg18[%c0_176, %c0_177] : memref<32x96xbf16, #tpu.memory_space<vmem>>, vector<32x96xbf16>
    %cst_178 = arith.constant dense<0.000000e+00> : vector<2x96xf32>
    %471 = tpu.matmul %469, %470, %cst_178 {dimension_numbers = #tpu.dot_dimension_numbers<[1], [0], [0], [1], [0, 0, 1, 1], [], []>} : vector<2x32xbf16>, vector<32x96xbf16>, vector<2x96xf32> -> vector<2x96xf32>
    %c0_179 = arith.constant 0 : index
    %c0_180 = arith.constant 0 : index
    %472 = vector.load %arg20[%c0_179, %c0_180] : memref<1x96xf32, #tpu.memory_space<vmem>>, vector<1x96xf32>
    %473 = vector.broadcast %472 : vector<1x96xf32> to vector<2x96xf32>
    %474 = arith.addf %471, %473 : vector<2x96xf32>
    %475 = vector.extract_strided_slice %468 {offsets = [0, 0], sizes = [2, 32], strides = [1, 1]} : vector<2x96xf32> to vector<2x32xf32>
    %476 = vector.extract_strided_slice %474 {offsets = [0, 0], sizes = [2, 32], strides = [1, 1]} : vector<2x96xf32> to vector<2x32xf32>
    %477 = arith.addf %475, %476 : vector<2x32xf32>
    %478 = arith.negf %477 : vector<2x32xf32>
    %479 = math.exp %478 : vector<2x32xf32>
    %cst_181 = arith.constant 1.000000e+00 : f32
    %480 = vector.broadcast %cst_181 : f32 to vector<2x32xf32>
    %481 = arith.addf %480, %479 : vector<2x32xf32>
    %482 = arith.divf %480, %481 : vector<2x32xf32>
    %483 = vector.extract_strided_slice %468 {offsets = [0, 32], sizes = [2, 32], strides = [1, 1]} : vector<2x96xf32> to vector<2x32xf32>
    %484 = vector.extract_strided_slice %474 {offsets = [0, 32], sizes = [2, 32], strides = [1, 1]} : vector<2x96xf32> to vector<2x32xf32>
    %485 = arith.addf %483, %484 : vector<2x32xf32>
    %486 = arith.negf %485 : vector<2x32xf32>
    %487 = math.exp %486 : vector<2x32xf32>
    %cst_182 = arith.constant 1.000000e+00 : f32
    %488 = vector.broadcast %cst_182 : f32 to vector<2x32xf32>
    %489 = arith.addf %488, %487 : vector<2x32xf32>
    %490 = arith.divf %488, %489 : vector<2x32xf32>
    %491 = vector.extract_strided_slice %468 {offsets = [0, 64], sizes = [2, 32], strides = [1, 1]} : vector<2x96xf32> to vector<2x32xf32>
    %492 = vector.extract_strided_slice %474 {offsets = [0, 64], sizes = [2, 32], strides = [1, 1]} : vector<2x96xf32> to vector<2x32xf32>
    %493 = arith.mulf %482, %492 : vector<2x32xf32>
    %494 = arith.addf %491, %493 : vector<2x32xf32>
    %495 = math.tanh %494 : vector<2x32xf32>
    %cst_183 = arith.constant 1.000000e+00 : f32
    %496 = vector.broadcast %cst_183 : f32 to vector<2x32xf32>
    %497 = arith.subf %496, %490 : vector<2x32xf32>
    %498 = arith.mulf %497, %495 : vector<2x32xf32>
    %499 = arith.mulf %490, %456 : vector<2x32xf32>
    %500 = arith.addf %498, %499 : vector<2x32xf32>
    %c2 = arith.constant 2 : index
    %c0_184 = arith.constant 0 : index
    %c0_185 = arith.constant 0 : index
    %501 = vector.load %arg3[%c2, %c0_184, %c0_185] : memref<3x2x32xf32, #tpu.memory_space<vmem>>, vector<1x2x32xf32>
    %502 = vector.shape_cast %501 : vector<1x2x32xf32> to vector<2x32xf32>
    %503 = arith.mulf %502, %500 : vector<2x32xf32>
    %504 = vector.extract_strided_slice %406 {offsets = [0, 0], sizes = [2, 16], strides = [1, 1]} : vector<2x32xf32> to vector<2x16xf32>
    %505 = vector.extract_strided_slice %457 {offsets = [0, 0], sizes = [2, 16], strides = [1, 1]} : vector<2x32xf32> to vector<2x16xf32>
    %506 = vector.extract_strided_slice %503 {offsets = [0, 0], sizes = [2, 16], strides = [1, 1]} : vector<2x32xf32> to vector<2x16xf32>
    %507 = vector.shape_cast %504 : vector<2x16xf32> to vector<1x2x16xf32>
    %508 = vector.shape_cast %505 : vector<2x16xf32> to vector<1x2x16xf32>
    %509 = vector.shape_cast %506 : vector<2x16xf32> to vector<1x2x16xf32>
    %510 = tpu.concatenate %507, %508, %509 in 0 : vector<1x2x16xf32>, vector<1x2x16xf32>, vector<1x2x16xf32> -> vector<3x2x16xf32>
    %511 = vector.extract_strided_slice %503 {offsets = [0, 16], sizes = [2, 16], strides = [1, 1]} : vector<2x32xf32> to vector<2x16xf32>
    %512 = vector.extract_strided_slice %457 {offsets = [0, 16], sizes = [2, 16], strides = [1, 1]} : vector<2x32xf32> to vector<2x16xf32>
    %513 = vector.extract_strided_slice %406 {offsets = [0, 16], sizes = [2, 16], strides = [1, 1]} : vector<2x32xf32> to vector<2x16xf32>
    %514 = vector.shape_cast %511 : vector<2x16xf32> to vector<1x2x16xf32>
    %515 = vector.shape_cast %512 : vector<2x16xf32> to vector<1x2x16xf32>
    %516 = vector.shape_cast %513 : vector<2x16xf32> to vector<1x2x16xf32>
    %517 = tpu.concatenate %514, %515, %516 in 0 : vector<1x2x16xf32>, vector<1x2x16xf32>, vector<1x2x16xf32> -> vector<3x2x16xf32>
    %518 = tpu.concatenate %510, %517 in 2 : vector<3x2x16xf32>, vector<3x2x16xf32> -> vector<3x2x32xf32>
    %c0_186 = arith.constant 0 : index
    %c0_187 = arith.constant 0 : index
    %c0_188 = arith.constant 0 : index
    %519 = vector.load %arg22[%c0_186, %c0_187, %c0_188] : memref<3x2x32xf32, #tpu.memory_space<vmem>>, vector<3x2x32xf32>
    tpu.vector_store %arg22[%c0_186, %c0_187, %c0_188], %518 {strides = array<i32>} : memref<3x2x32xf32, #tpu.memory_space<vmem>>, vector<3x2x32xf32>,
    return
  }
  func.func @transform_0(%arg0: i32) -> (i32, i32) {
    %c0_i32 = arith.constant 0 : i32
    %c0_i32_0 = arith.constant 0 : i32
    %c0_i32_1 = arith.constant 0 : i32
    return %c0_i32, %c0_i32_0 : i32, i32
  }
  func.func @transform_1(%arg0: i32) -> (i32, i32, i32) {
    %c0_i32 = arith.constant 0 : i32
    %c0_i32_0 = arith.constant 0 : i32
    %c0_i32_1 = arith.constant 0 : i32
    %c0_i32_2 = arith.constant 0 : i32
    return %c0_i32, %c0_i32_0, %c0_i32_1 : i32, i32, i32
  }
  func.func @transform_2(%arg0: i32) -> (i32, i32, i32) {
    %c0_i32 = arith.constant 0 : i32
    %c0_i32_0 = arith.constant 0 : i32
    %c0_i32_1 = arith.constant 0 : i32
    %c0_i32_2 = arith.constant 0 : i32
    return %c0_i32, %c0_i32_0, %c0_i32_1 : i32, i32, i32
  }
  func.func @transform_3(%arg0: i32) -> (i32, i32) {
    %c0_i32 = arith.constant 0 : i32
    %c0_i32_0 = arith.constant 0 : i32
    %c0_i32_1 = arith.constant 0 : i32
    return %c0_i32, %c0_i32_0 : i32, i32
  }
  func.func @transform_4(%arg0: i32) -> (i32, i32, i32) {
    %c0_i32 = arith.constant 0 : i32
    %c0_i32_0 = arith.constant 0 : i32
    %c0_i32_1 = arith.constant 0 : i32
    %c0_i32_2 = arith.constant 0 : i32
    return %c0_i32, %c0_i32_0, %c0_i32_1 : i32, i32, i32
  }
  func.func @transform_5(%arg0: i32) -> (i32, i32, i32) {
    %c0_i32 = arith.constant 0 : i32
    %c0_i32_0 = arith.constant 0 : i32
    %c0_i32_1 = arith.constant 0 : i32
    %c0_i32_2 = arith.constant 0 : i32
    return %c0_i32, %c0_i32_0, %c0_i32_1 : i32, i32, i32
  }
  func.func @transform_6(%arg0: i32) -> (i32, i32, i32, i32) {
    %c0_i32 = arith.constant 0 : i32
    %c0_i32_0 = arith.constant 0 : i32
    %c0_i32_1 = arith.constant 0 : i32
    %c0_i32_2 = arith.constant 0 : i32
    %c0_i32_3 = arith.constant 0 : i32
    return %c0_i32, %c0_i32_0, %c0_i32_1, %c0_i32_2 : i32, i32, i32, i32
  }
  func.func @transform_7(%arg0: i32) -> (i32, i32, i32) {
    %c0_i32 = arith.constant 0 : i32
    %c0_i32_0 = arith.constant 0 : i32
    %c0_i32_1 = arith.constant 0 : i32
    %c0_i32_2 = arith.constant 0 : i32
    return %c0_i32, %c0_i32_0, %c0_i32_1 : i32, i32, i32
  }
  func.func @transform_8(%arg0: i32) -> (i32, i32, i32) {
    %c0_i32 = arith.constant 0 : i32
    %c0_i32_0 = arith.constant 0 : i32
    %c0_i32_1 = arith.constant 0 : i32
    %c0_i32_2 = arith.constant 0 : i32
    return %c0_i32, %c0_i32_0, %c0_i32_1 : i32, i32, i32
  }
  func.func @transform_9(%arg0: i32) -> (i32, i32, i32) {
    %c0_i32 = arith.constant 0 : i32
    %c0_i32_0 = arith.constant 0 : i32
    %c0_i32_1 = arith.constant 0 : i32
    %c0_i32_2 = arith.constant 0 : i32
    return %c0_i32, %c0_i32_0, %c0_i32_1 : i32, i32, i32
  }
  func.func @transform_10(%arg0: i32) -> (i32, i32, i32) {
    %c0_i32 = arith.constant 0 : i32
    %c0_i32_0 = arith.constant 0 : i32
    %c0_i32_1 = arith.constant 0 : i32
    %c0_i32_2 = arith.constant 0 : i32
    return %c0_i32, %c0_i32_0, %c0_i32_1 : i32, i32, i32
  }
  func.func @transform_11(%arg0: i32) -> (i32, i32, i32) {
    %c0_i32 = arith.constant 0 : i32
    %c0_i32_0 = arith.constant 0 : i32
    %c0_i32_1 = arith.constant 0 : i32
    %c0_i32_2 = arith.constant 0 : i32
    return %c0_i32, %c0_i32_0, %c0_i32_1 : i32, i32, i32
  }
  func.func @transform_12(%arg0: i32) -> (i32, i32, i32) {
    %c0_i32 = arith.constant 0 : i32
    %c0_i32_0 = arith.constant 0 : i32
    %c0_i32_1 = arith.constant 0 : i32
    %c0_i32_2 = arith.constant 0 : i32
    return %c0_i32, %c0_i32_0, %c0_i32_1 : i32, i32, i32
  }
  func.func @transform_13(%arg0: i32) -> (i32, i32, i32) {
    %c0_i32 = arith.constant 0 : i32
    %c0_i32_0 = arith.constant 0 : i32
    %c0_i32_1 = arith.constant 0 : i32
    %c0_i32_2 = arith.constant 0 : i32
    return %c0_i32, %c0_i32_0, %c0_i32_1 : i32, i32, i32
  }
  func.func @transform_14(%arg0: i32) -> (i32, i32) {
    %c0_i32 = arith.constant 0 : i32
    %c0_i32_0 = arith.constant 0 : i32
    %c0_i32_1 = arith.constant 0 : i32
    return %c0_i32, %c0_i32_0 : i32, i32
  }
  func.func @transform_15(%arg0: i32) -> (i32, i32) {
    %c0_i32 = arith.constant 0 : i32
    %c0_i32_0 = arith.constant 0 : i32
    %c0_i32_1 = arith.constant 0 : i32
    return %c0_i32, %c0_i32_0 : i32, i32
  }
  func.func @transform_16(%arg0: i32) -> (i32, i32) {
    %c0_i32 = arith.constant 0 : i32
    %c0_i32_0 = arith.constant 0 : i32
    %c0_i32_1 = arith.constant 0 : i32
    return %c0_i32, %c0_i32_0 : i32, i32
  }
  func.func @transform_17(%arg0: i32) -> (i32, i32) {
    %c0_i32 = arith.constant 0 : i32
    %c0_i32_0 = arith.constant 0 : i32
    %c0_i32_1 = arith.constant 0 : i32
    return %c0_i32, %c0_i32_0 : i32, i32
  }
  func.func @transform_18(%arg0: i32) -> (i32, i32) {
    %c0_i32 = arith.constant 0 : i32
    %c0_i32_0 = arith.constant 0 : i32
    %c0_i32_1 = arith.constant 0 : i32
    return %c0_i32, %c0_i32_0 : i32, i32
  }
  func.func @transform_19(%arg0: i32) -> (i32, i32) {
    %c0_i32 = arith.constant 0 : i32
    %c0_i32_0 = arith.constant 0 : i32
    %c0_i32_1 = arith.constant 0 : i32
    return %c0_i32, %c0_i32_0 : i32, i32
  }
  func.func @transform_20(%arg0: i32) -> (i32, i32) {
    %c0_i32 = arith.constant 0 : i32
    %c0_i32_0 = arith.constant 0 : i32
    %c0_i32_1 = arith.constant 0 : i32
    return %c0_i32, %c0_i32_0 : i32, i32
  }
  func.func @transform_21(%arg0: i32) -> (i32, i32, i32) {
    %c0_i32 = arith.constant 0 : i32
    %c0_i32_0 = arith.constant 0 : i32
    %c0_i32_1 = arith.constant 0 : i32
    %c0_i32_2 = arith.constant 0 : i32
    return %c0_i32, %c0_i32_0, %c0_i32_1 : i32, i32, i32
  }
}

</mosaic_0001>

<llo_original>
// kernel: tpu_custom_call.1
$region0: #{tpu_custom_call.1}
  #allocation0 [shape = 'u32[]', space=smem, size = 0x4, offset = 0x4, fixed_abs, tag = 'smem constant byte address 0x4 - core index']
  #allocation1 [shape = 'u32[72,128]{1,0:T(1,128)}', space=vmem, size = 0x9000, scoped, tag = 'internal scratch']
  %s0 = inlined_call_operand.vmem [shape: f32[48,32], index: 0, kind: input, shape index: {}]
  %s1 = inlined_call_operand.vmem [shape: f32[6,1,8], index: 1, kind: input, shape index: {}]
  %s2 = inlined_call_operand.vmem [shape: f32[3,2,32], index: 2, kind: input, shape index: {}]
  %s3 = inlined_call_operand.vmem [shape: f32[2,32], index: 3, kind: input, shape index: {}]
  %s4 = inlined_call_operand.vmem [shape: bf16[2,32,96], index: 4, kind: input, shape index: {}]
  %s5 = inlined_call_operand.vmem [shape: f32[2,1,96], index: 5, kind: input, shape index: {}]
  %s6 = inlined_call_operand.vmem [shape: bf16[2,2,16,32], index: 6, kind: input, shape index: {}]
  %s7 = inlined_call_operand.vmem [shape: f32[2,1,32], index: 7, kind: input, shape index: {}]
  %s8 = inlined_call_operand.vmem [shape: f32[2,2,32], index: 8, kind: input, shape index: {}]
  %s9 = inlined_call_operand.vmem [shape: bf16[2,32,64], index: 9, kind: input, shape index: {}]
  %s10 = inlined_call_operand.vmem [shape: f32[2,1,64], index: 10, kind: input, shape index: {}]
  %s11 = inlined_call_operand.vmem [shape: bf16[2,64,32], index: 11, kind: input, shape index: {}]
  %s12 = inlined_call_operand.vmem [shape: f32[2,1,32], index: 12, kind: input, shape index: {}]
  %s13 = inlined_call_operand.vmem [shape: f32[2,2,32], index: 13, kind: input, shape index: {}]
  %s14 = inlined_call_operand.vmem [shape: bf16[32,16], index: 14, kind: input, shape index: {}]
  %s15 = inlined_call_operand.vmem [shape: f32[1,16], index: 15, kind: input, shape index: {}]
  %s16 = inlined_call_operand.vmem [shape: bf16[16,96], index: 16, kind: input, shape index: {}]
  %s17 = inlined_call_operand.vmem [shape: bf16[32,96], index: 17, kind: input, shape index: {}]
  %s18 = inlined_call_operand.vmem [shape: f32[1,96], index: 18, kind: input, shape index: {}]
  %s19 = inlined_call_operand.vmem [shape: f32[1,96], index: 19, kind: input, shape index: {}]
  %s20 = inlined_call_operand.vmem [shape: f32[1,96], index: 20, kind: input, shape index: {}]
  %s21 = inlined_call_operand.hbm [shape: f32[3,2,32], index: 21, kind: output, shape index: {}]
  %s22 = sld [smem:[#allocation0]]
  $region94: #{tpu_custom_call.1} parent=0
    _
  %s24 = ssub.s32 1, %s22
  %s25 = scalar_select 0, %s24, %s22
  $region1: #{tpu_custom_call.1} parent=0
    #allocation2 [shape = 'u8[3072]{0}', space=vmem, size = 0xc00, scoped, tag = 'output window, operand 0, single buffered']
    #allocation3 [shape = 's32[1]{0}', space=sflag, size = 0x4, scoped, tag = 'scoped memory for tpu_custom_call.1']
    %26 = vsyncpa [#allocation3], 0
    // Predicated region
    $region2: #{tpu_custom_call.1} parent=1 // pred_check
      _
    $region3: #{tpu_custom_call.1} parent=1 // pred_check_branch
      %28 = sbr.rel (0) target = $region5
    $region4: #{tpu_custom_call.1} parent=1 // pred_region
      _
    $region5: #{tpu_custom_call.1} parent=1 // pred_fallthru
      _
    // Predicated region
    $region6: #{tpu_custom_call.1} parent=1 // pred_check
      _
    $region7: #{tpu_custom_call.1} parent=1 // pred_check_branch
      %30 = sbr.rel (0) target = $region9
    $region8: #{tpu_custom_call.1} parent=1 // pred_region
      _
    $region9: #{tpu_custom_call.1} parent=1 // pred_fallthru
      _
    // Predicated region
    $region10: #{tpu_custom_call.1} parent=1 // pred_check
      _
    $region11: #{tpu_custom_call.1} parent=1 // pred_check_branch
      %32 = sbr.rel (0) target = $region13
    $region12: #{tpu_custom_call.1} parent=1 // pred_region
      _
    $region13: #{tpu_custom_call.1} parent=1 // pred_fallthru
      _
    // Predicated region
    $region14: #{tpu_custom_call.1} parent=1 // pred_check
      _
    $region15: #{tpu_custom_call.1} parent=1 // pred_check_branch
      %34 = sbr.rel (0) target = $region17
    $region16: #{tpu_custom_call.1} parent=1 // pred_region
      _
    $region17: #{tpu_custom_call.1} parent=1 // pred_fallthru
      _
    // Predicated region
    $region18: #{tpu_custom_call.1} parent=1 // pred_check
      _
    $region19: #{tpu_custom_call.1} parent=1 // pred_check_branch
      %36 = sbr.rel (0) target = $region21
    $region20: #{tpu_custom_call.1} parent=1 // pred_region
      _
    $region21: #{tpu_custom_call.1} parent=1 // pred_fallthru
      _
    // Predicated region
    $region22: #{tpu_custom_call.1} parent=1 // pred_check
      _
    $region23: #{tpu_custom_call.1} parent=1 // pred_check_branch
      %38 = sbr.rel (0) target = $region25
    $region24: #{tpu_custom_call.1} parent=1 // pred_region
      _
    $region25: #{tpu_custom_call.1} parent=1 // pred_fallthru
      _
    // Predicated region
    $region26: #{tpu_custom_call.1} parent=1 // pred_check
      _
    $region27: #{tpu_custom_call.1} parent=1 // pred_check_branch
      %40 = sbr.rel (0) target = $region29
    $region28: #{tpu_custom_call.1} parent=1 // pred_region
      _
    $region29: #{tpu_custom_call.1} parent=1 // pred_fallthru
      _
    // Predicated region
    $region30: #{tpu_custom_call.1} parent=1 // pred_check
      _
    $region31: #{tpu_custom_call.1} parent=1 // pred_check_branch
      %42 = sbr.rel (0) target = $region33
    $region32: #{tpu_custom_call.1} parent=1 // pred_region
      _
    $region33: #{tpu_custom_call.1} parent=1 // pred_fallthru
      _
    // Predicated region
    $region34: #{tpu_custom_call.1} parent=1 // pred_check
      _
    $region35: #{tpu_custom_call.1} parent=1 // pred_check_branch
      %44 = sbr.rel (0) target = $region37
    $region36: #{tpu_custom_call.1} parent=1 // pred_region
      _
    $region37: #{tpu_custom_call.1} parent=1 // pred_fallthru
      _
    // Predicated region
    $region38: #{tpu_custom_call.1} parent=1 // pred_check
      _
    $region39: #{tpu_custom_call.1} parent=1 // pred_check_branch
      %46 = sbr.rel (0) target = $region41
    $region40: #{tpu_custom_call.1} parent=1 // pred_region
      _
    $region41: #{tpu_custom_call.1} parent=1 // pred_fallthru
      _
    // Predicated region
    $region42: #{tpu_custom_call.1} parent=1 // pred_check
      _
    $region43: #{tpu_custom_call.1} parent=1 // pred_check_branch
      %48 = sbr.rel (0) target = $region45
    $region44: #{tpu_custom_call.1} parent=1 // pred_region
      _
    $region45: #{tpu_custom_call.1} parent=1 // pred_fallthru
      _
    // Predicated region
    $region46: #{tpu_custom_call.1} parent=1 // pred_check
      _
    $region47: #{tpu_custom_call.1} parent=1 // pred_check_branch
      %50 = sbr.rel (0) target = $region49
    $region48: #{tpu_custom_call.1} parent=1 // pred_region
      _
    $region49: #{tpu_custom_call.1} parent=1 // pred_fallthru
      _
    // Predicated region
    $region50: #{tpu_custom_call.1} parent=1 // pred_check
      _
    $region51: #{tpu_custom_call.1} parent=1 // pred_check_branch
      %52 = sbr.rel (0) target = $region53
    $region52: #{tpu_custom_call.1} parent=1 // pred_region
      _
    $region53: #{tpu_custom_call.1} parent=1 // pred_fallthru
      _
    // Predicated region
    $region54: #{tpu_custom_call.1} parent=1 // pred_check
      _
    $region55: #{tpu_custom_call.1} parent=1 // pred_check_branch
      %54 = sbr.rel (0) target = $region57
    $region56: #{tpu_custom_call.1} parent=1 // pred_region
      _
    $region57: #{tpu_custom_call.1} parent=1 // pred_fallthru
      _
    // Predicated region
    $region58: #{tpu_custom_call.1} parent=1 // pred_check
      _
    $region59: #{tpu_custom_call.1} parent=1 // pred_check_branch
      %56 = sbr.rel (0) target = $region61
    $region60: #{tpu_custom_call.1} parent=1 // pred_region
      _
    $region61: #{tpu_custom_call.1} parent=1 // pred_fallthru
      _
    // Predicated region
    $region62: #{tpu_custom_call.1} parent=1 // pred_check
      _
    $region63: #{tpu_custom_call.1} parent=1 // pred_check_branch
      %58 = sbr.rel (0) target = $region65
    $region64: #{tpu_custom_call.1} parent=1 // pred_region
      _
    $region65: #{tpu_custom_call.1} parent=1 // pred_fallthru
      _
    // Predicated region
    $region66: #{tpu_custom_call.1} parent=1 // pred_check
      _
    $region67: #{tpu_custom_call.1} parent=1 // pred_check_branch
      %60 = sbr.rel (0) target = $region69
    $region68: #{tpu_custom_call.1} parent=1 // pred_region
      _
    $region69: #{tpu_custom_call.1} parent=1 // pred_fallthru
      _
    // Predicated region
    $region70: #{tpu_custom_call.1} parent=1 // pred_check
      _
    $region71: #{tpu_custom_call.1} parent=1 // pred_check_branch
      %62 = sbr.rel (0) target = $region73
    $region72: #{tpu_custom_call.1} parent=1 // pred_region
      _
    $region73: #{tpu_custom_call.1} parent=1 // pred_fallthru
      _
    // Predicated region
    $region74: #{tpu_custom_call.1} parent=1 // pred_check
      _
    $region75: #{tpu_custom_call.1} parent=1 // pred_check_branch
      %64 = sbr.rel (0) target = $region77
    $region76: #{tpu_custom_call.1} parent=1 // pred_region
      _
    $region77: #{tpu_custom_call.1} parent=1 // pred_fallthru
      _
    // Predicated region
    $region78: #{tpu_custom_call.1} parent=1 // pred_check
      _
    $region79: #{tpu_custom_call.1} parent=1 // pred_check_branch
      %66 = sbr.rel (0) target = $region81
    $region80: #{tpu_custom_call.1} parent=1 // pred_region
      _
    $region81: #{tpu_custom_call.1} parent=1 // pred_fallthru
      _
    // Predicated region
    $region82: #{tpu_custom_call.1} parent=1 // pred_check
      _
    $region83: #{tpu_custom_call.1} parent=1 // pred_check_branch
      %68 = sbr.rel (0) target = $region85
    $region84: #{tpu_custom_call.1} parent=1 // pred_region
      _
    $region85: #{tpu_custom_call.1} parent=1 // pred_fallthru
      _
    %v70 = vld [vmem:[%s0] sm:$0xff]
    %v71 = vld [vmem:[%s0 + $0x8] sm:$0xff]
    %v72 = vld [vmem:[%s0 + $0x10] sm:$0xff]
    %v73 = vld [vmem:[%s0 + $0x18] sm:$0xff]
    %v74 = vld [vmem:[%s0 + $0x20] sm:$0xff]
    %v75 = vld [vmem:[%s0 + $0x28] sm:$0xff]
    %v76 = vld [vmem:[%s3] sm:$0x3]
    %vm77 = vcmask 261120
    %v78 = vsel %vm77, %v70, 0.0
    %79 = vadd.xlane.f32.xlu0 %v78
    %v80 = vpop.xlane.xlu0 %79
    %v81 = vsel %vm77, %v71, 0.0
    %82 = vadd.xlane.f32.xlu0 %v81
    %v83 = vpop.xlane.xlu0 %82
    %v84 = vsel %vm77, %v72, 0.0
    %85 = vadd.xlane.f32.xlu0 %v84
    %v86 = vpop.xlane.xlu0 %85
    %v87 = vsel %vm77, %v73, 0.0
    %88 = vadd.xlane.f32.xlu0 %v87
    %v89 = vpop.xlane.xlu0 %88
    %v90 = vsel %vm77, %v74, 0.0
    %91 = vadd.xlane.f32.xlu0 %v90
    %v92 = vpop.xlane.xlu0 %91
    %v93 = vsel %vm77, %v75, 0.0
    %94 = vadd.xlane.f32.xlu0 %v93
    %v95 = vpop.xlane.xlu0 %94
    %v96 = vrcp.pop 32.0
    %v97 = vmul.f32 32.0, %v96
    %v98 = vsub.f32 1.0, %v97
    %v99 = vmul.f32 %v96, %v98
    %v100 = vadd.f32 %v96, %v99
    %vm101 = vweird.f32 %v96
    %v102 = vsel %vm101, %v96, %v100
    %v103 = vmul.f32 %v80, %v102
    %v104 = vmul.f32 %v83, %v102
    %v105 = vmul.f32 %v86, %v102
    %v106 = vmul.f32 %v89, %v102
    %v107 = vmul.f32 %v92, %v102
    %v108 = vmul.f32 %v95, %v102
    %v109 = vsub.f32 %v70, %v103
    %v110 = vsub.f32 %v71, %v104
    %v111 = vsub.f32 %v72, %v105
    %v112 = vsub.f32 %v73, %v106
    %v113 = vsub.f32 %v74, %v107
    %v114 = vsub.f32 %v75, %v108
    %v115 = vmul.f32 %v109, %v109
    %v116 = vmul.f32 %v110, %v110
    %v117 = vmul.f32 %v111, %v111
    %v118 = vmul.f32 %v112, %v112
    %v119 = vmul.f32 %v113, %v113
    %v120 = vmul.f32 %v114, %v114
    %v121 = vsel %vm77, %v115, 0.0
    %122 = vadd.xlane.f32.xlu0 %v121
    %v123 = vpop.xlane.xlu0 %122
    %v124 = vsel %vm77, %v116, 0.0
    %125 = vadd.xlane.f32.xlu0 %v124
    %v126 = vpop.xlane.xlu0 %125
    %v127 = vsel %vm77, %v117, 0.0
    %128 = vadd.xlane.f32.xlu0 %v127
    %v129 = vpop.xlane.xlu0 %128
    %v130 = vsel %vm77, %v118, 0.0
    %131 = vadd.xlane.f32.xlu0 %v130
    %v132 = vpop.xlane.xlu0 %131
    %v133 = vsel %vm77, %v119, 0.0
    %134 = vadd.xlane.f32.xlu0 %v133
    %v135 = vpop.xlane.xlu0 %134
    %v136 = vsel %vm77, %v120, 0.0
    %137 = vadd.xlane.f32.xlu0 %v136
    %v138 = vpop.xlane.xlu0 %137
    %v139 = vmul.f32 %v123, %v102
    %v140 = vmul.f32 %v126, %v102
    %v141 = vmul.f32 %v129, %v102
    %v142 = vmul.f32 %v132, %v102
    %v143 = vmul.f32 %v135, %v102
    %v144 = vmul.f32 %v138, %v102
    %v145 = vadd.f32 %v139, 1e-05
    %v146 = vadd.f32 %v140, 1e-05
    %v147 = vadd.f32 %v141, 1e-05
    %v148 = vadd.f32 %v142, 1e-05
    %v149 = vadd.f32 %v143, 1e-05
    %v150 = vadd.f32 %v144, 1e-05
    %v151 = vrsqrt.pop %v145
    %v152 = vmul.f32 %v151, %v145
    %v153 = vmul.f32 %v152, %v151
    %v154 = vmul.f32 0.5, %v153
    %v155 = vsub.f32 1.5, %v154
    %v156 = vmul.f32 %v151, %v155
    %vm157 = vweird.f32 %v145
    %vm158 = vweird.f32 %v151
    %vm159 = vmor %vm157, %vm158
    %v160 = vsel %vm159, %v151, %v156
    %v161 = vrsqrt.pop %v146
    %v162 = vmul.f32 %v161, %v146
    %v163 = vmul.f32 %v162, %v161
    %v164 = vmul.f32 0.5, %v163
    %v165 = vsub.f32 1.5, %v164
    %v166 = vmul.f32 %v161, %v165
    %vm167 = vweird.f32 %v146
    %vm168 = vweird.f32 %v161
    %vm169 = vmor %vm167, %vm168
    %v170 = vsel %vm169, %v161, %v166
    %v171 = vrsqrt.pop %v147
    %v172 = vmul.f32 %v171, %v147
    %v173 = vmul.f32 %v172, %v171
    %v174 = vmul.f32 0.5, %v173
    %v175 = vsub.f32 1.5, %v174
    %v176 = vmul.f32 %v171, %v175
    %vm177 = vweird.f32 %v147
    %vm178 = vweird.f32 %v171
    %vm179 = vmor %vm177, %vm178
    %v180 = vsel %vm179, %v171, %v176
    %v181 = vrsqrt.pop %v148
    %v182 = vmul.f32 %v181, %v148
    %v183 = vmul.f32 %v182, %v181
    %v184 = vmul.f32 0.5, %v183
    %v185 = vsub.f32 1.5, %v184
    %v186 = vmul.f32 %v181, %v185
    %vm187 = vweird.f32 %v148
    %vm188 = vweird.f32 %v181
    %vm189 = vmor %vm187, %vm188
    %v190 = vsel %vm189, %v181, %v186
    %v191 = vrsqrt.pop %v149
    %v192 = vmul.f32 %v191, %v149
    %v193 = vmul.f32 %v192, %v191
    %v194 = vmul.f32 0.5, %v193
    %v195 = vsub.f32 1.5, %v194
    %v196 = vmul.f32 %v191, %v195
    %vm197 = vweird.f32 %v149
    %vm198 = vweird.f32 %v191
    %vm199 = vmor %vm197, %vm198
    %v200 = vsel %vm199, %v191, %v196
    %v201 = vrsqrt.pop %v150
    %v202 = vmul.f32 %v201, %v150
    %v203 = vmul.f32 %v202, %v201
    %v204 = vmul.f32 0.5, %v203
    %v205 = vsub.f32 1.5, %v204
    %v206 = vmul.f32 %v201, %v205
    %vm207 = vweird.f32 %v150
    %vm208 = vweird.f32 %v201
    %vm209 = vmor %vm207, %vm208
    %v210 = vsel %vm209, %v201, %v206
    %v211 = vmul.f32 %v109, %v160
    %v212 = vmul.f32 %v110, %v170
    %v213 = vmul.f32 %v111, %v180
    %v214 = vmul.f32 %v112, %v190
    %v215 = vmul.f32 %v113, %v200
    %v216 = vmul.f32 %v114, %v210
    %v217 = vperm.slane %v76, 0
    %v218 = vmul.f32 %v211, %v217
    %v219 = vmul.f32 %v212, %v217
    %v220 = vmul.f32 %v213, %v217
    %v221 = vmul.f32 %v214, %v217
    %v222 = vmul.f32 %v215, %v217
    %v223 = vmul.f32 %v216, %v217
    %v224 = vperm.slane %v76, 1
    %v225 = vadd.f32 %v218, %v224
    %v226 = vadd.f32 %v219, %v224
    %v227 = vadd.f32 %v220, %v224
    %v228 = vadd.f32 %v221, %v224
    %v229 = vadd.f32 %v222, %v224
    %v230 = vadd.f32 %v223, %v224
    %v231 = vld [vmem:[%s1] sm:$0x1]
    %v232 = vld [vmem:[%s1 + $0x1] sm:$0x1]
    %v233 = vld [vmem:[%s1 + $0x2] sm:$0x1]
    %v234 = vld [vmem:[%s1 + $0x3] sm:$0x1]
    %v235 = vld [vmem:[%s1 + $0x4] sm:$0x1]
    %v236 = vld [vmem:[%s1 + $0x5] sm:$0x1]
    %v237 = vld [vmem:[%s4] sm:$0xf]
    %v238 = vld [vmem:[%s4 + $0x4] sm:$0xf]
    %v239 = vld [vmem:[%s4 + $0x8] sm:$0xf]
    %v240 = vld [vmem:[%s4 + $0xc] sm:$0xf]
    %v241 = vld [vmem:[%s5] sm:$0x1]
    %v242 = vpack.c.bf16 %v226, %v225
    %v243 = vpack.c.bf16 %v228, %v227
    %v244 = vpack.c.bf16 %v230, %v229
    %v246 = vperm.slane %v241, 0
    %v252 = vunpack.c.l.b16 %v237
    %v253 = vunpack.c.l.b16 %v238
    %v254 = vunpack.c.l.b16 %v239
    %v255 = vunpack.c.l.b16 %v240
    %v256 = vpack.c.b16 %v253, %v252
    %v257 = vpack.c.b16 %v255, %v254
    %v261 = vsel %vm77, %v242, 0
    %v264 = vsel %vm77, %v243, 0
    %v267 = vsel %vm77, %v244, 0
    %269 = vmatpush.bf16.msra.mxu0 0
    %270 = vmatpush.bf16.msra.mxu0 0
    %271 = vmatpush.bf16.msra.mxu0 0
    %272 = vmatpush.bf16.msra.mxu0 0
    %273 = vmatpush.bf16.msra.mxu0 0
    %274 = vmatpush.bf16.msra.mxu0 0
    %275 = vmatpush.bf16.msra.mxu0 %v257
    %276 = vmatpush.bf16.msra.mxu0 %v256
    %277 = vmatmul.bf16.gmra.mxu0 %v261
    %v278 = vpop.f32.mrf.mxu0
    %v279 = vadd.f32 %v246, %v278
    %v280 = vpop.f32.mrf.mxu0
    %v281 = vadd.f32 %v246, %v280
    %282 = vmatmul.bf16.gmra.mxu0 %v264
    %v283 = vpop.f32.mrf.mxu0
    %v284 = vadd.f32 %v246, %v283
    %v285 = vpop.f32.mrf.mxu0
    %v286 = vadd.f32 %v246, %v285
    %287 = vmatmul.bf16.gmra.mxu0 %v267
    %v288 = vpop.f32.mrf.mxu0
    %v289 = vadd.f32 %v246, %v288
    %v290 = vpop.f32.mrf.mxu0
    %v291 = vadd.f32 %v246, %v290
    %292 = vdwg.mxu0
    %v293 = vmul.f32 %v279, 0.25
    %v294 = vmul.f32 %v281, 0.25
    %v295 = vmul.f32 %v284, 0.25
    %v296 = vmul.f32 %v286, 0.25
    %v297 = vmul.f32 %v289, 0.25
    %v298 = vmul.f32 %v291, 0.25
    %v299 = vld [vmem:[%s7] sm:$0x1]
    %v300 = vpack.c.bf16 %v293, %v293
    %v301 = vpack.c.bf16 %v294, %v294
    %v302 = vpack.c.bf16 %v295, %v295
    %v303 = vpack.c.bf16 %v296, %v296
    %v304 = vpack.c.bf16 %v297, %v297
    %v305 = vpack.c.bf16 %v298, %v298
    %v306 = vpack.c.bf16 %v279, %v279
    %v307 = vpack.c.bf16 %v281, %v281
    %v308 = vpack.c.bf16 %v284, %v284
    %v309 = vpack.c.bf16 %v286, %v286
    %v310 = vpack.c.bf16 %v289, %v289
    %v311 = vpack.c.bf16 %v291, %v291
    %v318 = vperm.slane %v231, 0
    %v319 = vperm.slane %v232, 0
    %v320 = vperm.slane %v233, 0
    %v321 = vperm.slane %v234, 0
    %v322 = vperm.slane %v235, 0
    %v323 = vperm.slane %v236, 0
    %v331 = vunpack.c.l.b16 %v306
    %v332 = vpack.c.b16 %v331, %v331
    %333 = vrot.lane.b32.xlu0 %v332, 96
    %v334 = vpop.permute.xlu0 %333
    %vm335 = vcmask 130048
    %v337 = vsel %vm335, %v300, 0
    %v340 = vsel %vm335, %v334, 0
    %342 = vmatpush.bf16.xpose.msra.mxu0 0
    %343 = vmatpush.bf16.xpose.msra.mxu0 0
    %344 = vmatpush.bf16.xpose.msra.mxu0 0
    %345 = vmatpush.bf16.xpose.msra.mxu0 0
    %346 = vmatpush.bf16.xpose.msra.mxu0 0
    %347 = vmatpush.bf16.xpose.msra.mxu0 0
    %348 = vmatpush.bf16.xpose.msra.mxu0 0
    %349 = vmatpush.bf16.xpose.msra.mxu0 %v340
    %350 = vmatmul.bf16.gmra.mxu0 %v337
    %v351 = vpop.f32.mrf.mxu0
    %v352 = vadd.f32 %v318, %v351
    %v353 = vpop.f32.mrf.mxu0
    %354 = vdwg.mxu0
    %v356 = vunpack.c.l.b16 %v307
    %v357 = vpack.c.b16 %v356, %v356
    %358 = vrot.lane.b32.xlu0 %v357, 96
    %v359 = vpop.permute.xlu0 %358
    %v361 = vsel %vm335, %v301, 0
    %v364 = vsel %vm335, %v359, 0
    %366 = vmatpush.bf16.xpose.msra.mxu0 0
    %367 = vmatpush.bf16.xpose.msra.mxu0 0
    %368 = vmatpush.bf16.xpose.msra.mxu0 0
    %369 = vmatpush.bf16.xpose.msra.mxu0 0
    %370 = vmatpush.bf16.xpose.msra.mxu0 0
    %371 = vmatpush.bf16.xpose.msra.mxu0 0
    %372 = vmatpush.bf16.xpose.msra.mxu0 0
    %373 = vmatpush.bf16.xpose.msra.mxu0 %v364
    %374 = vmatmul.bf16.gmra.mxu0 %v361
    %v375 = vpop.f32.mrf.mxu0
    %v376 = vadd.f32 %v319, %v375
    %v377 = vpop.f32.mrf.mxu0
    %378 = vdwg.mxu0
    %v380 = vunpack.c.l.b16 %v308
    %v381 = vpack.c.b16 %v380, %v380
    %382 = vrot.lane.b32.xlu0 %v381, 96
    %v383 = vpop.permute.xlu0 %382
    %v385 = vsel %vm335, %v302, 0
    %v388 = vsel %vm335, %v383, 0
    %390 = vmatpush.bf16.xpose.msra.mxu0 0
    %391 = vmatpush.bf16.xpose.msra.mxu0 0
    %392 = vmatpush.bf16.xpose.msra.mxu0 0
    %393 = vmatpush.bf16.xpose.msra.mxu0 0
    %394 = vmatpush.bf16.xpose.msra.mxu0 0
    %395 = vmatpush.bf16.xpose.msra.mxu0 0
    %396 = vmatpush.bf16.xpose.msra.mxu0 0
    %397 = vmatpush.bf16.xpose.msra.mxu0 %v388
    %398 = vmatmul.bf16.gmra.mxu0 %v385
    %v399 = vpop.f32.mrf.mxu0
    %v400 = vadd.f32 %v320, %v399
    %v401 = vpop.f32.mrf.mxu0
    %402 = vdwg.mxu0
    %v404 = vunpack.c.l.b16 %v309
    %v405 = vpack.c.b16 %v404, %v404
    %406 = vrot.lane.b32.xlu0 %v405, 96
    %v407 = vpop.permute.xlu0 %406
    %v409 = vsel %vm335, %v303, 0
    %v412 = vsel %vm335, %v407, 0
    %414 = vmatpush.bf16.xpose.msra.mxu0 0
    %415 = vmatpush.bf16.xpose.msra.mxu0 0
    %416 = vmatpush.bf16.xpose.msra.mxu0 0
    %417 = vmatpush.bf16.xpose.msra.mxu0 0
    %418 = vmatpush.bf16.xpose.msra.mxu0 0
    %419 = vmatpush.bf16.xpose.msra.mxu0 0
    %420 = vmatpush.bf16.xpose.msra.mxu0 0
    %421 = vmatpush.bf16.xpose.msra.mxu0 %v412
    %422 = vmatmul.bf16.gmra.mxu0 %v409
    %v423 = vpop.f32.mrf.mxu0
    %v424 = vadd.f32 %v321, %v423
    %v425 = vpop.f32.mrf.mxu0
    %426 = vdwg.mxu0
    %v428 = vunpack.c.l.b16 %v310
    %v429 = vpack.c.b16 %v428, %v428
    %430 = vrot.lane.b32.xlu0 %v429, 96
    %v431 = vpop.permute.xlu0 %430
    %v433 = vsel %vm335, %v304, 0
    %v436 = vsel %vm335, %v431, 0
    %438 = vmatpush.bf16.xpose.msra.mxu0 0
    %439 = vmatpush.bf16.xpose.msra.mxu0 0
    %440 = vmatpush.bf16.xpose.msra.mxu0 0
    %441 = vmatpush.bf16.xpose.msra.mxu0 0
    %442 = vmatpush.bf16.xpose.msra.mxu0 0
    %443 = vmatpush.bf16.xpose.msra.mxu0 0
    %444 = vmatpush.bf16.xpose.msra.mxu0 0
    %445 = vmatpush.bf16.xpose.msra.mxu0 %v436
    %446 = vmatmul.bf16.gmra.mxu0 %v433
    %v447 = vpop.f32.mrf.mxu0
    %v448 = vadd.f32 %v322, %v447
    %v449 = vpop.f32.mrf.mxu0
    %450 = vdwg.mxu0
    %v452 = vunpack.c.l.b16 %v311
    %v453 = vpack.c.b16 %v452, %v452
    %454 = vrot.lane.b32.xlu0 %v453, 96
    %v455 = vpop.permute.xlu0 %454
    %v457 = vsel %vm335, %v305, 0
    %v460 = vsel %vm335, %v455, 0
    %462 = vmatpush.bf16.xpose.msra.mxu0 0
    %463 = vmatpush.bf16.xpose.msra.mxu0 0
    %464 = vmatpush.bf16.xpose.msra.mxu0 0
    %465 = vmatpush.bf16.xpose.msra.mxu0 0
    %466 = vmatpush.bf16.xpose.msra.mxu0 0
    %467 = vmatpush.bf16.xpose.msra.mxu0 0
    %468 = vmatpush.bf16.xpose.msra.mxu0 0
    %469 = vmatpush.bf16.xpose.msra.mxu0 %v460
    %470 = vmatmul.bf16.gmra.mxu0 %v457
    %v471 = vpop.f32.mrf.mxu0
    %v472 = vadd.f32 %v323, %v471
    %v473 = vpop.f32.mrf.mxu0
    %474 = vdwg.mxu0
    %vm475 = vcmask 64512
    %v476 = vsel %vm475, %v352, -inf
    %477 = vmax.xlane.f32.xlu0 %v476
    %v478 = vpop.xlane.xlu0 %477
    %v479 = vsel %vm475, %v376, -inf
    %480 = vmax.xlane.f32.xlu0 %v479
    %v481 = vpop.xlane.xlu0 %480
    %v482 = vsel %vm475, %v400, -inf
    %483 = vmax.xlane.f32.xlu0 %v482
    %v484 = vpop.xlane.xlu0 %483
    %v485 = vsel %vm475, %v424, -inf
    %486 = vmax.xlane.f32.xlu0 %v485
    %v487 = vpop.xlane.xlu0 %486
    %v488 = vsel %vm475, %v448, -inf
    %489 = vmax.xlane.f32.xlu0 %v488
    %v490 = vpop.xlane.xlu0 %489
    %v491 = vsel %vm475, %v472, -inf
    %492 = vmax.xlane.f32.xlu0 %v491
    %v493 = vpop.xlane.xlu0 %492
    %v494 = vsub.f32 %v352, %v478
    %v495 = vsub.f32 %v376, %v481
    %v496 = vsub.f32 %v400, %v484
    %v497 = vsub.f32 %v424, %v487
    %v498 = vsub.f32 %v448, %v490
    %v499 = vsub.f32 %v472, %v493
    %v500 = vmul.f32 %v494, 1.442695
    %v501 = vpow.pop %v500
    %v502 = vmul.f32 %v495, 1.442695
    %v503 = vpow.pop %v502
    %v504 = vmul.f32 %v496, 1.442695
    %v505 = vpow.pop %v504
    %v506 = vmul.f32 %v497, 1.442695
    %v507 = vpow.pop %v506
    %v508 = vmul.f32 %v498, 1.442695
    %v509 = vpow.pop %v508
    %v510 = vmul.f32 %v499, 1.442695
    %v511 = vpow.pop %v510
    %v512 = vsel %vm475, %v501, 0.0
    %513 = vadd.xlane.f32.xlu0 %v512
    %v514 = vpop.xlane.xlu0 %513
    %v515 = vsel %vm475, %v503, 0.0
    %516 = vadd.xlane.f32.xlu0 %v515
    %v517 = vpop.xlane.xlu0 %516
    %v518 = vsel %vm475, %v505, 0.0
    %519 = vadd.xlane.f32.xlu0 %v518
    %v520 = vpop.xlane.xlu0 %519
    %v521 = vsel %vm475, %v507, 0.0
    %522 = vadd.xlane.f32.xlu0 %v521
    %v523 = vpop.xlane.xlu0 %522
    %v524 = vsel %vm475, %v509, 0.0
    %525 = vadd.xlane.f32.xlu0 %v524
    %v526 = vpop.xlane.xlu0 %525
    %v527 = vsel %vm475, %v511, 0.0
    %528 = vadd.xlane.f32.xlu0 %v527
    %v529 = vpop.xlane.xlu0 %528
    %v530 = vrcp.pop %v514
    %v531 = vrcp.pop %v517
    %v532 = vrcp.pop %v520
    %v533 = vrcp.pop %v523
    %v534 = vrcp.pop %v526
    %v535 = vrcp.pop %v529
    %v536 = vmul.f32 %v501, %v530
    %v537 = vmul.f32 %v503, %v531
    %v538 = vmul.f32 %v505, %v532
    %v539 = vmul.f32 %v507, %v533
    %v540 = vmul.f32 %v509, %v534
    %v541 = vmul.f32 %v511, %v535
    %v542 = vpack.c.bf16 %v536, %v536
    %v543 = vpack.c.bf16 %v537, %v537
    %v544 = vpack.c.bf16 %v538, %v538
    %v545 = vpack.c.bf16 %v539, %v539
    %v546 = vpack.c.bf16 %v540, %v540
    %v547 = vpack.c.bf16 %v541, %v541
    %548 = vrot.lane.b32.xlu0 %v332, 64
    %v549 = vpop.permute.xlu0 %548
    %v551 = vsel %vm475, %v542, 0
    %vm553 = vcmask 1043456
    %v555 = vsel %vm553, %v549, 0
    %557 = vmatpush.bf16.msra.mxu0 0
    %558 = vmatpush.bf16.msra.mxu0 0
    %559 = vmatpush.bf16.msra.mxu0 0
    %560 = vmatpush.bf16.msra.mxu0 0
    %561 = vmatpush.bf16.msra.mxu0 0
    %562 = vmatpush.bf16.msra.mxu0 0
    %563 = vmatpush.bf16.msra.mxu0 0
    %564 = vmatpush.bf16.msra.mxu0 %v555
    %565 = vmatmul.bf16.gmra.mxu0 %v551
    %v566 = vpop.f32.mrf.mxu0
    %v567 = vadd.f32 0.0, %v566
    %v568 = vpop.f32.mrf.mxu0
    %569 = vdwg.mxu0
    %570 = vrot.lane.b32.xlu0 %v357, 64
    %v571 = vpop.permute.xlu0 %570
    %v573 = vsel %vm475, %v543, 0
    %v576 = vsel %vm553, %v571, 0
    %578 = vmatpush.bf16.msra.mxu0 0
    %579 = vmatpush.bf16.msra.mxu0 0
    %580 = vmatpush.bf16.msra.mxu0 0
    %581 = vmatpush.bf16.msra.mxu0 0
    %582 = vmatpush.bf16.msra.mxu0 0
    %583 = vmatpush.bf16.msra.mxu0 0
    %584 = vmatpush.bf16.msra.mxu0 0
    %585 = vmatpush.bf16.msra.mxu0 %v576
    %586 = vmatmul.bf16.gmra.mxu0 %v573
    %v587 = vpop.f32.mrf.mxu0
    %v588 = vadd.f32 0.0, %v587
    %v589 = vpop.f32.mrf.mxu0
    %590 = vdwg.mxu0
    %591 = vrot.lane.b32.xlu0 %v381, 64
    %v592 = vpop.permute.xlu0 %591
    %v594 = vsel %vm475, %v544, 0
    %v597 = vsel %vm553, %v592, 0
    %599 = vmatpush.bf16.msra.mxu0 0
    %600 = vmatpush.bf16.msra.mxu0 0
    %601 = vmatpush.bf16.msra.mxu0 0
    %602 = vmatpush.bf16.msra.mxu0 0
    %603 = vmatpush.bf16.msra.mxu0 0
    %604 = vmatpush.bf16.msra.mxu0 0
    %605 = vmatpush.bf16.msra.mxu0 0
    %606 = vmatpush.bf16.msra.mxu0 %v597
    %607 = vmatmul.bf16.gmra.mxu0 %v594
    %v608 = vpop.f32.mrf.mxu0
    %v609 = vadd.f32 0.0, %v608
    %v610 = vpop.f32.mrf.mxu0
    %611 = vdwg.mxu0
    %612 = vrot.lane.b32.xlu0 %v405, 64
    %v613 = vpop.permute.xlu0 %612
    %v615 = vsel %vm475, %v545, 0
    %v618 = vsel %vm553, %v613, 0
    %620 = vmatpush.bf16.msra.mxu0 0
    %621 = vmatpush.bf16.msra.mxu0 0
    %622 = vmatpush.bf16.msra.mxu0 0
    %623 = vmatpush.bf16.msra.mxu0 0
    %624 = vmatpush.bf16.msra.mxu0 0
    %625 = vmatpush.bf16.msra.mxu0 0
    %626 = vmatpush.bf16.msra.mxu0 0
    %627 = vmatpush.bf16.msra.mxu0 %v618
    %628 = vmatmul.bf16.gmra.mxu0 %v615
    %v629 = vpop.f32.mrf.mxu0
    %v630 = vadd.f32 0.0, %v629
    %v631 = vpop.f32.mrf.mxu0
    %632 = vdwg.mxu0
    %633 = vrot.lane.b32.xlu0 %v429, 64
    %v634 = vpop.permute.xlu0 %633
    %v636 = vsel %vm475, %v546, 0
    %v639 = vsel %vm553, %v634, 0
    %641 = vmatpush.bf16.msra.mxu0 0
    %642 = vmatpush.bf16.msra.mxu0 0
    %643 = vmatpush.bf16.msra.mxu0 0
    %644 = vmatpush.bf16.msra.mxu0 0
    %645 = vmatpush.bf16.msra.mxu0 0
    %646 = vmatpush.bf16.msra.mxu0 0
    %647 = vmatpush.bf16.msra.mxu0 0
    %648 = vmatpush.bf16.msra.mxu0 %v639
    %649 = vmatmul.bf16.gmra.mxu0 %v636
    %v650 = vpop.f32.mrf.mxu0
    %v651 = vadd.f32 0.0, %v650
    %v652 = vpop.f32.mrf.mxu0
    %653 = vdwg.mxu0
    %654 = vrot.lane.b32.xlu0 %v453, 64
    %v655 = vpop.permute.xlu0 %654
    %v657 = vsel %vm475, %v547, 0
    %v660 = vsel %vm553, %v655, 0
    %662 = vmatpush.bf16.msra.mxu0 0
    %663 = vmatpush.bf16.msra.mxu0 0
    %664 = vmatpush.bf16.msra.mxu0 0
    %665 = vmatpush.bf16.msra.mxu0 0
    %666 = vmatpush.bf16.msra.mxu0 0
    %667 = vmatpush.bf16.msra.mxu0 0
    %668 = vmatpush.bf16.msra.mxu0 0
    %669 = vmatpush.bf16.msra.mxu0 %v660
    %670 = vmatmul.bf16.gmra.mxu0 %v657
    %v671 = vpop.f32.mrf.mxu0
    %v672 = vadd.f32 0.0, %v671
    %v673 = vpop.f32.mrf.mxu0
    %674 = vdwg.mxu0
    %v675 = vpack.c.bf16 %v588, %v567
    %v676 = vpack.c.bf16 %v630, %v609
    %v677 = vpack.c.bf16 %v672, %v651
    %v678 = vld [vmem:[%s6] sm:$0xf]
    %v679 = vld [vmem:[%s6 + $0x4] sm:$0xf]
    %v682 = vunpack.c.l.b16 %v678
    %v683 = vunpack.c.l.b16 %v679
    %v684 = vpack.c.b16 %v683, %v682
    %v687 = vsel %vm335, %v675, 0
    %v690 = vsel %vm335, %v676, 0
    %v693 = vsel %vm335, %v677, 0
    %695 = vmatpush.bf16.msra.mxu0 0
    %696 = vmatpush.bf16.msra.mxu0 0
    %697 = vmatpush.bf16.msra.mxu0 0
    %698 = vmatpush.bf16.msra.mxu0 0
    %699 = vmatpush.bf16.msra.mxu0 0
    %700 = vmatpush.bf16.msra.mxu0 0
    %701 = vmatpush.bf16.msra.mxu0 0
    %702 = vmatpush.bf16.msra.mxu0 %v684
    %703 = vmatmul.bf16.gmra.mxu0 %v687
    %v704 = vpop.f32.mrf.mxu0
    %v705 = vadd.f32 0.0, %v704
    %v706 = vpop.f32.mrf.mxu0
    %v707 = vadd.f32 0.0, %v706
    %708 = vmatmul.bf16.gmra.mxu0 %v690
    %v709 = vpop.f32.mrf.mxu0
    %v710 = vadd.f32 0.0, %v709
    %v711 = vpop.f32.mrf.mxu0
    %v712 = vadd.f32 0.0, %v711
    %713 = vmatmul.bf16.gmra.mxu0 %v693
    %v714 = vpop.f32.mrf.mxu0
    %v715 = vadd.f32 0.0, %v714
    %v716 = vpop.f32.mrf.mxu0
    %v717 = vadd.f32 0.0, %v716
    %718 = vdwg.mxu0
    %v720 = vperm.slane %v299, 0
    %v722 = vadd.f32 %v720, %v705
    %v723 = vadd.f32 %v720, %v707
    %v724 = vadd.f32 %v720, %v710
    %v725 = vadd.f32 %v720, %v712
    %v726 = vadd.f32 %v720, %v715
    %v727 = vadd.f32 %v720, %v717
    %v729 = vunpack.c.l.b16 %v300
    %v730 = vpack.c.b16 %v729, %v729
    %731 = vrot.lane.b32.xlu0 %v730, 112
    %v732 = vpop.permute.xlu0 %731
    %733 = vrot.lane.b32.xlu0 %v332, 80
    %v734 = vpop.permute.xlu0 %733
    %v736 = vsel %vm335, %v732, 0
    %v739 = vsel %vm335, %v734, 0
    %741 = vmatpush.bf16.xpose.msra.mxu0 0
    %742 = vmatpush.bf16.xpose.msra.mxu0 0
    %743 = vmatpush.bf16.xpose.msra.mxu0 0
    %744 = vmatpush.bf16.xpose.msra.mxu0 0
    %745 = vmatpush.bf16.xpose.msra.mxu0 0
    %746 = vmatpush.bf16.xpose.msra.mxu0 0
    %747 = vmatpush.bf16.xpose.msra.mxu0 0
    %748 = vmatpush.bf16.xpose.msra.mxu0 %v739
    %749 = vmatmul.bf16.gmra.mxu0 %v736
    %v750 = vpop.f32.mrf.mxu0
    %v751 = vadd.f32 %v318, %v750
    %v752 = vpop.f32.mrf.mxu0
    %753 = vdwg.mxu0
    %v755 = vunpack.c.l.b16 %v301
    %v756 = vpack.c.b16 %v755, %v755
    %757 = vrot.lane.b32.xlu0 %v756, 112
    %v758 = vpop.permute.xlu0 %757
    %759 = vrot.lane.b32.xlu0 %v357, 80
    %v760 = vpop.permute.xlu0 %759
    %v762 = vsel %vm335, %v758, 0
    %v765 = vsel %vm335, %v760, 0
    %767 = vmatpush.bf16.xpose.msra.mxu0 0
    %768 = vmatpush.bf16.xpose.msra.mxu0 0
    %769 = vmatpush.bf16.xpose.msra.mxu0 0
    %770 = vmatpush.bf16.xpose.msra.mxu0 0
    %771 = vmatpush.bf16.xpose.msra.mxu0 0
    %772 = vmatpush.bf16.xpose.msra.mxu0 0
    %773 = vmatpush.bf16.xpose.msra.mxu0 0
    %774 = vmatpush.bf16.xpose.msra.mxu0 %v765
    %775 = vmatmul.bf16.gmra.mxu0 %v762
    %v776 = vpop.f32.mrf.mxu0
    %v777 = vadd.f32 %v319, %v776
    %v778 = vpop.f32.mrf.mxu0
    %779 = vdwg.mxu0
    %v781 = vunpack.c.l.b16 %v302
    %v782 = vpack.c.b16 %v781, %v781
    %783 = vrot.lane.b32.xlu0 %v782, 112
    %v784 = vpop.permute.xlu0 %783
    %785 = vrot.lane.b32.xlu0 %v381, 80
    %v786 = vpop.permute.xlu0 %785
    %v788 = vsel %vm335, %v784, 0
    %v791 = vsel %vm335, %v786, 0
    %793 = vmatpush.bf16.xpose.msra.mxu0 0
    %794 = vmatpush.bf16.xpose.msra.mxu0 0
    %795 = vmatpush.bf16.xpose.msra.mxu0 0
    %796 = vmatpush.bf16.xpose.msra.mxu0 0
    %797 = vmatpush.bf16.xpose.msra.mxu0 0
    %798 = vmatpush.bf16.xpose.msra.mxu0 0
    %799 = vmatpush.bf16.xpose.msra.mxu0 0
    %800 = vmatpush.bf16.xpose.msra.mxu0 %v791
    %801 = vmatmul.bf16.gmra.mxu0 %v788
    %v802 = vpop.f32.mrf.mxu0
    %v803 = vadd.f32 %v320, %v802
    %v804 = vpop.f32.mrf.mxu0
    %805 = vdwg.mxu0
    %v807 = vunpack.c.l.b16 %v303
    %v808 = vpack.c.b16 %v807, %v807
    %809 = vrot.lane.b32.xlu0 %v808, 112
    %v810 = vpop.permute.xlu0 %809
    %811 = vrot.lane.b32.xlu0 %v405, 80
    %v812 = vpop.permute.xlu0 %811
    %v814 = vsel %vm335, %v810, 0
    %v817 = vsel %vm335, %v812, 0
    %819 = vmatpush.bf16.xpose.msra.mxu0 0
    %820 = vmatpush.bf16.xpose.msra.mxu0 0
    %821 = vmatpush.bf16.xpose.msra.mxu0 0
    %822 = vmatpush.bf16.xpose.msra.mxu0 0
    %823 = vmatpush.bf16.xpose.msra.mxu0 0
    %824 = vmatpush.bf16.xpose.msra.mxu0 0
    %825 = vmatpush.bf16.xpose.msra.mxu0 0
    %826 = vmatpush.bf16.xpose.msra.mxu0 %v817
    %827 = vmatmul.bf16.gmra.mxu0 %v814
    %v828 = vpop.f32.mrf.mxu0
    %v829 = vadd.f32 %v321, %v828
    %v830 = vpop.f32.mrf.mxu0
    %831 = vdwg.mxu0
    %v833 = vunpack.c.l.b16 %v304
    %v834 = vpack.c.b16 %v833, %v833
    %835 = vrot.lane.b32.xlu0 %v834, 112
    %v836 = vpop.permute.xlu0 %835
    %837 = vrot.lane.b32.xlu0 %v429, 80
    %v838 = vpop.permute.xlu0 %837
    %v840 = vsel %vm335, %v836, 0
    %v843 = vsel %vm335, %v838, 0
    %845 = vmatpush.bf16.xpose.msra.mxu0 0
    %846 = vmatpush.bf16.xpose.msra.mxu0 0
    %847 = vmatpush.bf16.xpose.msra.mxu0 0
    %848 = vmatpush.bf16.xpose.msra.mxu0 0
    %849 = vmatpush.bf16.xpose.msra.mxu0 0
    %850 = vmatpush.bf16.xpose.msra.mxu0 0
    %851 = vmatpush.bf16.xpose.msra.mxu0 0
    %852 = vmatpush.bf16.xpose.msra.mxu0 %v843
    %853 = vmatmul.bf16.gmra.mxu0 %v840
    %v854 = vpop.f32.mrf.mxu0
    %v855 = vadd.f32 %v322, %v854
    %v856 = vpop.f32.mrf.mxu0
    %857 = vdwg.mxu0
    %v859 = vunpack.c.l.b16 %v305
    %v860 = vpack.c.b16 %v859, %v859
    %861 = vrot.lane.b32.xlu0 %v860, 112
    %v862 = vpop.permute.xlu0 %861
    %863 = vrot.lane.b32.xlu0 %v453, 80
    %v864 = vpop.permute.xlu0 %863
    %v866 = vsel %vm335, %v862, 0
    %v869 = vsel %vm335, %v864, 0
    %871 = vmatpush.bf16.xpose.msra.mxu0 0
    %872 = vmatpush.bf16.xpose.msra.mxu0 0
    %873 = vmatpush.bf16.xpose.msra.mxu0 0
    %874 = vmatpush.bf16.xpose.msra.mxu0 0
    %875 = vmatpush.bf16.xpose.msra.mxu0 0
    %876 = vmatpush.bf16.xpose.msra.mxu0 0
    %877 = vmatpush.bf16.xpose.msra.mxu0 0
    %878 = vmatpush.bf16.xpose.msra.mxu0 %v869
    %879 = vmatmul.bf16.gmra.mxu0 %v866
    %v880 = vpop.f32.mrf.mxu0
    %v881 = vadd.f32 %v323, %v880
    %v882 = vpop.f32.mrf.mxu0
    %883 = vdwg.mxu0
    %v884 = vsel %vm475, %v751, -inf
    %885 = vmax.xlane.f32.xlu0 %v884
    %v886 = vpop.xlane.xlu0 %885
    %v887 = vsel %vm475, %v777, -inf
    %888 = vmax.xlane.f32.xlu0 %v887
    %v889 = vpop.xlane.xlu0 %888
    %v890 = vsel %vm475, %v803, -inf
    %891 = vmax.xlane.f32.xlu0 %v890
    %v892 = vpop.xlane.xlu0 %891
    %v893 = vsel %vm475, %v829, -inf
    %894 = vmax.xlane.f32.xlu0 %v893
    %v895 = vpop.xlane.xlu0 %894
    %v896 = vsel %vm475, %v855, -inf
    %897 = vmax.xlane.f32.xlu0 %v896
    %v898 = vpop.xlane.xlu0 %897
    %v899 = vsel %vm475, %v881, -inf
    %900 = vmax.xlane.f32.xlu0 %v899
    %v901 = vpop.xlane.xlu0 %900
    %v902 = vsub.f32 %v751, %v886
    %v903 = vsub.f32 %v777, %v889
    %v904 = vsub.f32 %v803, %v892
    %v905 = vsub.f32 %v829, %v895
    %v906 = vsub.f32 %v855, %v898
    %v907 = vsub.f32 %v881, %v901
    %v908 = vmul.f32 %v902, 1.442695
    %v909 = vpow.pop %v908
    %v910 = vmul.f32 %v903, 1.442695
    %v911 = vpow.pop %v910
    %v912 = vmul.f32 %v904, 1.442695
    %v913 = vpow.pop %v912
    %v914 = vmul.f32 %v905, 1.442695
    %v915 = vpow.pop %v914
    %v916 = vmul.f32 %v906, 1.442695
    %v917 = vpow.pop %v916
    %v918 = vmul.f32 %v907, 1.442695
    %v919 = vpow.pop %v918
    %v920 = vsel %vm475, %v909, 0.0
    %921 = vadd.xlane.f32.xlu0 %v920
    %v922 = vpop.xlane.xlu0 %921
    %v923 = vsel %vm475, %v911, 0.0
    %924 = vadd.xlane.f32.xlu0 %v923
    %v925 = vpop.xlane.xlu0 %924
    %v926 = vsel %vm475, %v913, 0.0
    %927 = vadd.xlane.f32.xlu0 %v926
    %v928 = vpop.xlane.xlu0 %927
    %v929 = vsel %vm475, %v915, 0.0
    %930 = vadd.xlane.f32.xlu0 %v929
    %v931 = vpop.xlane.xlu0 %930
    %v932 = vsel %vm475, %v917, 0.0
    %933 = vadd.xlane.f32.xlu0 %v932
    %v934 = vpop.xlane.xlu0 %933
    %v935 = vsel %vm475, %v919, 0.0
    %936 = vadd.xlane.f32.xlu0 %v935
    %v937 = vpop.xlane.xlu0 %936
    %v938 = vrcp.pop %v922
    %v939 = vrcp.pop %v925
    %v940 = vrcp.pop %v928
    %v941 = vrcp.pop %v931
    %v942 = vrcp.pop %v934
    %v943 = vrcp.pop %v937
    %v944 = vmul.f32 %v909, %v938
    %v945 = vmul.f32 %v911, %v939
    %v946 = vmul.f32 %v913, %v940
    %v947 = vmul.f32 %v915, %v941
    %v948 = vmul.f32 %v917, %v942
    %v949 = vmul.f32 %v919, %v943
    %v950 = vpack.c.bf16 %v944, %v944
    %v951 = vpack.c.bf16 %v945, %v945
    %v952 = vpack.c.bf16 %v946, %v946
    %v953 = vpack.c.bf16 %v947, %v947
    %v954 = vpack.c.bf16 %v948, %v948
    %v955 = vpack.c.bf16 %v949, %v949
    %956 = vrot.lane.b32.xlu0 %v332, 48
    %v957 = vpop.permute.xlu0 %956
    %v959 = vsel %vm475, %v950, 0
    %v962 = vsel %vm553, %v957, 0
    %964 = vmatpush.bf16.msra.mxu0 0
    %965 = vmatpush.bf16.msra.mxu0 0
    %966 = vmatpush.bf16.msra.mxu0 0
    %967 = vmatpush.bf16.msra.mxu0 0
    %968 = vmatpush.bf16.msra.mxu0 0
    %969 = vmatpush.bf16.msra.mxu0 0
    %970 = vmatpush.bf16.msra.mxu0 0
    %971 = vmatpush.bf16.msra.mxu0 %v962
    %972 = vmatmul.bf16.gmra.mxu0 %v959
    %v973 = vpop.f32.mrf.mxu0
    %v974 = vadd.f32 0.0, %v973
    %v975 = vpop.f32.mrf.mxu0
    %976 = vdwg.mxu0
    %977 = vrot.lane.b32.xlu0 %v357, 48
    %v978 = vpop.permute.xlu0 %977
    %v980 = vsel %vm475, %v951, 0
    %v983 = vsel %vm553, %v978, 0
    %985 = vmatpush.bf16.msra.mxu0 0
    %986 = vmatpush.bf16.msra.mxu0 0
    %987 = vmatpush.bf16.msra.mxu0 0
    %988 = vmatpush.bf16.msra.mxu0 0
    %989 = vmatpush.bf16.msra.mxu0 0
    %990 = vmatpush.bf16.msra.mxu0 0
    %991 = vmatpush.bf16.msra.mxu0 0
    %992 = vmatpush.bf16.msra.mxu0 %v983
    %993 = vmatmul.bf16.gmra.mxu0 %v980
    %v994 = vpop.f32.mrf.mxu0
    %v995 = vadd.f32 0.0, %v994
    %v996 = vpop.f32.mrf.mxu0
    %997 = vdwg.mxu0
    %998 = vrot.lane.b32.xlu0 %v381, 48
    %v999 = vpop.permute.xlu0 %998
    %v1001 = vsel %vm475, %v952, 0
    %v1004 = vsel %vm553, %v999, 0
    %1006 = vmatpush.bf16.msra.mxu0 0
    %1007 = vmatpush.bf16.msra.mxu0 0
    %1008 = vmatpush.bf16.msra.mxu0 0
    %1009 = vmatpush.bf16.msra.mxu0 0
    %1010 = vmatpush.bf16.msra.mxu0 0
    %1011 = vmatpush.bf16.msra.mxu0 0
    %1012 = vmatpush.bf16.msra.mxu0 0
    %1013 = vmatpush.bf16.msra.mxu0 %v1004
    %1014 = vmatmul.bf16.gmra.mxu0 %v1001
    %v1015 = vpop.f32.mrf.mxu0
    %v1016 = vadd.f32 0.0, %v1015
    %v1017 = vpop.f32.mrf.mxu0
    %1018 = vdwg.mxu0
    %1019 = vrot.lane.b32.xlu0 %v405, 48
    %v1020 = vpop.permute.xlu0 %1019
    %v1022 = vsel %vm475, %v953, 0
    %v1025 = vsel %vm553, %v1020, 0
    %1027 = vmatpush.bf16.msra.mxu0 0
    %1028 = vmatpush.bf16.msra.mxu0 0
    %1029 = vmatpush.bf16.msra.mxu0 0
    %1030 = vmatpush.bf16.msra.mxu0 0
    %1031 = vmatpush.bf16.msra.mxu0 0
    %1032 = vmatpush.bf16.msra.mxu0 0
    %1033 = vmatpush.bf16.msra.mxu0 0
    %1034 = vmatpush.bf16.msra.mxu0 %v1025
    %1035 = vmatmul.bf16.gmra.mxu0 %v1022
    %v1036 = vpop.f32.mrf.mxu0
    %v1037 = vadd.f32 0.0, %v1036
    %v1038 = vpop.f32.mrf.mxu0
    %1039 = vdwg.mxu0
    %1040 = vrot.lane.b32.xlu0 %v429, 48
    %v1041 = vpop.permute.xlu0 %1040
    %v1043 = vsel %vm475, %v954, 0
    %v1046 = vsel %vm553, %v1041, 0
    %1048 = vmatpush.bf16.msra.mxu0 0
    %1049 = vmatpush.bf16.msra.mxu0 0
    %1050 = vmatpush.bf16.msra.mxu0 0
    %1051 = vmatpush.bf16.msra.mxu0 0
    %1052 = vmatpush.bf16.msra.mxu0 0
    %1053 = vmatpush.bf16.msra.mxu0 0
    %1054 = vmatpush.bf16.msra.mxu0 0
    %1055 = vmatpush.bf16.msra.mxu0 %v1046
    %1056 = vmatmul.bf16.gmra.mxu0 %v1043
    %v1057 = vpop.f32.mrf.mxu0
    %v1058 = vadd.f32 0.0, %v1057
    %v1059 = vpop.f32.mrf.mxu0
    %1060 = vdwg.mxu0
    %1061 = vrot.lane.b32.xlu0 %v453, 48
    %v1062 = vpop.permute.xlu0 %1061
    %v1064 = vsel %vm475, %v955, 0
    %v1067 = vsel %vm553, %v1062, 0
    %1069 = vmatpush.bf16.msra.mxu0 0
    %1070 = vmatpush.bf16.msra.mxu0 0
    %1071 = vmatpush.bf16.msra.mxu0 0
    %1072 = vmatpush.bf16.msra.mxu0 0
    %1073 = vmatpush.bf16.msra.mxu0 0
    %1074 = vmatpush.bf16.msra.mxu0 0
    %1075 = vmatpush.bf16.msra.mxu0 0
    %1076 = vmatpush.bf16.msra.mxu0 %v1067
    %1077 = vmatmul.bf16.gmra.mxu0 %v1064
    %v1078 = vpop.f32.mrf.mxu0
    %v1079 = vadd.f32 0.0, %v1078
    %v1080 = vpop.f32.mrf.mxu0
    %1081 = vdwg.mxu0
    %v1082 = vpack.c.bf16 %v995, %v974
    %v1083 = vpack.c.bf16 %v1037, %v1016
    %v1084 = vpack.c.bf16 %v1079, %v1058
    %s1085 = scalar_lea.vmem %s6, 8
    %v1086 = vld [vmem:[%s1085] sm:$0xf]
    %v1087 = vld [vmem:[%s1085 + $0x4] sm:$0xf]
    %v1090 = vunpack.c.l.b16 %v1086
    %v1091 = vunpack.c.l.b16 %v1087
    %v1092 = vpack.c.b16 %v1091, %v1090
    %v1095 = vsel %vm335, %v1082, 0
    %v1098 = vsel %vm335, %v1083, 0
    %v1101 = vsel %vm335, %v1084, 0
    %1103 = vmatpush.bf16.msra.mxu0 0
    %1104 = vmatpush.bf16.msra.mxu0 0
    %1105 = vmatpush.bf16.msra.mxu0 0
    %1106 = vmatpush.bf16.msra.mxu0 0
    %1107 = vmatpush.bf16.msra.mxu0 0
    %1108 = vmatpush.bf16.msra.mxu0 0
    %1109 = vmatpush.bf16.msra.mxu0 0
    %1110 = vmatpush.bf16.msra.mxu0 %v1092
    %1111 = vmatmul.bf16.gmra.mxu0 %v1095
    %v1112 = vpop.f32.mrf.mxu0
    %v1113 = vadd.f32 0.0, %v1112
    %v1114 = vpop.f32.mrf.mxu0
    %v1115 = vadd.f32 0.0, %v1114
    %1116 = vmatmul.bf16.gmra.mxu0 %v1098
    %v1117 = vpop.f32.mrf.mxu0
    %v1118 = vadd.f32 0.0, %v1117
    %v1119 = vpop.f32.mrf.mxu0
    %v1120 = vadd.f32 0.0, %v1119
    %1121 = vmatmul.bf16.gmra.mxu0 %v1101
    %v1122 = vpop.f32.mrf.mxu0
    %v1123 = vadd.f32 0.0, %v1122
    %v1124 = vpop.f32.mrf.mxu0
    %v1125 = vadd.f32 0.0, %v1124
    %1126 = vdwg.mxu0
    %v1127 = vadd.f32 %v722, %v1113
    %v1128 = vadd.f32 %v723, %v1115
    %v1129 = vadd.f32 %v724, %v1118
    %v1130 = vadd.f32 %v725, %v1120
    %v1131 = vadd.f32 %v726, %v1123
    %v1132 = vadd.f32 %v727, %v1125
    %v1133 = vadd.f32 %v1127, %v225
    %v1134 = vadd.f32 %v1128, %v226
    %v1135 = vadd.f32 %v1129, %v227
    %v1136 = vadd.f32 %v1130, %v228
    %v1137 = vadd.f32 %v1131, %v229
    %v1138 = vadd.f32 %v1132, %v230
    %v1139 = vld [vmem:[%s8] sm:$0x3]
    %v1140 = vsel %vm77, %v1133, 0.0
    %1141 = vadd.xlane.f32.xlu0 %v1140
    %v1142 = vpop.xlane.xlu0 %1141
    %v1143 = vsel %vm77, %v1134, 0.0
    %1144 = vadd.xlane.f32.xlu0 %v1143
    %v1145 = vpop.xlane.xlu0 %1144
    %v1146 = vsel %vm77, %v1135, 0.0
    %1147 = vadd.xlane.f32.xlu0 %v1146
    %v1148 = vpop.xlane.xlu0 %1147
    %v1149 = vsel %vm77, %v1136, 0.0
    %1150 = vadd.xlane.f32.xlu0 %v1149
    %v1151 = vpop.xlane.xlu0 %1150
    %v1152 = vsel %vm77, %v1137, 0.0
    %1153 = vadd.xlane.f32.xlu0 %v1152
    %v1154 = vpop.xlane.xlu0 %1153
    %v1155 = vsel %vm77, %v1138, 0.0
    %1156 = vadd.xlane.f32.xlu0 %v1155
    %v1157 = vpop.xlane.xlu0 %1156
    %v1158 = vmul.f32 %v1142, %v102
    %v1159 = vmul.f32 %v1145, %v102
    %v1160 = vmul.f32 %v1148, %v102
    %v1161 = vmul.f32 %v1151, %v102
    %v1162 = vmul.f32 %v1154, %v102
    %v1163 = vmul.f32 %v1157, %v102
    %v1164 = vsub.f32 %v1133, %v1158
    %v1165 = vsub.f32 %v1134, %v1159
    %v1166 = vsub.f32 %v1135, %v1160
    %v1167 = vsub.f32 %v1136, %v1161
    %v1168 = vsub.f32 %v1137, %v1162
    %v1169 = vsub.f32 %v1138, %v1163
    %v1170 = vmul.f32 %v1164, %v1164
    %v1171 = vmul.f32 %v1165, %v1165
    %v1172 = vmul.f32 %v1166, %v1166
    %v1173 = vmul.f32 %v1167, %v1167
    %v1174 = vmul.f32 %v1168, %v1168
    %v1175 = vmul.f32 %v1169, %v1169
    %v1176 = vsel %vm77, %v1170, 0.0
    %1177 = vadd.xlane.f32.xlu0 %v1176
    %v1178 = vpop.xlane.xlu0 %1177
    %v1179 = vsel %vm77, %v1171, 0.0
    %1180 = vadd.xlane.f32.xlu0 %v1179
    %v1181 = vpop.xlane.xlu0 %1180
    %v1182 = vsel %vm77, %v1172, 0.0
    %1183 = vadd.xlane.f32.xlu0 %v1182
    %v1184 = vpop.xlane.xlu0 %1183
    %v1185 = vsel %vm77, %v1173, 0.0
    %1186 = vadd.xlane.f32.xlu0 %v1185
    %v1187 = vpop.xlane.xlu0 %1186
    %v1188 = vsel %vm77, %v1174, 0.0
    %1189 = vadd.xlane.f32.xlu0 %v1188
    %v1190 = vpop.xlane.xlu0 %1189
    %v1191 = vsel %vm77, %v1175, 0.0
    %1192 = vadd.xlane.f32.xlu0 %v1191
    %v1193 = vpop.xlane.xlu0 %1192
    %v1194 = vmul.f32 %v1178, %v102
    %v1195 = vmul.f32 %v1181, %v102
    %v1196 = vmul.f32 %v1184, %v102
    %v1197 = vmul.f32 %v1187, %v102
    %v1198 = vmul.f32 %v1190, %v102
    %v1199 = vmul.f32 %v1193, %v102
    %v1200 = vadd.f32 %v1194, 1e-05
    %v1201 = vadd.f32 %v1195, 1e-05
    %v1202 = vadd.f32 %v1196, 1e-05
    %v1203 = vadd.f32 %v1197, 1e-05
    %v1204 = vadd.f32 %v1198, 1e-05
    %v1205 = vadd.f32 %v1199, 1e-05
    %v1206 = vrsqrt.pop %v1200
    %v1207 = vmul.f32 %v1206, %v1200
    %v1208 = vmul.f32 %v1207, %v1206
    %v1209 = vmul.f32 0.5, %v1208
    %v1210 = vsub.f32 1.5, %v1209
    %v1211 = vmul.f32 %v1206, %v1210
    %vm1212 = vweird.f32 %v1200
    %vm1213 = vweird.f32 %v1206
    %vm1214 = vmor %vm1212, %vm1213
    %v1215 = vsel %vm1214, %v1206, %v1211
    %v1216 = vrsqrt.pop %v1201
    %v1217 = vmul.f32 %v1216, %v1201
    %v1218 = vmul.f32 %v1217, %v1216
    %v1219 = vmul.f32 0.5, %v1218
    %v1220 = vsub.f32 1.5, %v1219
    %v1221 = vmul.f32 %v1216, %v1220
    %vm1222 = vweird.f32 %v1201
    %vm1223 = vweird.f32 %v1216
    %vm1224 = vmor %vm1222, %vm1223
    %v1225 = vsel %vm1224, %v1216, %v1221
    %v1226 = vrsqrt.pop %v1202
    %v1227 = vmul.f32 %v1226, %v1202
    %v1228 = vmul.f32 %v1227, %v1226
    %v1229 = vmul.f32 0.5, %v1228
    %v1230 = vsub.f32 1.5, %v1229
    %v1231 = vmul.f32 %v1226, %v1230
    %vm1232 = vweird.f32 %v1202
    %vm1233 = vweird.f32 %v1226
    %vm1234 = vmor %vm1232, %vm1233
    %v1235 = vsel %vm1234, %v1226, %v1231
    %v1236 = vrsqrt.pop %v1203
    %v1237 = vmul.f32 %v1236, %v1203
    %v1238 = vmul.f32 %v1237, %v1236
    %v1239 = vmul.f32 0.5, %v1238
    %v1240 = vsub.f32 1.5, %v1239
    %v1241 = vmul.f32 %v1236, %v1240
    %vm1242 = vweird.f32 %v1203
    %vm1243 = vweird.f32 %v1236
    %vm1244 = vmor %vm1242, %vm1243
    %v1245 = vsel %vm1244, %v1236, %v1241
    %v1246 = vrsqrt.pop %v1204
    %v1247 = vmul.f32 %v1246, %v1204
    %v1248 = vmul.f32 %v1247, %v1246
    %v1249 = vmul.f32 0.5, %v1248
    %v1250 = vsub.f32 1.5, %v1249
    %v1251 = vmul.f32 %v1246, %v1250
    %vm1252 = vweird.f32 %v1204
    %vm1253 = vweird.f32 %v1246
    %vm1254 = vmor %vm1252, %vm1253
    %v1255 = vsel %vm1254, %v1246, %v1251
    %v1256 = vrsqrt.pop %v1205
    %v1257 = vmul.f32 %v1256, %v1205
    %v1258 = vmul.f32 %v1257, %v1256
    %v1259 = vmul.f32 0.5, %v1258
    %v1260 = vsub.f32 1.5, %v1259
    %v1261 = vmul.f32 %v1256, %v1260
    %vm1262 = vweird.f32 %v1205
    %vm1263 = vweird.f32 %v1256
    %vm1264 = vmor %vm1262, %vm1263
    %v1265 = vsel %vm1264, %v1256, %v1261
    %v1266 = vmul.f32 %v1164, %v1215
    %v1267 = vmul.f32 %v1165, %v1225
    %v1268 = vmul.f32 %v1166, %v1235
    %v1269 = vmul.f32 %v1167, %v1245
    %v1270 = vmul.f32 %v1168, %v1255
    %v1271 = vmul.f32 %v1169, %v1265
    %v1272 = vperm.slane %v1139, 0
    %v1273 = vmul.f32 %v1266, %v1272
    %v1274 = vmul.f32 %v1267, %v1272
    %v1275 = vmul.f32 %v1268, %v1272
    %v1276 = vmul.f32 %v1269, %v1272
    %v1277 = vmul.f32 %v1270, %v1272
    %v1278 = vmul.f32 %v1271, %v1272
    %v1279 = vperm.slane %v1139, 1
    %v1280 = vadd.f32 %v1273, %v1279
    %v1281 = vadd.f32 %v1274, %v1279
    %v1282 = vadd.f32 %v1275, %v1279
    %v1283 = vadd.f32 %v1276, %v1279
    %v1284 = vadd.f32 %v1277, %v1279
    %v1285 = vadd.f32 %v1278, %v1279
    %v1286 = vld [vmem:[%s9] sm:$0xf]
    %v1287 = vld [vmem:[%s9 + $0x4] sm:$0xf]
    %v1288 = vld [vmem:[%s9 + $0x8] sm:$0xf]
    %v1289 = vld [vmem:[%s9 + $0xc] sm:$0xf]
    %v1290 = vld [vmem:[%s10] sm:$0x1]
    %v1291 = vpack.c.bf16 %v1281, %v1280
    %v1292 = vpack.c.bf16 %v1283, %v1282
    %v1293 = vpack.c.bf16 %v1285, %v1284
    %v1295 = vperm.slane %v1290, 0
    %v1301 = vunpack.c.l.b16 %v1286
    %v1302 = vunpack.c.l.b16 %v1287
    %v1303 = vunpack.c.l.b16 %v1288
    %v1304 = vunpack.c.l.b16 %v1289
    %v1305 = vpack.c.b16 %v1302, %v1301
    %v1306 = vpack.c.b16 %v1304, %v1303
    %v1310 = vsel %vm77, %v1291, 0
    %v1313 = vsel %vm77, %v1292, 0
    %v1316 = vsel %vm77, %v1293, 0
    %1318 = vmatpush.bf16.msra.mxu0 0
    %1319 = vmatpush.bf16.msra.mxu0 0
    %1320 = vmatpush.bf16.msra.mxu0 0
    %1321 = vmatpush.bf16.msra.mxu0 0
    %1322 = vmatpush.bf16.msra.mxu0 0
    %1323 = vmatpush.bf16.msra.mxu0 0
    %1324 = vmatpush.bf16.msra.mxu0 %v1306
    %1325 = vmatpush.bf16.msra.mxu0 %v1305
    %1326 = vmatmul.bf16.gmra.mxu0 %v1310
    %v1327 = vpop.f32.mrf.mxu0
    %v1328 = vadd.f32 %v1295, %v1327
    %v1329 = vpop.f32.mrf.mxu0
    %v1330 = vadd.f32 %v1295, %v1329
    %1331 = vmatmul.bf16.gmra.mxu0 %v1313
    %v1332 = vpop.f32.mrf.mxu0
    %v1333 = vadd.f32 %v1295, %v1332
    %v1334 = vpop.f32.mrf.mxu0
    %v1335 = vadd.f32 %v1295, %v1334
    %1336 = vmatmul.bf16.gmra.mxu0 %v1316
    %v1337 = vpop.f32.mrf.mxu0
    %v1338 = vadd.f32 %v1295, %v1337
    %v1339 = vpop.f32.mrf.mxu0
    %v1340 = vadd.f32 %v1295, %v1339
    %1341 = vdwg.mxu0
    %v1342 = vmul.f32 %v1328, %v1328
    %v1343 = vmul.f32 %v1330, %v1330
    %v1344 = vmul.f32 %v1333, %v1333
    %v1345 = vmul.f32 %v1335, %v1335
    %v1346 = vmul.f32 %v1338, %v1338
    %v1347 = vmul.f32 %v1340, %v1340
    %v1348 = vmul.f32 %v1328, %v1342
    %v1349 = vmul.f32 %v1330, %v1343
    %v1350 = vmul.f32 %v1333, %v1344
    %v1351 = vmul.f32 %v1335, %v1345
    %v1352 = vmul.f32 %v1338, %v1346
    %v1353 = vmul.f32 %v1340, %v1347
    %v1354 = vmul.f32 %v1348, 0.044715
    %v1355 = vmul.f32 %v1349, 0.044715
    %v1356 = vmul.f32 %v1350, 0.044715
    %v1357 = vmul.f32 %v1351, 0.044715
    %v1358 = vmul.f32 %v1352, 0.044715
    %v1359 = vmul.f32 %v1353, 0.044715
    %v1360 = vadd.f32 %v1328, %v1354
    %v1361 = vadd.f32 %v1330, %v1355
    %v1362 = vadd.f32 %v1333, %v1356
    %v1363 = vadd.f32 %v1335, %v1357
    %v1364 = vadd.f32 %v1338, %v1358
    %v1365 = vadd.f32 %v1340, %v1359
    %v1366 = vmul.f32 %v1360, 0.7978846
    %v1367 = vmul.f32 %v1361, 0.7978846
    %v1368 = vmul.f32 %v1362, 0.7978846
    %v1369 = vmul.f32 %v1363, 0.7978846
    %v1370 = vmul.f32 %v1364, 0.7978846
    %v1371 = vmul.f32 %v1365, 0.7978846
    %v1372 = vtanh.pop %v1366
    %v1373 = vtanh.pop %v1367
    %v1374 = vtanh.pop %v1368
    %v1375 = vtanh.pop %v1369
    %v1376 = vtanh.pop %v1370
    %v1377 = vtanh.pop %v1371
    %v1378 = vadd.f32 %v1372, 1.0
    %v1379 = vadd.f32 %v1373, 1.0
    %v1380 = vadd.f32 %v1374, 1.0
    %v1381 = vadd.f32 %v1375, 1.0
    %v1382 = vadd.f32 %v1376, 1.0
    %v1383 = vadd.f32 %v1377, 1.0
    %v1384 = vmul.f32 %v1378, 0.5
    %v1385 = vmul.f32 %v1379, 0.5
    %v1386 = vmul.f32 %v1380, 0.5
    %v1387 = vmul.f32 %v1381, 0.5
    %v1388 = vmul.f32 %v1382, 0.5
    %v1389 = vmul.f32 %v1383, 0.5
    %v1390 = vmul.f32 %v1328, %v1384
    %v1391 = vmul.f32 %v1330, %v1385
    %v1392 = vmul.f32 %v1333, %v1386
    %v1393 = vmul.f32 %v1335, %v1387
    %v1394 = vmul.f32 %v1338, %v1388
    %v1395 = vmul.f32 %v1340, %v1389
    %v1396 = vld [vmem:[%s11] sm:$0xf]
    %v1397 = vld [vmem:[%s11 + $0x4] sm:$0xf]
    %v1398 = vld [vmem:[%s11 + $0x8] sm:$0xf]
    %v1399 = vld [vmem:[%s11 + $0xc] sm:$0xf]
    %v1400 = vld [vmem:[%s11 + $0x10] sm:$0xf]
    %v1401 = vld [vmem:[%s11 + $0x14] sm:$0xf]
    %v1402 = vld [vmem:[%s11 + $0x18] sm:$0xf]
    %v1403 = vld [vmem:[%s11 + $0x1c] sm:$0xf]
    %v1404 = vld [vmem:[%s12] sm:$0x1]
    %v1405 = vpack.c.bf16 %v1391, %v1390
    %v1406 = vpack.c.bf16 %v1393, %v1392
    %v1407 = vpack.c.bf16 %v1395, %v1394
    %v1409 = vperm.slane %v1404, 0
    %v1419 = vunpack.c.l.b16 %v1396
    %v1420 = vunpack.c.l.b16 %v1397
    %v1421 = vunpack.c.l.b16 %v1398
    %v1422 = vunpack.c.l.b16 %v1399
    %v1423 = vunpack.c.l.b16 %v1400
    %v1424 = vunpack.c.l.b16 %v1401
    %v1425 = vunpack.c.l.b16 %v1402
    %v1426 = vunpack.c.l.b16 %v1403
    %v1427 = vpack.c.b16 %v1420, %v1419
    %v1428 = vpack.c.b16 %v1422, %v1421
    %v1429 = vpack.c.b16 %v1424, %v1423
    %v1430 = vpack.c.b16 %v1426, %v1425
    %vm1435 = vcmask 523264
    %v1437 = vsel %vm1435, %v1405, 0
    %v1440 = vsel %vm1435, %v1406, 0
    %v1443 = vsel %vm1435, %v1407, 0
    %1445 = vmatpush.bf16.msra.mxu0 0
    %1446 = vmatpush.bf16.msra.mxu0 0
    %1447 = vmatpush.bf16.msra.mxu0 0
    %1448 = vmatpush.bf16.msra.mxu0 0
    %1449 = vmatpush.bf16.msra.mxu0 %v1430
    %1450 = vmatpush.bf16.msra.mxu0 %v1429
    %1451 = vmatpush.bf16.msra.mxu0 %v1428
    %1452 = vmatpush.bf16.msra.mxu0 %v1427
    %1453 = vmatmul.bf16.gmra.mxu0 %v1437
    %v1454 = vpop.f32.mrf.mxu0
    %v1455 = vadd.f32 %v1409, %v1454
    %v1456 = vpop.f32.mrf.mxu0
    %v1457 = vadd.f32 %v1409, %v1456
    %1458 = vmatmul.bf16.gmra.mxu0 %v1440
    %v1459 = vpop.f32.mrf.mxu0
    %v1460 = vadd.f32 %v1409, %v1459
    %v1461 = vpop.f32.mrf.mxu0
    %v1462 = vadd.f32 %v1409, %v1461
    %1463 = vmatmul.bf16.gmra.mxu0 %v1443
    %v1464 = vpop.f32.mrf.mxu0
    %v1465 = vadd.f32 %v1409, %v1464
    %v1466 = vpop.f32.mrf.mxu0
    %v1467 = vadd.f32 %v1409, %v1466
    %1468 = vdwg.mxu0
    %v1469 = vadd.f32 %v1455, %v1280
    %v1470 = vadd.f32 %v1457, %v1281
    %v1471 = vadd.f32 %v1460, %v1282
    %v1472 = vadd.f32 %v1462, %v1283
    %v1473 = vadd.f32 %v1465, %v1284
    %v1474 = vadd.f32 %v1467, %v1285
    %v1475 = vld [vmem:[%s13] sm:$0x3]
    %v1476 = vsel %vm77, %v1469, 0.0
    %1477 = vadd.xlane.f32.xlu0 %v1476
    %v1478 = vpop.xlane.xlu0 %1477
    %v1479 = vsel %vm77, %v1470, 0.0
    %1480 = vadd.xlane.f32.xlu0 %v1479
    %v1481 = vpop.xlane.xlu0 %1480
    %v1482 = vsel %vm77, %v1471, 0.0
    %1483 = vadd.xlane.f32.xlu0 %v1482
    %v1484 = vpop.xlane.xlu0 %1483
    %v1485 = vsel %vm77, %v1472, 0.0
    %1486 = vadd.xlane.f32.xlu0 %v1485
    %v1487 = vpop.xlane.xlu0 %1486
    %v1488 = vsel %vm77, %v1473, 0.0
    %1489 = vadd.xlane.f32.xlu0 %v1488
    %v1490 = vpop.xlane.xlu0 %1489
    %v1491 = vsel %vm77, %v1474, 0.0
    %1492 = vadd.xlane.f32.xlu0 %v1491
    %v1493 = vpop.xlane.xlu0 %1492
    %v1494 = vmul.f32 %v1478, %v102
    %v1495 = vmul.f32 %v1481, %v102
    %v1496 = vmul.f32 %v1484, %v102
    %v1497 = vmul.f32 %v1487, %v102
    %v1498 = vmul.f32 %v1490, %v102
    %v1499 = vmul.f32 %v1493, %v102
    %v1500 = vsub.f32 %v1469, %v1494
    %v1501 = vsub.f32 %v1470, %v1495
    %v1502 = vsub.f32 %v1471, %v1496
    %v1503 = vsub.f32 %v1472, %v1497
    %v1504 = vsub.f32 %v1473, %v1498
    %v1505 = vsub.f32 %v1474, %v1499
    %v1506 = vmul.f32 %v1500, %v1500
    %v1507 = vmul.f32 %v1501, %v1501
    %v1508 = vmul.f32 %v1502, %v1502
    %v1509 = vmul.f32 %v1503, %v1503
    %v1510 = vmul.f32 %v1504, %v1504
    %v1511 = vmul.f32 %v1505, %v1505
    %v1512 = vsel %vm77, %v1506, 0.0
    %1513 = vadd.xlane.f32.xlu0 %v1512
    %v1514 = vpop.xlane.xlu0 %1513
    %v1515 = vsel %vm77, %v1507, 0.0
    %1516 = vadd.xlane.f32.xlu0 %v1515
    %v1517 = vpop.xlane.xlu0 %1516
    %v1518 = vsel %vm77, %v1508, 0.0
    %1519 = vadd.xlane.f32.xlu0 %v1518
    %v1520 = vpop.xlane.xlu0 %1519
    %v1521 = vsel %vm77, %v1509, 0.0
    %1522 = vadd.xlane.f32.xlu0 %v1521
    %v1523 = vpop.xlane.xlu0 %1522
    %v1524 = vsel %vm77, %v1510, 0.0
    %1525 = vadd.xlane.f32.xlu0 %v1524
    %v1526 = vpop.xlane.xlu0 %1525
    %v1527 = vsel %vm77, %v1511, 0.0
    %1528 = vadd.xlane.f32.xlu0 %v1527
    %v1529 = vpop.xlane.xlu0 %1528
    %v1530 = vmul.f32 %v1514, %v102
    %v1531 = vmul.f32 %v1517, %v102
    %v1532 = vmul.f32 %v1520, %v102
    %v1533 = vmul.f32 %v1523, %v102
    %v1534 = vmul.f32 %v1526, %v102
    %v1535 = vmul.f32 %v1529, %v102
    %v1536 = vadd.f32 %v1530, 1e-05
    %v1537 = vadd.f32 %v1531, 1e-05
    %v1538 = vadd.f32 %v1532, 1e-05
    %v1539 = vadd.f32 %v1533, 1e-05
    %v1540 = vadd.f32 %v1534, 1e-05
    %v1541 = vadd.f32 %v1535, 1e-05
    %v1542 = vrsqrt.pop %v1536
    %v1543 = vmul.f32 %v1542, %v1536
    %v1544 = vmul.f32 %v1543, %v1542
    %v1545 = vmul.f32 0.5, %v1544
    %v1546 = vsub.f32 1.5, %v1545
    %v1547 = vmul.f32 %v1542, %v1546
    %vm1548 = vweird.f32 %v1536
    %vm1549 = vweird.f32 %v1542
    %vm1550 = vmor %vm1548, %vm1549
    %v1551 = vsel %vm1550, %v1542, %v1547
    %v1552 = vrsqrt.pop %v1537
    %v1553 = vmul.f32 %v1552, %v1537
    %v1554 = vmul.f32 %v1553, %v1552
    %v1555 = vmul.f32 0.5, %v1554
    %v1556 = vsub.f32 1.5, %v1555
    %v1557 = vmul.f32 %v1552, %v1556
    %vm1558 = vweird.f32 %v1537
    %vm1559 = vweird.f32 %v1552
    %vm1560 = vmor %vm1558, %vm1559
    %v1561 = vsel %vm1560, %v1552, %v1557
    %v1562 = vrsqrt.pop %v1538
    %v1563 = vmul.f32 %v1562, %v1538
    %v1564 = vmul.f32 %v1563, %v1562
    %v1565 = vmul.f32 0.5, %v1564
    %v1566 = vsub.f32 1.5, %v1565
    %v1567 = vmul.f32 %v1562, %v1566
    %vm1568 = vweird.f32 %v1538
    %vm1569 = vweird.f32 %v1562
    %vm1570 = vmor %vm1568, %vm1569
    %v1571 = vsel %vm1570, %v1562, %v1567
    %v1572 = vrsqrt.pop %v1539
    %v1573 = vmul.f32 %v1572, %v1539
    %v1574 = vmul.f32 %v1573, %v1572
    %v1575 = vmul.f32 0.5, %v1574
    %v1576 = vsub.f32 1.5, %v1575
    %v1577 = vmul.f32 %v1572, %v1576
    %vm1578 = vweird.f32 %v1539
    %vm1579 = vweird.f32 %v1572
    %vm1580 = vmor %vm1578, %vm1579
    %v1581 = vsel %vm1580, %v1572, %v1577
    %v1582 = vrsqrt.pop %v1540
    %v1583 = vmul.f32 %v1582, %v1540
    %v1584 = vmul.f32 %v1583, %v1582
    %v1585 = vmul.f32 0.5, %v1584
    %v1586 = vsub.f32 1.5, %v1585
    %v1587 = vmul.f32 %v1582, %v1586
    %vm1588 = vweird.f32 %v1540
    %vm1589 = vweird.f32 %v1582
    %vm1590 = vmor %vm1588, %vm1589
    %v1591 = vsel %vm1590, %v1582, %v1587
    %v1592 = vrsqrt.pop %v1541
    %v1593 = vmul.f32 %v1592, %v1541
    %v1594 = vmul.f32 %v1593, %v1592
    %v1595 = vmul.f32 0.5, %v1594
    %v1596 = vsub.f32 1.5, %v1595
    %v1597 = vmul.f32 %v1592, %v1596
    %vm1598 = vweird.f32 %v1541
    %vm1599 = vweird.f32 %v1592
    %vm1600 = vmor %vm1598, %vm1599
    %v1601 = vsel %vm1600, %v1592, %v1597
    %v1602 = vmul.f32 %v1500, %v1551
    %v1603 = vmul.f32 %v1501, %v1561
    %v1604 = vmul.f32 %v1502, %v1571
    %v1605 = vmul.f32 %v1503, %v1581
    %v1606 = vmul.f32 %v1504, %v1591
    %v1607 = vmul.f32 %v1505, %v1601
    %v1608 = vperm.slane %v1475, 0
    %v1609 = vmul.f32 %v1602, %v1608
    %v1610 = vmul.f32 %v1603, %v1608
    %v1611 = vmul.f32 %v1604, %v1608
    %v1612 = vmul.f32 %v1605, %v1608
    %v1613 = vmul.f32 %v1606, %v1608
    %v1614 = vmul.f32 %v1607, %v1608
    %v1615 = vperm.slane %v1475, 1
    %v1616 = vadd.f32 %v1609, %v1615
    %v1617 = vadd.f32 %v1610, %v1615
    %v1618 = vadd.f32 %v1611, %v1615
    %v1619 = vadd.f32 %v1612, %v1615
    %v1620 = vadd.f32 %v1613, %v1615
    %v1621 = vadd.f32 %v1614, %v1615
    %s1622 = scalar_lea.vmem %s4, 16
    %v1623 = vld [vmem:[%s1622] sm:$0xf]
    %v1624 = vld [vmem:[%s1622 + $0x4] sm:$0xf]
    %v1625 = vld [vmem:[%s1622 + $0x8] sm:$0xf]
    %v1626 = vld [vmem:[%s1622 + $0xc] sm:$0xf]
    %s1627 = scalar_lea.vmem %s5, 1
    %v1628 = vld [vmem:[%s1627] sm:$0x1]
    %v1629 = vpack.c.bf16 %v1617, %v1616
    %v1630 = vpack.c.bf16 %v1619, %v1618
    %v1631 = vpack.c.bf16 %v1621, %v1620
    %v1633 = vperm.slane %v1628, 0
    %v1639 = vunpack.c.l.b16 %v1623
    %v1640 = vunpack.c.l.b16 %v1624
    %v1641 = vunpack.c.l.b16 %v1625
    %v1642 = vunpack.c.l.b16 %v1626
    %v1643 = vpack.c.b16 %v1640, %v1639
    %v1644 = vpack.c.b16 %v1642, %v1641
    %v1648 = vsel %vm77, %v1629, 0
    %v1651 = vsel %vm77, %v1630, 0
    %v1654 = vsel %vm77, %v1631, 0
    %1656 = vmatpush.bf16.msra.mxu0 0
    %1657 = vmatpush.bf16.msra.mxu0 0
    %1658 = vmatpush.bf16.msra.mxu0 0
    %1659 = vmatpush.bf16.msra.mxu0 0
    %1660 = vmatpush.bf16.msra.mxu0 0
    %1661 = vmatpush.bf16.msra.mxu0 0
    %1662 = vmatpush.bf16.msra.mxu0 %v1644
    %1663 = vmatpush.bf16.msra.mxu0 %v1643
    %1664 = vmatmul.bf16.gmra.mxu0 %v1648
    %v1665 = vpop.f32.mrf.mxu0
    %v1666 = vadd.f32 %v1633, %v1665
    %v1667 = vpop.f32.mrf.mxu0
    %v1668 = vadd.f32 %v1633, %v1667
    %1669 = vmatmul.bf16.gmra.mxu0 %v1651
    %v1670 = vpop.f32.mrf.mxu0
    %v1671 = vadd.f32 %v1633, %v1670
    %v1672 = vpop.f32.mrf.mxu0
    %v1673 = vadd.f32 %v1633, %v1672
    %1674 = vmatmul.bf16.gmra.mxu0 %v1654
    %v1675 = vpop.f32.mrf.mxu0
    %v1676 = vadd.f32 %v1633, %v1675
    %v1677 = vpop.f32.mrf.mxu0
    %v1678 = vadd.f32 %v1633, %v1677
    %1679 = vdwg.mxu0
    %v1680 = vmul.f32 %v1666, 0.25
    %v1681 = vmul.f32 %v1668, 0.25
    %v1682 = vmul.f32 %v1671, 0.25
    %v1683 = vmul.f32 %v1673, 0.25
    %v1684 = vmul.f32 %v1676, 0.25
    %v1685 = vmul.f32 %v1678, 0.25
    %s1686 = scalar_lea.vmem %s7, 1
    %v1687 = vld [vmem:[%s1686] sm:$0x1]
    %v1688 = vpack.c.bf16 %v1680, %v1680
    %v1689 = vpack.c.bf16 %v1681, %v1681
    %v1690 = vpack.c.bf16 %v1682, %v1682
    %v1691 = vpack.c.bf16 %v1683, %v1683
    %v1692 = vpack.c.bf16 %v1684, %v1684
    %v1693 = vpack.c.bf16 %v1685, %v1685
    %v1694 = vpack.c.bf16 %v1666, %v1666
    %v1695 = vpack.c.bf16 %v1668, %v1668
    %v1696 = vpack.c.bf16 %v1671, %v1671
    %v1697 = vpack.c.bf16 %v1673, %v1673
    %v1698 = vpack.c.bf16 %v1676, %v1676
    %v1699 = vpack.c.bf16 %v1678, %v1678
    %v1701 = vunpack.c.l.b16 %v1694
    %v1702 = vpack.c.b16 %v1701, %v1701
    %1703 = vrot.lane.b32.xlu0 %v1702, 96
    %v1704 = vpop.permute.xlu0 %1703
    %v1706 = vsel %vm335, %v1688, 0
    %v1709 = vsel %vm335, %v1704, 0
    %1711 = vmatpush.bf16.xpose.msra.mxu0 0
    %1712 = vmatpush.bf16.xpose.msra.mxu0 0
    %1713 = vmatpush.bf16.xpose.msra.mxu0 0
    %1714 = vmatpush.bf16.xpose.msra.mxu0 0
    %1715 = vmatpush.bf16.xpose.msra.mxu0 0
    %1716 = vmatpush.bf16.xpose.msra.mxu0 0
    %1717 = vmatpush.bf16.xpose.msra.mxu0 0
    %1718 = vmatpush.bf16.xpose.msra.mxu0 %v1709
    %1719 = vmatmul.bf16.gmra.mxu0 %v1706
    %v1720 = vpop.f32.mrf.mxu0
    %v1721 = vadd.f32 %v318, %v1720
    %v1722 = vpop.f32.mrf.mxu0
    %1723 = vdwg.mxu0
    %v1725 = vunpack.c.l.b16 %v1695
    %v1726 = vpack.c.b16 %v1725, %v1725
    %1727 = vrot.lane.b32.xlu0 %v1726, 96
    %v1728 = vpop.permute.xlu0 %1727
    %v1730 = vsel %vm335, %v1689, 0
    %v1733 = vsel %vm335, %v1728, 0
    %1735 = vmatpush.bf16.xpose.msra.mxu0 0
    %1736 = vmatpush.bf16.xpose.msra.mxu0 0
    %1737 = vmatpush.bf16.xpose.msra.mxu0 0
    %1738 = vmatpush.bf16.xpose.msra.mxu0 0
    %1739 = vmatpush.bf16.xpose.msra.mxu0 0
    %1740 = vmatpush.bf16.xpose.msra.mxu0 0
    %1741 = vmatpush.bf16.xpose.msra.mxu0 0
    %1742 = vmatpush.bf16.xpose.msra.mxu0 %v1733
    %1743 = vmatmul.bf16.gmra.mxu0 %v1730
    %v1744 = vpop.f32.mrf.mxu0
    %v1745 = vadd.f32 %v319, %v1744
    %v1746 = vpop.f32.mrf.mxu0
    %1747 = vdwg.mxu0
    %v1749 = vunpack.c.l.b16 %v1696
    %v1750 = vpack.c.b16 %v1749, %v1749
    %1751 = vrot.lane.b32.xlu0 %v1750, 96
    %v1752 = vpop.permute.xlu0 %1751
    %v1754 = vsel %vm335, %v1690, 0
    %v1757 = vsel %vm335, %v1752, 0
    %1759 = vmatpush.bf16.xpose.msra.mxu0 0
    %1760 = vmatpush.bf16.xpose.msra.mxu0 0
    %1761 = vmatpush.bf16.xpose.msra.mxu0 0
    %1762 = vmatpush.bf16.xpose.msra.mxu0 0
    %1763 = vmatpush.bf16.xpose.msra.mxu0 0
    %1764 = vmatpush.bf16.xpose.msra.mxu0 0
    %1765 = vmatpush.bf16.xpose.msra.mxu0 0
    %1766 = vmatpush.bf16.xpose.msra.mxu0 %v1757
    %1767 = vmatmul.bf16.gmra.mxu0 %v1754
    %v1768 = vpop.f32.mrf.mxu0
    %v1769 = vadd.f32 %v320, %v1768
    %v1770 = vpop.f32.mrf.mxu0
    %1771 = vdwg.mxu0
    %v1773 = vunpack.c.l.b16 %v1697
    %v1774 = vpack.c.b16 %v1773, %v1773
    %1775 = vrot.lane.b32.xlu0 %v1774, 96
    %v1776 = vpop.permute.xlu0 %1775
    %v1778 = vsel %vm335, %v1691, 0
    %v1781 = vsel %vm335, %v1776, 0
    %1783 = vmatpush.bf16.xpose.msra.mxu0 0
    %1784 = vmatpush.bf16.xpose.msra.mxu0 0
    %1785 = vmatpush.bf16.xpose.msra.mxu0 0
    %1786 = vmatpush.bf16.xpose.msra.mxu0 0
    %1787 = vmatpush.bf16.xpose.msra.mxu0 0
    %1788 = vmatpush.bf16.xpose.msra.mxu0 0
    %1789 = vmatpush.bf16.xpose.msra.mxu0 0
    %1790 = vmatpush.bf16.xpose.msra.mxu0 %v1781
    %1791 = vmatmul.bf16.gmra.mxu0 %v1778
    %v1792 = vpop.f32.mrf.mxu0
    %v1793 = vadd.f32 %v321, %v1792
    %v1794 = vpop.f32.mrf.mxu0
    %1795 = vdwg.mxu0
    %v1797 = vunpack.c.l.b16 %v1698
    %v1798 = vpack.c.b16 %v1797, %v1797
    %1799 = vrot.lane.b32.xlu0 %v1798, 96
    %v1800 = vpop.permute.xlu0 %1799
    %v1802 = vsel %vm335, %v1692, 0
    %v1805 = vsel %vm335, %v1800, 0
    %1807 = vmatpush.bf16.xpose.msra.mxu0 0
    %1808 = vmatpush.bf16.xpose.msra.mxu0 0
    %1809 = vmatpush.bf16.xpose.msra.mxu0 0
    %1810 = vmatpush.bf16.xpose.msra.mxu0 0
    %1811 = vmatpush.bf16.xpose.msra.mxu0 0
    %1812 = vmatpush.bf16.xpose.msra.mxu0 0
    %1813 = vmatpush.bf16.xpose.msra.mxu0 0
    %1814 = vmatpush.bf16.xpose.msra.mxu0 %v1805
    %1815 = vmatmul.bf16.gmra.mxu0 %v1802
    %v1816 = vpop.f32.mrf.mxu0
    %v1817 = vadd.f32 %v322, %v1816
    %v1818 = vpop.f32.mrf.mxu0
    %1819 = vdwg.mxu0
    %v1821 = vunpack.c.l.b16 %v1699
    %v1822 = vpack.c.b16 %v1821, %v1821
    %1823 = vrot.lane.b32.xlu0 %v1822, 96
    %v1824 = vpop.permute.xlu0 %1823
    %v1826 = vsel %vm335, %v1693, 0
    %v1829 = vsel %vm335, %v1824, 0
    %1831 = vmatpush.bf16.xpose.msra.mxu0 0
    %1832 = vmatpush.bf16.xpose.msra.mxu0 0
    %1833 = vmatpush.bf16.xpose.msra.mxu0 0
    %1834 = vmatpush.bf16.xpose.msra.mxu0 0
    %1835 = vmatpush.bf16.xpose.msra.mxu0 0
    %1836 = vmatpush.bf16.xpose.msra.mxu0 0
    %1837 = vmatpush.bf16.xpose.msra.mxu0 0
    %1838 = vmatpush.bf16.xpose.msra.mxu0 %v1829
    %1839 = vmatmul.bf16.gmra.mxu0 %v1826
    %v1840 = vpop.f32.mrf.mxu0
    %v1841 = vadd.f32 %v323, %v1840
    %v1842 = vpop.f32.mrf.mxu0
    %1843 = vdwg.mxu0
    %v1844 = vsel %vm475, %v1721, -inf
    %1845 = vmax.xlane.f32.xlu0 %v1844
    %v1846 = vpop.xlane.xlu0 %1845
    %v1847 = vsel %vm475, %v1745, -inf
    %1848 = vmax.xlane.f32.xlu0 %v1847
    %v1849 = vpop.xlane.xlu0 %1848
    %v1850 = vsel %vm475, %v1769, -inf
    %1851 = vmax.xlane.f32.xlu0 %v1850
    %v1852 = vpop.xlane.xlu0 %1851
    %v1853 = vsel %vm475, %v1793, -inf
    %1854 = vmax.xlane.f32.xlu0 %v1853
    %v1855 = vpop.xlane.xlu0 %1854
    %v1856 = vsel %vm475, %v1817, -inf
    %1857 = vmax.xlane.f32.xlu0 %v1856
    %v1858 = vpop.xlane.xlu0 %1857
    %v1859 = vsel %vm475, %v1841, -inf
    %1860 = vmax.xlane.f32.xlu0 %v1859
    %v1861 = vpop.xlane.xlu0 %1860
    %v1862 = vsub.f32 %v1721, %v1846
    %v1863 = vsub.f32 %v1745, %v1849
    %v1864 = vsub.f32 %v1769, %v1852
    %v1865 = vsub.f32 %v1793, %v1855
    %v1866 = vsub.f32 %v1817, %v1858
    %v1867 = vsub.f32 %v1841, %v1861
    %v1868 = vmul.f32 %v1862, 1.442695
    %v1869 = vpow.pop %v1868
    %v1870 = vmul.f32 %v1863, 1.442695
    %v1871 = vpow.pop %v1870
    %v1872 = vmul.f32 %v1864, 1.442695
    %v1873 = vpow.pop %v1872
    %v1874 = vmul.f32 %v1865, 1.442695
    %v1875 = vpow.pop %v1874
    %v1876 = vmul.f32 %v1866, 1.442695
    %v1877 = vpow.pop %v1876
    %v1878 = vmul.f32 %v1867, 1.442695
    %v1879 = vpow.pop %v1878
    %v1880 = vsel %vm475, %v1869, 0.0
    %1881 = vadd.xlane.f32.xlu0 %v1880
    %v1882 = vpop.xlane.xlu0 %1881
    %v1883 = vsel %vm475, %v1871, 0.0
    %1884 = vadd.xlane.f32.xlu0 %v1883
    %v1885 = vpop.xlane.xlu0 %1884
    %v1886 = vsel %vm475, %v1873, 0.0
    %1887 = vadd.xlane.f32.xlu0 %v1886
    %v1888 = vpop.xlane.xlu0 %1887
    %v1889 = vsel %vm475, %v1875, 0.0
    %1890 = vadd.xlane.f32.xlu0 %v1889
    %v1891 = vpop.xlane.xlu0 %1890
    %v1892 = vsel %vm475, %v1877, 0.0
    %1893 = vadd.xlane.f32.xlu0 %v1892
    %v1894 = vpop.xlane.xlu0 %1893
    %v1895 = vsel %vm475, %v1879, 0.0
    %1896 = vadd.xlane.f32.xlu0 %v1895
    %v1897 = vpop.xlane.xlu0 %1896
    %v1898 = vrcp.pop %v1882
    %v1899 = vrcp.pop %v1885
    %v1900 = vrcp.pop %v1888
    %v1901 = vrcp.pop %v1891
    %v1902 = vrcp.pop %v1894
    %v1903 = vrcp.pop %v1897
    %v1904 = vmul.f32 %v1869, %v1898
    %v1905 = vmul.f32 %v1871, %v1899
    %v1906 = vmul.f32 %v1873, %v1900
    %v1907 = vmul.f32 %v1875, %v1901
    %v1908 = vmul.f32 %v1877, %v1902
    %v1909 = vmul.f32 %v1879, %v1903
    %v1910 = vpack.c.bf16 %v1904, %v1904
    %v1911 = vpack.c.bf16 %v1905, %v1905
    %v1912 = vpack.c.bf16 %v1906, %v1906
    %v1913 = vpack.c.bf16 %v1907, %v1907
    %v1914 = vpack.c.bf16 %v1908, %v1908
    %v1915 = vpack.c.bf16 %v1909, %v1909
    %1916 = vrot.lane.b32.xlu0 %v1702, 64
    %v1917 = vpop.permute.xlu0 %1916
    %v1919 = vsel %vm475, %v1910, 0
    %v1922 = vsel %vm553, %v1917, 0
    %1924 = vmatpush.bf16.msra.mxu0 0
    %1925 = vmatpush.bf16.msra.mxu0 0
    %1926 = vmatpush.bf16.msra.mxu0 0
    %1927 = vmatpush.bf16.msra.mxu0 0
    %1928 = vmatpush.bf16.msra.mxu0 0
    %1929 = vmatpush.bf16.msra.mxu0 0
    %1930 = vmatpush.bf16.msra.mxu0 0
    %1931 = vmatpush.bf16.msra.mxu0 %v1922
    %1932 = vmatmul.bf16.gmra.mxu0 %v1919
    %v1933 = vpop.f32.mrf.mxu0
    %v1934 = vadd.f32 0.0, %v1933
    %v1935 = vpop.f32.mrf.mxu0
    %1936 = vdwg.mxu0
    %1937 = vrot.lane.b32.xlu0 %v1726, 64
    %v1938 = vpop.permute.xlu0 %1937
    %v1940 = vsel %vm475, %v1911, 0
    %v1943 = vsel %vm553, %v1938, 0
    %1945 = vmatpush.bf16.msra.mxu0 0
    %1946 = vmatpush.bf16.msra.mxu0 0
    %1947 = vmatpush.bf16.msra.mxu0 0
    %1948 = vmatpush.bf16.msra.mxu0 0
    %1949 = vmatpush.bf16.msra.mxu0 0
    %1950 = vmatpush.bf16.msra.mxu0 0
    %1951 = vmatpush.bf16.msra.mxu0 0
    %1952 = vmatpush.bf16.msra.mxu0 %v1943
    %1953 = vmatmul.bf16.gmra.mxu0 %v1940
    %v1954 = vpop.f32.mrf.mxu0
    %v1955 = vadd.f32 0.0, %v1954
    %v1956 = vpop.f32.mrf.mxu0
    %1957 = vdwg.mxu0
    %1958 = vrot.lane.b32.xlu0 %v1750, 64
    %v1959 = vpop.permute.xlu0 %1958
    %v1961 = vsel %vm475, %v1912, 0
    %v1964 = vsel %vm553, %v1959, 0
    %1966 = vmatpush.bf16.msra.mxu0 0
    %1967 = vmatpush.bf16.msra.mxu0 0
    %1968 = vmatpush.bf16.msra.mxu0 0
    %1969 = vmatpush.bf16.msra.mxu0 0
    %1970 = vmatpush.bf16.msra.mxu0 0
    %1971 = vmatpush.bf16.msra.mxu0 0
    %1972 = vmatpush.bf16.msra.mxu0 0
    %1973 = vmatpush.bf16.msra.mxu0 %v1964
    %1974 = vmatmul.bf16.gmra.mxu0 %v1961
    %v1975 = vpop.f32.mrf.mxu0
    %v1976 = vadd.f32 0.0, %v1975
    %v1977 = vpop.f32.mrf.mxu0
    %1978 = vdwg.mxu0
    %1979 = vrot.lane.b32.xlu0 %v1774, 64
    %v1980 = vpop.permute.xlu0 %1979
    %v1982 = vsel %vm475, %v1913, 0
    %v1985 = vsel %vm553, %v1980, 0
    %1987 = vmatpush.bf16.msra.mxu0 0
    %1988 = vmatpush.bf16.msra.mxu0 0
    %1989 = vmatpush.bf16.msra.mxu0 0
    %1990 = vmatpush.bf16.msra.mxu0 0
    %1991 = vmatpush.bf16.msra.mxu0 0
    %1992 = vmatpush.bf16.msra.mxu0 0
    %1993 = vmatpush.bf16.msra.mxu0 0
    %1994 = vmatpush.bf16.msra.mxu0 %v1985
    %1995 = vmatmul.bf16.gmra.mxu0 %v1982
    %v1996 = vpop.f32.mrf.mxu0
    %v1997 = vadd.f32 0.0, %v1996
    %v1998 = vpop.f32.mrf.mxu0
    %1999 = vdwg.mxu0
    %2000 = vrot.lane.b32.xlu0 %v1798, 64
    %v2001 = vpop.permute.xlu0 %2000
    %v2003 = vsel %vm475, %v1914, 0
    %v2006 = vsel %vm553, %v2001, 0
    %2008 = vmatpush.bf16.msra.mxu0 0
    %2009 = vmatpush.bf16.msra.mxu0 0
    %2010 = vmatpush.bf16.msra.mxu0 0
    %2011 = vmatpush.bf16.msra.mxu0 0
    %2012 = vmatpush.bf16.msra.mxu0 0
    %2013 = vmatpush.bf16.msra.mxu0 0
    %2014 = vmatpush.bf16.msra.mxu0 0
    %2015 = vmatpush.bf16.msra.mxu0 %v2006
    %2016 = vmatmul.bf16.gmra.mxu0 %v2003
    %v2017 = vpop.f32.mrf.mxu0
    %v2018 = vadd.f32 0.0, %v2017
    %v2019 = vpop.f32.mrf.mxu0
    %2020 = vdwg.mxu0
    %2021 = vrot.lane.b32.xlu0 %v1822, 64
    %v2022 = vpop.permute.xlu0 %2021
    %v2024 = vsel %vm475, %v1915, 0
    %v2027 = vsel %vm553, %v2022, 0
    %2029 = vmatpush.bf16.msra.mxu0 0
    %2030 = vmatpush.bf16.msra.mxu0 0
    %2031 = vmatpush.bf16.msra.mxu0 0
    %2032 = vmatpush.bf16.msra.mxu0 0
    %2033 = vmatpush.bf16.msra.mxu0 0
    %2034 = vmatpush.bf16.msra.mxu0 0
    %2035 = vmatpush.bf16.msra.mxu0 0
    %2036 = vmatpush.bf16.msra.mxu0 %v2027
    %2037 = vmatmul.bf16.gmra.mxu0 %v2024
    %v2038 = vpop.f32.mrf.mxu0
    %v2039 = vadd.f32 0.0, %v2038
    %v2040 = vpop.f32.mrf.mxu0
    %2041 = vdwg.mxu0
    %v2042 = vpack.c.bf16 %v1955, %v1934
    %v2043 = vpack.c.bf16 %v1997, %v1976
    %v2044 = vpack.c.bf16 %v2039, %v2018
    %s2045 = scalar_lea.vmem %s6, 16
    %v2046 = vld [vmem:[%s2045] sm:$0xf]
    %v2047 = vld [vmem:[%s2045 + $0x4] sm:$0xf]
    %v2050 = vunpack.c.l.b16 %v2046
    %v2051 = vunpack.c.l.b16 %v2047
    %v2052 = vpack.c.b16 %v2051, %v2050
    %v2055 = vsel %vm335, %v2042, 0
    %v2058 = vsel %vm335, %v2043, 0
    %v2061 = vsel %vm335, %v2044, 0
    %2063 = vmatpush.bf16.msra.mxu0 0
    %2064 = vmatpush.bf16.msra.mxu0 0
    %2065 = vmatpush.bf16.msra.mxu0 0
    %2066 = vmatpush.bf16.msra.mxu0 0
    %2067 = vmatpush.bf16.msra.mxu0 0
    %2068 = vmatpush.bf16.msra.mxu0 0
    %2069 = vmatpush.bf16.msra.mxu0 0
    %2070 = vmatpush.bf16.msra.mxu0 %v2052
    %2071 = vmatmul.bf16.gmra.mxu0 %v2055
    %v2072 = vpop.f32.mrf.mxu0
    %v2073 = vadd.f32 0.0, %v2072
    %v2074 = vpop.f32.mrf.mxu0
    %v2075 = vadd.f32 0.0, %v2074
    %2076 = vmatmul.bf16.gmra.mxu0 %v2058
    %v2077 = vpop.f32.mrf.mxu0
    %v2078 = vadd.f32 0.0, %v2077
    %v2079 = vpop.f32.mrf.mxu0
    %v2080 = vadd.f32 0.0, %v2079
    %2081 = vmatmul.bf16.gmra.mxu0 %v2061
    %v2082 = vpop.f32.mrf.mxu0
    %v2083 = vadd.f32 0.0, %v2082
    %v2084 = vpop.f32.mrf.mxu0
    %v2085 = vadd.f32 0.0, %v2084
    %2086 = vdwg.mxu0
    %v2088 = vperm.slane %v1687, 0
    %v2090 = vadd.f32 %v2088, %v2073
    %v2091 = vadd.f32 %v2088, %v2075
    %v2092 = vadd.f32 %v2088, %v2078
    %v2093 = vadd.f32 %v2088, %v2080
    %v2094 = vadd.f32 %v2088, %v2083
    %v2095 = vadd.f32 %v2088, %v2085
    %v2097 = vunpack.c.l.b16 %v1688
    %v2098 = vpack.c.b16 %v2097, %v2097
    %2099 = vrot.lane.b32.xlu0 %v2098, 112
    %v2100 = vpop.permute.xlu0 %2099
    %2101 = vrot.lane.b32.xlu0 %v1702, 80
    %v2102 = vpop.permute.xlu0 %2101
    %v2104 = vsel %vm335, %v2100, 0
    %v2107 = vsel %vm335, %v2102, 0
    %2109 = vmatpush.bf16.xpose.msra.mxu0 0
    %2110 = vmatpush.bf16.xpose.msra.mxu0 0
    %2111 = vmatpush.bf16.xpose.msra.mxu0 0
    %2112 = vmatpush.bf16.xpose.msra.mxu0 0
    %2113 = vmatpush.bf16.xpose.msra.mxu0 0
    %2114 = vmatpush.bf16.xpose.msra.mxu0 0
    %2115 = vmatpush.bf16.xpose.msra.mxu0 0
    %2116 = vmatpush.bf16.xpose.msra.mxu0 %v2107
    %2117 = vmatmul.bf16.gmra.mxu0 %v2104
    %v2118 = vpop.f32.mrf.mxu0
    %v2119 = vadd.f32 %v318, %v2118
    %v2120 = vpop.f32.mrf.mxu0
    %2121 = vdwg.mxu0
    %v2123 = vunpack.c.l.b16 %v1689
    %v2124 = vpack.c.b16 %v2123, %v2123
    %2125 = vrot.lane.b32.xlu0 %v2124, 112
    %v2126 = vpop.permute.xlu0 %2125
    %2127 = vrot.lane.b32.xlu0 %v1726, 80
    %v2128 = vpop.permute.xlu0 %2127
    %v2130 = vsel %vm335, %v2126, 0
    %v2133 = vsel %vm335, %v2128, 0
    %2135 = vmatpush.bf16.xpose.msra.mxu0 0
    %2136 = vmatpush.bf16.xpose.msra.mxu0 0
    %2137 = vmatpush.bf16.xpose.msra.mxu0 0
    %2138 = vmatpush.bf16.xpose.msra.mxu0 0
    %2139 = vmatpush.bf16.xpose.msra.mxu0 0
    %2140 = vmatpush.bf16.xpose.msra.mxu0 0
    %2141 = vmatpush.bf16.xpose.msra.mxu0 0
    %2142 = vmatpush.bf16.xpose.msra.mxu0 %v2133
    %2143 = vmatmul.bf16.gmra.mxu0 %v2130
    %v2144 = vpop.f32.mrf.mxu0
    %v2145 = vadd.f32 %v319, %v2144
    %v2146 = vpop.f32.mrf.mxu0
    %2147 = vdwg.mxu0
    %v2149 = vunpack.c.l.b16 %v1690
    %v2150 = vpack.c.b16 %v2149, %v2149
    %2151 = vrot.lane.b32.xlu0 %v2150, 112
    %v2152 = vpop.permute.xlu0 %2151
    %2153 = vrot.lane.b32.xlu0 %v1750, 80
    %v2154 = vpop.permute.xlu0 %2153
    %v2156 = vsel %vm335, %v2152, 0
    %v2159 = vsel %vm335, %v2154, 0
    %2161 = vmatpush.bf16.xpose.msra.mxu0 0
    %2162 = vmatpush.bf16.xpose.msra.mxu0 0
    %2163 = vmatpush.bf16.xpose.msra.mxu0 0
    %2164 = vmatpush.bf16.xpose.msra.mxu0 0
    %2165 = vmatpush.bf16.xpose.msra.mxu0 0
    %2166 = vmatpush.bf16.xpose.msra.mxu0 0
    %2167 = vmatpush.bf16.xpose.msra.mxu0 0
    %2168 = vmatpush.bf16.xpose.msra.mxu0 %v2159
    %2169 = vmatmul.bf16.gmra.mxu0 %v2156
    %v2170 = vpop.f32.mrf.mxu0
    %v2171 = vadd.f32 %v320, %v2170
    %v2172 = vpop.f32.mrf.mxu0
    %2173 = vdwg.mxu0
    %v2175 = vunpack.c.l.b16 %v1691
    %v2176 = vpack.c.b16 %v2175, %v2175
    %2177 = vrot.lane.b32.xlu0 %v2176, 112
    %v2178 = vpop.permute.xlu0 %2177
    %2179 = vrot.lane.b32.xlu0 %v1774, 80
    %v2180 = vpop.permute.xlu0 %2179
    %v2182 = vsel %vm335, %v2178, 0
    %v2185 = vsel %vm335, %v2180, 0
    %2187 = vmatpush.bf16.xpose.msra.mxu0 0
    %2188 = vmatpush.bf16.xpose.msra.mxu0 0
    %2189 = vmatpush.bf16.xpose.msra.mxu0 0
    %2190 = vmatpush.bf16.xpose.msra.mxu0 0
    %2191 = vmatpush.bf16.xpose.msra.mxu0 0
    %2192 = vmatpush.bf16.xpose.msra.mxu0 0
    %2193 = vmatpush.bf16.xpose.msra.mxu0 0
    %2194 = vmatpush.bf16.xpose.msra.mxu0 %v2185
    %2195 = vmatmul.bf16.gmra.mxu0 %v2182
    %v2196 = vpop.f32.mrf.mxu0
    %v2197 = vadd.f32 %v321, %v2196
    %v2198 = vpop.f32.mrf.mxu0
    %2199 = vdwg.mxu0
    %v2201 = vunpack.c.l.b16 %v1692
    %v2202 = vpack.c.b16 %v2201, %v2201
    %2203 = vrot.lane.b32.xlu0 %v2202, 112
    %v2204 = vpop.permute.xlu0 %2203
    %2205 = vrot.lane.b32.xlu0 %v1798, 80
    %v2206 = vpop.permute.xlu0 %2205
    %v2208 = vsel %vm335, %v2204, 0
    %v2211 = vsel %vm335, %v2206, 0
    %2213 = vmatpush.bf16.xpose.msra.mxu0 0
    %2214 = vmatpush.bf16.xpose.msra.mxu0 0
    %2215 = vmatpush.bf16.xpose.msra.mxu0 0
    %2216 = vmatpush.bf16.xpose.msra.mxu0 0
    %2217 = vmatpush.bf16.xpose.msra.mxu0 0
    %2218 = vmatpush.bf16.xpose.msra.mxu0 0
    %2219 = vmatpush.bf16.xpose.msra.mxu0 0
    %2220 = vmatpush.bf16.xpose.msra.mxu0 %v2211
    %2221 = vmatmul.bf16.gmra.mxu0 %v2208
    %v2222 = vpop.f32.mrf.mxu0
    %v2223 = vadd.f32 %v322, %v2222
    %v2224 = vpop.f32.mrf.mxu0
    %2225 = vdwg.mxu0
    %v2227 = vunpack.c.l.b16 %v1693
    %v2228 = vpack.c.b16 %v2227, %v2227
    %2229 = vrot.lane.b32.xlu0 %v2228, 112
    %v2230 = vpop.permute.xlu0 %2229
    %2231 = vrot.lane.b32.xlu0 %v1822, 80
    %v2232 = vpop.permute.xlu0 %2231
    %v2234 = vsel %vm335, %v2230, 0
    %v2237 = vsel %vm335, %v2232, 0
    %2239 = vmatpush.bf16.xpose.msra.mxu0 0
    %2240 = vmatpush.bf16.xpose.msra.mxu0 0
    %2241 = vmatpush.bf16.xpose.msra.mxu0 0
    %2242 = vmatpush.bf16.xpose.msra.mxu0 0
    %2243 = vmatpush.bf16.xpose.msra.mxu0 0
    %2244 = vmatpush.bf16.xpose.msra.mxu0 0
    %2245 = vmatpush.bf16.xpose.msra.mxu0 0
    %2246 = vmatpush.bf16.xpose.msra.mxu0 %v2237
    %2247 = vmatmul.bf16.gmra.mxu0 %v2234
    %v2248 = vpop.f32.mrf.mxu0
    %v2249 = vadd.f32 %v323, %v2248
    %v2250 = vpop.f32.mrf.mxu0
    %2251 = vdwg.mxu0
    %v2252 = vsel %vm475, %v2119, -inf
    %2253 = vmax.xlane.f32.xlu0 %v2252
    %v2254 = vpop.xlane.xlu0 %2253
    %v2255 = vsel %vm475, %v2145, -inf
    %2256 = vmax.xlane.f32.xlu0 %v2255
    %v2257 = vpop.xlane.xlu0 %2256
    %v2258 = vsel %vm475, %v2171, -inf
    %2259 = vmax.xlane.f32.xlu0 %v2258
    %v2260 = vpop.xlane.xlu0 %2259
    %v2261 = vsel %vm475, %v2197, -inf
    %2262 = vmax.xlane.f32.xlu0 %v2261
    %v2263 = vpop.xlane.xlu0 %2262
    %v2264 = vsel %vm475, %v2223, -inf
    %2265 = vmax.xlane.f32.xlu0 %v2264
    %v2266 = vpop.xlane.xlu0 %2265
    %v2267 = vsel %vm475, %v2249, -inf
    %2268 = vmax.xlane.f32.xlu0 %v2267
    %v2269 = vpop.xlane.xlu0 %2268
    %v2270 = vsub.f32 %v2119, %v2254
    %v2271 = vsub.f32 %v2145, %v2257
    %v2272 = vsub.f32 %v2171, %v2260
    %v2273 = vsub.f32 %v2197, %v2263
    %v2274 = vsub.f32 %v2223, %v2266
    %v2275 = vsub.f32 %v2249, %v2269
    %v2276 = vmul.f32 %v2270, 1.442695
    %v2277 = vpow.pop %v2276
    %v2278 = vmul.f32 %v2271, 1.442695
    %v2279 = vpow.pop %v2278
    %v2280 = vmul.f32 %v2272, 1.442695
    %v2281 = vpow.pop %v2280
    %v2282 = vmul.f32 %v2273, 1.442695
    %v2283 = vpow.pop %v2282
    %v2284 = vmul.f32 %v2274, 1.442695
    %v2285 = vpow.pop %v2284
    %v2286 = vmul.f32 %v2275, 1.442695
    %v2287 = vpow.pop %v2286
    %v2288 = vsel %vm475, %v2277, 0.0
    %2289 = vadd.xlane.f32.xlu0 %v2288
    %v2290 = vpop.xlane.xlu0 %2289
    %v2291 = vsel %vm475, %v2279, 0.0
    %2292 = vadd.xlane.f32.xlu0 %v2291
    %v2293 = vpop.xlane.xlu0 %2292
    %v2294 = vsel %vm475, %v2281, 0.0
    %2295 = vadd.xlane.f32.xlu0 %v2294
    %v2296 = vpop.xlane.xlu0 %2295
    %v2297 = vsel %vm475, %v2283, 0.0
    %2298 = vadd.xlane.f32.xlu0 %v2297
    %v2299 = vpop.xlane.xlu0 %2298
    %v2300 = vsel %vm475, %v2285, 0.0
    %2301 = vadd.xlane.f32.xlu0 %v2300
    %v2302 = vpop.xlane.xlu0 %2301
    %v2303 = vsel %vm475, %v2287, 0.0
    %2304 = vadd.xlane.f32.xlu0 %v2303
    %v2305 = vpop.xlane.xlu0 %2304
    %v2306 = vrcp.pop %v2290
    %v2307 = vrcp.pop %v2293
    %v2308 = vrcp.pop %v2296
    %v2309 = vrcp.pop %v2299
    %v2310 = vrcp.pop %v2302
    %v2311 = vrcp.pop %v2305
    %v2312 = vmul.f32 %v2277, %v2306
    %v2313 = vmul.f32 %v2279, %v2307
    %v2314 = vmul.f32 %v2281, %v2308
    %v2315 = vmul.f32 %v2283, %v2309
    %v2316 = vmul.f32 %v2285, %v2310
    %v2317 = vmul.f32 %v2287, %v2311
    %v2318 = vpack.c.bf16 %v2312, %v2312
    %v2319 = vpack.c.bf16 %v2313, %v2313
    %v2320 = vpack.c.bf16 %v2314, %v2314
    %v2321 = vpack.c.bf16 %v2315, %v2315
    %v2322 = vpack.c.bf16 %v2316, %v2316
    %v2323 = vpack.c.bf16 %v2317, %v2317
    %2324 = vrot.lane.b32.xlu0 %v1702, 48
    %v2325 = vpop.permute.xlu0 %2324
    %v2327 = vsel %vm475, %v2318, 0
    %v2330 = vsel %vm553, %v2325, 0
    %2332 = vmatpush.bf16.msra.mxu0 0
    %2333 = vmatpush.bf16.msra.mxu0 0
    %2334 = vmatpush.bf16.msra.mxu0 0
    %2335 = vmatpush.bf16.msra.mxu0 0
    %2336 = vmatpush.bf16.msra.mxu0 0
    %2337 = vmatpush.bf16.msra.mxu0 0
    %2338 = vmatpush.bf16.msra.mxu0 0
    %2339 = vmatpush.bf16.msra.mxu0 %v2330
    %2340 = vmatmul.bf16.gmra.mxu0 %v2327
    %v2341 = vpop.f32.mrf.mxu0
    %v2342 = vadd.f32 0.0, %v2341
    %v2343 = vpop.f32.mrf.mxu0
    %2344 = vdwg.mxu0
    %2345 = vrot.lane.b32.xlu0 %v1726, 48
    %v2346 = vpop.permute.xlu0 %2345
    %v2348 = vsel %vm475, %v2319, 0
    %v2351 = vsel %vm553, %v2346, 0
    %2353 = vmatpush.bf16.msra.mxu0 0
    %2354 = vmatpush.bf16.msra.mxu0 0
    %2355 = vmatpush.bf16.msra.mxu0 0
    %2356 = vmatpush.bf16.msra.mxu0 0
    %2357 = vmatpush.bf16.msra.mxu0 0
    %2358 = vmatpush.bf16.msra.mxu0 0
    %2359 = vmatpush.bf16.msra.mxu0 0
    %2360 = vmatpush.bf16.msra.mxu0 %v2351
    %2361 = vmatmul.bf16.gmra.mxu0 %v2348
    %v2362 = vpop.f32.mrf.mxu0
    %v2363 = vadd.f32 0.0, %v2362
    %v2364 = vpop.f32.mrf.mxu0
    %2365 = vdwg.mxu0
    %2366 = vrot.lane.b32.xlu0 %v1750, 48
    %v2367 = vpop.permute.xlu0 %2366
    %v2369 = vsel %vm475, %v2320, 0
    %v2372 = vsel %vm553, %v2367, 0
    %2374 = vmatpush.bf16.msra.mxu0 0
    %2375 = vmatpush.bf16.msra.mxu0 0
    %2376 = vmatpush.bf16.msra.mxu0 0
    %2377 = vmatpush.bf16.msra.mxu0 0
    %2378 = vmatpush.bf16.msra.mxu0 0
    %2379 = vmatpush.bf16.msra.mxu0 0
    %2380 = vmatpush.bf16.msra.mxu0 0
    %2381 = vmatpush.bf16.msra.mxu0 %v2372
    %2382 = vmatmul.bf16.gmra.mxu0 %v2369
    %v2383 = vpop.f32.mrf.mxu0
    %v2384 = vadd.f32 0.0, %v2383
    %v2385 = vpop.f32.mrf.mxu0
    %2386 = vdwg.mxu0
    %2387 = vrot.lane.b32.xlu0 %v1774, 48
    %v2388 = vpop.permute.xlu0 %2387
    %v2390 = vsel %vm475, %v2321, 0
    %v2393 = vsel %vm553, %v2388, 0
    %2395 = vmatpush.bf16.msra.mxu0 0
    %2396 = vmatpush.bf16.msra.mxu0 0
    %2397 = vmatpush.bf16.msra.mxu0 0
    %2398 = vmatpush.bf16.msra.mxu0 0
    %2399 = vmatpush.bf16.msra.mxu0 0
    %2400 = vmatpush.bf16.msra.mxu0 0
    %2401 = vmatpush.bf16.msra.mxu0 0
    %2402 = vmatpush.bf16.msra.mxu0 %v2393
    %2403 = vmatmul.bf16.gmra.mxu0 %v2390
    %v2404 = vpop.f32.mrf.mxu0
    %v2405 = vadd.f32 0.0, %v2404
    %v2406 = vpop.f32.mrf.mxu0
    %2407 = vdwg.mxu0
    %2408 = vrot.lane.b32.xlu0 %v1798, 48
    %v2409 = vpop.permute.xlu0 %2408
    %v2411 = vsel %vm475, %v2322, 0
    %v2414 = vsel %vm553, %v2409, 0
    %2416 = vmatpush.bf16.msra.mxu0 0
    %2417 = vmatpush.bf16.msra.mxu0 0
    %2418 = vmatpush.bf16.msra.mxu0 0
    %2419 = vmatpush.bf16.msra.mxu0 0
    %2420 = vmatpush.bf16.msra.mxu0 0
    %2421 = vmatpush.bf16.msra.mxu0 0
    %2422 = vmatpush.bf16.msra.mxu0 0
    %2423 = vmatpush.bf16.msra.mxu0 %v2414
    %2424 = vmatmul.bf16.gmra.mxu0 %v2411
    %v2425 = vpop.f32.mrf.mxu0
    %v2426 = vadd.f32 0.0, %v2425
    %v2427 = vpop.f32.mrf.mxu0
    %2428 = vdwg.mxu0
    %2429 = vrot.lane.b32.xlu0 %v1822, 48
    %v2430 = vpop.permute.xlu0 %2429
    %v2432 = vsel %vm475, %v2323, 0
    %v2435 = vsel %vm553, %v2430, 0
    %2437 = vmatpush.bf16.msra.mxu0 0
    %2438 = vmatpush.bf16.msra.mxu0 0
    %2439 = vmatpush.bf16.msra.mxu0 0
    %2440 = vmatpush.bf16.msra.mxu0 0
    %2441 = vmatpush.bf16.msra.mxu0 0
    %2442 = vmatpush.bf16.msra.mxu0 0
    %2443 = vmatpush.bf16.msra.mxu0 0
    %2444 = vmatpush.bf16.msra.mxu0 %v2435
    %2445 = vmatmul.bf16.gmra.mxu0 %v2432
    %v2446 = vpop.f32.mrf.mxu0
    %v2447 = vadd.f32 0.0, %v2446
    %v2448 = vpop.f32.mrf.mxu0
    %2449 = vdwg.mxu0
    %v2450 = vpack.c.bf16 %v2363, %v2342
    %v2451 = vpack.c.bf16 %v2405, %v2384
    %v2452 = vpack.c.bf16 %v2447, %v2426
    %s2453 = scalar_lea.vmem %s6, 24
    %v2454 = vld [vmem:[%s2453] sm:$0xf]
    %v2455 = vld [vmem:[%s2453 + $0x4] sm:$0xf]
    %v2458 = vunpack.c.l.b16 %v2454
    %v2459 = vunpack.c.l.b16 %v2455
    %v2460 = vpack.c.b16 %v2459, %v2458
    %v2463 = vsel %vm335, %v2450, 0
    %v2466 = vsel %vm335, %v2451, 0
    %v2469 = vsel %vm335, %v2452, 0
    %2471 = vmatpush.bf16.msra.mxu0 0
    %2472 = vmatpush.bf16.msra.mxu0 0
    %2473 = vmatpush.bf16.msra.mxu0 0
    %2474 = vmatpush.bf16.msra.mxu0 0
    %2475 = vmatpush.bf16.msra.mxu0 0
    %2476 = vmatpush.bf16.msra.mxu0 0
    %2477 = vmatpush.bf16.msra.mxu0 0
    %2478 = vmatpush.bf16.msra.mxu0 %v2460
    %2479 = vmatmul.bf16.gmra.mxu0 %v2463
    %v2480 = vpop.f32.mrf.mxu0
    %v2481 = vadd.f32 0.0, %v2480
    %v2482 = vpop.f32.mrf.mxu0
    %v2483 = vadd.f32 0.0, %v2482
    %2484 = vmatmul.bf16.gmra.mxu0 %v2466
    %v2485 = vpop.f32.mrf.mxu0
    %v2486 = vadd.f32 0.0, %v2485
    %v2487 = vpop.f32.mrf.mxu0
    %v2488 = vadd.f32 0.0, %v2487
    %2489 = vmatmul.bf16.gmra.mxu0 %v2469
    %v2490 = vpop.f32.mrf.mxu0
    %v2491 = vadd.f32 0.0, %v2490
    %v2492 = vpop.f32.mrf.mxu0
    %v2493 = vadd.f32 0.0, %v2492
    %2494 = vdwg.mxu0
    %v2495 = vadd.f32 %v2090, %v2481
    %v2496 = vadd.f32 %v2091, %v2483
    %v2497 = vadd.f32 %v2092, %v2486
    %v2498 = vadd.f32 %v2093, %v2488
    %v2499 = vadd.f32 %v2094, %v2491
    %v2500 = vadd.f32 %v2095, %v2493
    %v2501 = vadd.f32 %v2495, %v1616
    %v2502 = vadd.f32 %v2496, %v1617
    %v2503 = vadd.f32 %v2497, %v1618
    %v2504 = vadd.f32 %v2498, %v1619
    %v2505 = vadd.f32 %v2499, %v1620
    %v2506 = vadd.f32 %v2500, %v1621
    %s2507 = scalar_lea.vmem %s8, 2
    %v2508 = vld [vmem:[%s2507] sm:$0x3]
    %v2509 = vsel %vm77, %v2501, 0.0
    %2510 = vadd.xlane.f32.xlu0 %v2509
    %v2511 = vpop.xlane.xlu0 %2510
    %v2512 = vsel %vm77, %v2502, 0.0
    %2513 = vadd.xlane.f32.xlu0 %v2512
    %v2514 = vpop.xlane.xlu0 %2513
    %v2515 = vsel %vm77, %v2503, 0.0
    %2516 = vadd.xlane.f32.xlu0 %v2515
    %v2517 = vpop.xlane.xlu0 %2516
    %v2518 = vsel %vm77, %v2504, 0.0
    %2519 = vadd.xlane.f32.xlu0 %v2518
    %v2520 = vpop.xlane.xlu0 %2519
    %v2521 = vsel %vm77, %v2505, 0.0
    %2522 = vadd.xlane.f32.xlu0 %v2521
    %v2523 = vpop.xlane.xlu0 %2522
    %v2524 = vsel %vm77, %v2506, 0.0
    %2525 = vadd.xlane.f32.xlu0 %v2524
    %v2526 = vpop.xlane.xlu0 %2525
    %v2527 = vmul.f32 %v2511, %v102
    %v2528 = vmul.f32 %v2514, %v102
    %v2529 = vmul.f32 %v2517, %v102
    %v2530 = vmul.f32 %v2520, %v102
    %v2531 = vmul.f32 %v2523, %v102
    %v2532 = vmul.f32 %v2526, %v102
    %v2533 = vsub.f32 %v2501, %v2527
    %v2534 = vsub.f32 %v2502, %v2528
    %v2535 = vsub.f32 %v2503, %v2529
    %v2536 = vsub.f32 %v2504, %v2530
    %v2537 = vsub.f32 %v2505, %v2531
    %v2538 = vsub.f32 %v2506, %v2532
    %v2539 = vmul.f32 %v2533, %v2533
    %v2540 = vmul.f32 %v2534, %v2534
    %v2541 = vmul.f32 %v2535, %v2535
    %v2542 = vmul.f32 %v2536, %v2536
    %v2543 = vmul.f32 %v2537, %v2537
    %v2544 = vmul.f32 %v2538, %v2538
    %v2545 = vsel %vm77, %v2539, 0.0
    %2546 = vadd.xlane.f32.xlu0 %v2545
    %v2547 = vpop.xlane.xlu0 %2546
    %v2548 = vsel %vm77, %v2540, 0.0
    %2549 = vadd.xlane.f32.xlu0 %v2548
    %v2550 = vpop.xlane.xlu0 %2549
    %v2551 = vsel %vm77, %v2541, 0.0
    %2552 = vadd.xlane.f32.xlu0 %v2551
    %v2553 = vpop.xlane.xlu0 %2552
    %v2554 = vsel %vm77, %v2542, 0.0
    %2555 = vadd.xlane.f32.xlu0 %v2554
    %v2556 = vpop.xlane.xlu0 %2555
    %v2557 = vsel %vm77, %v2543, 0.0
    %2558 = vadd.xlane.f32.xlu0 %v2557
    %v2559 = vpop.xlane.xlu0 %2558
    %v2560 = vsel %vm77, %v2544, 0.0
    %2561 = vadd.xlane.f32.xlu0 %v2560
    %v2562 = vpop.xlane.xlu0 %2561
    %v2563 = vmul.f32 %v2547, %v102
    %v2564 = vmul.f32 %v2550, %v102
    %v2565 = vmul.f32 %v2553, %v102
    %v2566 = vmul.f32 %v2556, %v102
    %v2567 = vmul.f32 %v2559, %v102
    %v2568 = vmul.f32 %v2562, %v102
    %v2569 = vadd.f32 %v2563, 1e-05
    %v2570 = vadd.f32 %v2564, 1e-05
    %v2571 = vadd.f32 %v2565, 1e-05
    %v2572 = vadd.f32 %v2566, 1e-05
    %v2573 = vadd.f32 %v2567, 1e-05
    %v2574 = vadd.f32 %v2568, 1e-05
    %v2575 = vrsqrt.pop %v2569
    %v2576 = vmul.f32 %v2575, %v2569
    %v2577 = vmul.f32 %v2576, %v2575
    %v2578 = vmul.f32 0.5, %v2577
    %v2579 = vsub.f32 1.5, %v2578
    %v2580 = vmul.f32 %v2575, %v2579
    %vm2581 = vweird.f32 %v2569
    %vm2582 = vweird.f32 %v2575
    %vm2583 = vmor %vm2581, %vm2582
    %v2584 = vsel %vm2583, %v2575, %v2580
    %v2585 = vrsqrt.pop %v2570
    %v2586 = vmul.f32 %v2585, %v2570
    %v2587 = vmul.f32 %v2586, %v2585
    %v2588 = vmul.f32 0.5, %v2587
    %v2589 = vsub.f32 1.5, %v2588
    %v2590 = vmul.f32 %v2585, %v2589
    %vm2591 = vweird.f32 %v2570
    %vm2592 = vweird.f32 %v2585
    %vm2593 = vmor %vm2591, %vm2592
    %v2594 = vsel %vm2593, %v2585, %v2590
    %v2595 = vrsqrt.pop %v2571
    %v2596 = vmul.f32 %v2595, %v2571
    %v2597 = vmul.f32 %v2596, %v2595
    %v2598 = vmul.f32 0.5, %v2597
    %v2599 = vsub.f32 1.5, %v2598
    %v2600 = vmul.f32 %v2595, %v2599
    %vm2601 = vweird.f32 %v2571
    %vm2602 = vweird.f32 %v2595
    %vm2603 = vmor %vm2601, %vm2602
    %v2604 = vsel %vm2603, %v2595, %v2600
    %v2605 = vrsqrt.pop %v2572
    %v2606 = vmul.f32 %v2605, %v2572
    %v2607 = vmul.f32 %v2606, %v2605
    %v2608 = vmul.f32 0.5, %v2607
    %v2609 = vsub.f32 1.5, %v2608
    %v2610 = vmul.f32 %v2605, %v2609
    %vm2611 = vweird.f32 %v2572
    %vm2612 = vweird.f32 %v2605
    %vm2613 = vmor %vm2611, %vm2612
    %v2614 = vsel %vm2613, %v2605, %v2610
    %v2615 = vrsqrt.pop %v2573
    %v2616 = vmul.f32 %v2615, %v2573
    %v2617 = vmul.f32 %v2616, %v2615
    %v2618 = vmul.f32 0.5, %v2617
    %v2619 = vsub.f32 1.5, %v2618
    %v2620 = vmul.f32 %v2615, %v2619
    %vm2621 = vweird.f32 %v2573
    %vm2622 = vweird.f32 %v2615
    %vm2623 = vmor %vm2621, %vm2622
    %v2624 = vsel %vm2623, %v2615, %v2620
    %v2625 = vrsqrt.pop %v2574
    %v2626 = vmul.f32 %v2625, %v2574
    %v2627 = vmul.f32 %v2626, %v2625
    %v2628 = vmul.f32 0.5, %v2627
    %v2629 = vsub.f32 1.5, %v2628
    %v2630 = vmul.f32 %v2625, %v2629
    %vm2631 = vweird.f32 %v2574
    %vm2632 = vweird.f32 %v2625
    %vm2633 = vmor %vm2631, %vm2632
    %v2634 = vsel %vm2633, %v2625, %v2630
    %v2635 = vmul.f32 %v2533, %v2584
    %v2636 = vmul.f32 %v2534, %v2594
    %v2637 = vmul.f32 %v2535, %v2604
    %v2638 = vmul.f32 %v2536, %v2614
    %v2639 = vmul.f32 %v2537, %v2624
    %v2640 = vmul.f32 %v2538, %v2634
    %v2641 = vperm.slane %v2508, 0
    %v2642 = vmul.f32 %v2635, %v2641
    %v2643 = vmul.f32 %v2636, %v2641
    %v2644 = vmul.f32 %v2637, %v2641
    %v2645 = vmul.f32 %v2638, %v2641
    %v2646 = vmul.f32 %v2639, %v2641
    %v2647 = vmul.f32 %v2640, %v2641
    %v2648 = vperm.slane %v2508, 1
    %v2649 = vadd.f32 %v2642, %v2648
    %v2650 = vadd.f32 %v2643, %v2648
    %v2651 = vadd.f32 %v2644, %v2648
    %v2652 = vadd.f32 %v2645, %v2648
    %v2653 = vadd.f32 %v2646, %v2648
    %v2654 = vadd.f32 %v2647, %v2648
    %s2655 = scalar_lea.vmem %s9, 16
    %v2656 = vld [vmem:[%s2655] sm:$0xf]
    %v2657 = vld [vmem:[%s2655 + $0x4] sm:$0xf]
    %v2658 = vld [vmem:[%s2655 + $0x8] sm:$0xf]
    %v2659 = vld [vmem:[%s2655 + $0xc] sm:$0xf]
    %s2660 = scalar_lea.vmem %s10, 1
    %v2661 = vld [vmem:[%s2660] sm:$0x1]
    %v2662 = vpack.c.bf16 %v2650, %v2649
    %v2663 = vpack.c.bf16 %v2652, %v2651
    %v2664 = vpack.c.bf16 %v2654, %v2653
    %v2666 = vperm.slane %v2661, 0
    %v2672 = vunpack.c.l.b16 %v2656
    %v2673 = vunpack.c.l.b16 %v2657
    %v2674 = vunpack.c.l.b16 %v2658
    %v2675 = vunpack.c.l.b16 %v2659
    %v2676 = vpack.c.b16 %v2673, %v2672
    %v2677 = vpack.c.b16 %v2675, %v2674
    %v2681 = vsel %vm77, %v2662, 0
    %v2684 = vsel %vm77, %v2663, 0
    %v2687 = vsel %vm77, %v2664, 0
    %2689 = vmatpush.bf16.msra.mxu0 0
    %2690 = vmatpush.bf16.msra.mxu0 0
    %2691 = vmatpush.bf16.msra.mxu0 0
    %2692 = vmatpush.bf16.msra.mxu0 0
    %2693 = vmatpush.bf16.msra.mxu0 0
    %2694 = vmatpush.bf16.msra.mxu0 0
    %2695 = vmatpush.bf16.msra.mxu0 %v2677
    %2696 = vmatpush.bf16.msra.mxu0 %v2676
    %2697 = vmatmul.bf16.gmra.mxu0 %v2681
    %v2698 = vpop.f32.mrf.mxu0
    %v2699 = vadd.f32 %v2666, %v2698
    %v2700 = vpop.f32.mrf.mxu0
    %v2701 = vadd.f32 %v2666, %v2700
    %2702 = vmatmul.bf16.gmra.mxu0 %v2684
    %v2703 = vpop.f32.mrf.mxu0
    %v2704 = vadd.f32 %v2666, %v2703
    %v2705 = vpop.f32.mrf.mxu0
    %v2706 = vadd.f32 %v2666, %v2705
    %2707 = vmatmul.bf16.gmra.mxu0 %v2687
    %v2708 = vpop.f32.mrf.mxu0
    %v2709 = vadd.f32 %v2666, %v2708
    %v2710 = vpop.f32.mrf.mxu0
    %v2711 = vadd.f32 %v2666, %v2710
    %2712 = vdwg.mxu0
    %v2713 = vmul.f32 %v2699, %v2699
    %v2714 = vmul.f32 %v2701, %v2701
    %v2715 = vmul.f32 %v2704, %v2704
    %v2716 = vmul.f32 %v2706, %v2706
    %v2717 = vmul.f32 %v2709, %v2709
    %v2718 = vmul.f32 %v2711, %v2711
    %v2719 = vmul.f32 %v2699, %v2713
    %v2720 = vmul.f32 %v2701, %v2714
    %v2721 = vmul.f32 %v2704, %v2715
    %v2722 = vmul.f32 %v2706, %v2716
    %v2723 = vmul.f32 %v2709, %v2717
    %v2724 = vmul.f32 %v2711, %v2718
    %v2725 = vmul.f32 %v2719, 0.044715
    %v2726 = vmul.f32 %v2720, 0.044715
    %v2727 = vmul.f32 %v2721, 0.044715
    %v2728 = vmul.f32 %v2722, 0.044715
    %v2729 = vmul.f32 %v2723, 0.044715
    %v2730 = vmul.f32 %v2724, 0.044715
    %v2731 = vadd.f32 %v2699, %v2725
    %v2732 = vadd.f32 %v2701, %v2726
    %v2733 = vadd.f32 %v2704, %v2727
    %v2734 = vadd.f32 %v2706, %v2728
    %v2735 = vadd.f32 %v2709, %v2729
    %v2736 = vadd.f32 %v2711, %v2730
    %v2737 = vmul.f32 %v2731, 0.7978846
    %v2738 = vmul.f32 %v2732, 0.7978846
    %v2739 = vmul.f32 %v2733, 0.7978846
    %v2740 = vmul.f32 %v2734, 0.7978846
    %v2741 = vmul.f32 %v2735, 0.7978846
    %v2742 = vmul.f32 %v2736, 0.7978846
    %v2743 = vtanh.pop %v2737
    %v2744 = vtanh.pop %v2738
    %v2745 = vtanh.pop %v2739
    %v2746 = vtanh.pop %v2740
    %v2747 = vtanh.pop %v2741
    %v2748 = vtanh.pop %v2742
    %v2749 = vadd.f32 %v2743, 1.0
    %v2750 = vadd.f32 %v2744, 1.0
    %v2751 = vadd.f32 %v2745, 1.0
    %v2752 = vadd.f32 %v2746, 1.0
    %v2753 = vadd.f32 %v2747, 1.0
    %v2754 = vadd.f32 %v2748, 1.0
    %v2755 = vmul.f32 %v2749, 0.5
    %v2756 = vmul.f32 %v2750, 0.5
    %v2757 = vmul.f32 %v2751, 0.5
    %v2758 = vmul.f32 %v2752, 0.5
    %v2759 = vmul.f32 %v2753, 0.5
    %v2760 = vmul.f32 %v2754, 0.5
    %v2761 = vmul.f32 %v2699, %v2755
    %v2762 = vmul.f32 %v2701, %v2756
    %v2763 = vmul.f32 %v2704, %v2757
    %v2764 = vmul.f32 %v2706, %v2758
    %v2765 = vmul.f32 %v2709, %v2759
    %v2766 = vmul.f32 %v2711, %v2760
    %s2767 = scalar_lea.vmem %s11, 32
    %v2768 = vld [vmem:[%s2767] sm:$0xf]
    %v2769 = vld [vmem:[%s2767 + $0x4] sm:$0xf]
    %v2770 = vld [vmem:[%s2767 + $0x8] sm:$0xf]
    %v2771 = vld [vmem:[%s2767 + $0xc] sm:$0xf]
    %v2772 = vld [vmem:[%s2767 + $0x10] sm:$0xf]
    %v2773 = vld [vmem:[%s2767 + $0x14] sm:$0xf]
    %v2774 = vld [vmem:[%s2767 + $0x18] sm:$0xf]
    %v2775 = vld [vmem:[%s2767 + $0x1c] sm:$0xf]
    %s2776 = scalar_lea.vmem %s12, 1
    %v2777 = vld [vmem:[%s2776] sm:$0x1]
    %v2778 = vpack.c.bf16 %v2762, %v2761
    %v2779 = vpack.c.bf16 %v2764, %v2763
    %v2780 = vpack.c.bf16 %v2766, %v2765
    %v2782 = vperm.slane %v2777, 0
    %v2792 = vunpack.c.l.b16 %v2768
    %v2793 = vunpack.c.l.b16 %v2769
    %v2794 = vunpack.c.l.b16 %v2770
    %v2795 = vunpack.c.l.b16 %v2771
    %v2796 = vunpack.c.l.b16 %v2772
    %v2797 = vunpack.c.l.b16 %v2773
    %v2798 = vunpack.c.l.b16 %v2774
    %v2799 = vunpack.c.l.b16 %v2775
    %v2800 = vpack.c.b16 %v2793, %v2792
    %v2801 = vpack.c.b16 %v2795, %v2794
    %v2802 = vpack.c.b16 %v2797, %v2796
    %v2803 = vpack.c.b16 %v2799, %v2798
    %v2809 = vsel %vm1435, %v2778, 0
    %v2812 = vsel %vm1435, %v2779, 0
    %v2815 = vsel %vm1435, %v2780, 0
    %2817 = vmatpush.bf16.msra.mxu0 0
    %2818 = vmatpush.bf16.msra.mxu0 0
    %2819 = vmatpush.bf16.msra.mxu0 0
    %2820 = vmatpush.bf16.msra.mxu0 0
    %2821 = vmatpush.bf16.msra.mxu0 %v2803
    %2822 = vmatpush.bf16.msra.mxu0 %v2802
    %2823 = vmatpush.bf16.msra.mxu0 %v2801
    %2824 = vmatpush.bf16.msra.mxu0 %v2800
    %2825 = vmatmul.bf16.gmra.mxu0 %v2809
    %v2826 = vpop.f32.mrf.mxu0
    %v2827 = vadd.f32 %v2782, %v2826
    %v2828 = vpop.f32.mrf.mxu0
    %v2829 = vadd.f32 %v2782, %v2828
    %2830 = vmatmul.bf16.gmra.mxu0 %v2812
    %v2831 = vpop.f32.mrf.mxu0
    %v2832 = vadd.f32 %v2782, %v2831
    %v2833 = vpop.f32.mrf.mxu0
    %v2834 = vadd.f32 %v2782, %v2833
    %2835 = vmatmul.bf16.gmra.mxu0 %v2815
    %v2836 = vpop.f32.mrf.mxu0
    %v2837 = vadd.f32 %v2782, %v2836
    %v2838 = vpop.f32.mrf.mxu0
    %v2839 = vadd.f32 %v2782, %v2838
    %2840 = vdwg.mxu0
    %v2841 = vadd.f32 %v2827, %v2649
    %v2842 = vadd.f32 %v2829, %v2650
    %v2843 = vadd.f32 %v2832, %v2651
    %v2844 = vadd.f32 %v2834, %v2652
    %v2845 = vadd.f32 %v2837, %v2653
    %v2846 = vadd.f32 %v2839, %v2654
    %s2847 = scalar_lea.vmem %s13, 2
    %v2848 = vld [vmem:[%s2847] sm:$0x3]
    %v2849 = vsel %vm77, %v2841, 0.0
    %2850 = vadd.xlane.f32.xlu0 %v2849
    %v2851 = vpop.xlane.xlu0 %2850
    %v2852 = vsel %vm77, %v2842, 0.0
    %2853 = vadd.xlane.f32.xlu0 %v2852
    %v2854 = vpop.xlane.xlu0 %2853
    %v2855 = vsel %vm77, %v2843, 0.0
    %2856 = vadd.xlane.f32.xlu0 %v2855
    %v2857 = vpop.xlane.xlu0 %2856
    %v2858 = vsel %vm77, %v2844, 0.0
    %2859 = vadd.xlane.f32.xlu0 %v2858
    %v2860 = vpop.xlane.xlu0 %2859
    %v2861 = vsel %vm77, %v2845, 0.0
    %2862 = vadd.xlane.f32.xlu0 %v2861
    %v2863 = vpop.xlane.xlu0 %2862
    %v2864 = vsel %vm77, %v2846, 0.0
    %2865 = vadd.xlane.f32.xlu0 %v2864
    %v2866 = vpop.xlane.xlu0 %2865
    %v2867 = vmul.f32 %v2851, %v102
    %v2868 = vmul.f32 %v2854, %v102
    %v2869 = vmul.f32 %v2857, %v102
    %v2870 = vmul.f32 %v2860, %v102
    %v2871 = vmul.f32 %v2863, %v102
    %v2872 = vmul.f32 %v2866, %v102
    %v2873 = vsub.f32 %v2841, %v2867
    %v2874 = vsub.f32 %v2842, %v2868
    %v2875 = vsub.f32 %v2843, %v2869
    %v2876 = vsub.f32 %v2844, %v2870
    %v2877 = vsub.f32 %v2845, %v2871
    %v2878 = vsub.f32 %v2846, %v2872
    %v2879 = vmul.f32 %v2873, %v2873
    %v2880 = vmul.f32 %v2874, %v2874
    %v2881 = vmul.f32 %v2875, %v2875
    %v2882 = vmul.f32 %v2876, %v2876
    %v2883 = vmul.f32 %v2877, %v2877
    %v2884 = vmul.f32 %v2878, %v2878
    %v2885 = vsel %vm77, %v2879, 0.0
    %2886 = vadd.xlane.f32.xlu0 %v2885
    %v2887 = vpop.xlane.xlu0 %2886
    %v2888 = vsel %vm77, %v2880, 0.0
    %2889 = vadd.xlane.f32.xlu0 %v2888
    %v2890 = vpop.xlane.xlu0 %2889
    %v2891 = vsel %vm77, %v2881, 0.0
    %2892 = vadd.xlane.f32.xlu0 %v2891
    %v2893 = vpop.xlane.xlu0 %2892
    %v2894 = vsel %vm77, %v2882, 0.0
    %2895 = vadd.xlane.f32.xlu0 %v2894
    %v2896 = vpop.xlane.xlu0 %2895
    %v2897 = vsel %vm77, %v2883, 0.0
    %2898 = vadd.xlane.f32.xlu0 %v2897
    %v2899 = vpop.xlane.xlu0 %2898
    %v2900 = vsel %vm77, %v2884, 0.0
    %2901 = vadd.xlane.f32.xlu0 %v2900
    %v2902 = vpop.xlane.xlu0 %2901
    %v2903 = vmul.f32 %v2887, %v102
    %v2904 = vmul.f32 %v2890, %v102
    %v2905 = vmul.f32 %v2893, %v102
    %v2906 = vmul.f32 %v2896, %v102
    %v2907 = vmul.f32 %v2899, %v102
    %v2908 = vmul.f32 %v2902, %v102
    %v2909 = vadd.f32 %v2903, 1e-05
    %v2910 = vadd.f32 %v2904, 1e-05
    %v2911 = vadd.f32 %v2905, 1e-05
    %v2912 = vadd.f32 %v2906, 1e-05
    %v2913 = vadd.f32 %v2907, 1e-05
    %v2914 = vadd.f32 %v2908, 1e-05
    %v2915 = vrsqrt.pop %v2909
    %v2916 = vmul.f32 %v2915, %v2909
    %v2917 = vmul.f32 %v2916, %v2915
    %v2918 = vmul.f32 0.5, %v2917
    %v2919 = vsub.f32 1.5, %v2918
    %v2920 = vmul.f32 %v2915, %v2919
    %vm2921 = vweird.f32 %v2909
    %vm2922 = vweird.f32 %v2915
    %vm2923 = vmor %vm2921, %vm2922
    %v2924 = vsel %vm2923, %v2915, %v2920
    %v2925 = vrsqrt.pop %v2910
    %v2926 = vmul.f32 %v2925, %v2910
    %v2927 = vmul.f32 %v2926, %v2925
    %v2928 = vmul.f32 0.5, %v2927
    %v2929 = vsub.f32 1.5, %v2928
    %v2930 = vmul.f32 %v2925, %v2929
    %vm2931 = vweird.f32 %v2910
    %vm2932 = vweird.f32 %v2925
    %vm2933 = vmor %vm2931, %vm2932
    %v2934 = vsel %vm2933, %v2925, %v2930
    %v2935 = vrsqrt.pop %v2911
    %v2936 = vmul.f32 %v2935, %v2911
    %v2937 = vmul.f32 %v2936, %v2935
    %v2938 = vmul.f32 0.5, %v2937
    %v2939 = vsub.f32 1.5, %v2938
    %v2940 = vmul.f32 %v2935, %v2939
    %vm2941 = vweird.f32 %v2911
    %vm2942 = vweird.f32 %v2935
    %vm2943 = vmor %vm2941, %vm2942
    %v2944 = vsel %vm2943, %v2935, %v2940
    %v2945 = vrsqrt.pop %v2912
    %v2946 = vmul.f32 %v2945, %v2912
    %v2947 = vmul.f32 %v2946, %v2945
    %v2948 = vmul.f32 0.5, %v2947
    %v2949 = vsub.f32 1.5, %v2948
    %v2950 = vmul.f32 %v2945, %v2949
    %vm2951 = vweird.f32 %v2912
    %vm2952 = vweird.f32 %v2945
    %vm2953 = vmor %vm2951, %vm2952
    %v2954 = vsel %vm2953, %v2945, %v2950
    %v2955 = vrsqrt.pop %v2913
    %v2956 = vmul.f32 %v2955, %v2913
    %v2957 = vmul.f32 %v2956, %v2955
    %v2958 = vmul.f32 0.5, %v2957
    %v2959 = vsub.f32 1.5, %v2958
    %v2960 = vmul.f32 %v2955, %v2959
    %vm2961 = vweird.f32 %v2913
    %vm2962 = vweird.f32 %v2955
    %vm2963 = vmor %vm2961, %vm2962
    %v2964 = vsel %vm2963, %v2955, %v2960
    %v2965 = vrsqrt.pop %v2914
    %v2966 = vmul.f32 %v2965, %v2914
    %v2967 = vmul.f32 %v2966, %v2965
    %v2968 = vmul.f32 0.5, %v2967
    %v2969 = vsub.f32 1.5, %v2968
    %v2970 = vmul.f32 %v2965, %v2969
    %vm2971 = vweird.f32 %v2914
    %vm2972 = vweird.f32 %v2965
    %vm2973 = vmor %vm2971, %vm2972
    %v2974 = vsel %vm2973, %v2965, %v2970
    %v2975 = vmul.f32 %v2873, %v2924
    %v2976 = vmul.f32 %v2874, %v2934
    %v2977 = vmul.f32 %v2875, %v2944
    %v2978 = vmul.f32 %v2876, %v2954
    %v2979 = vmul.f32 %v2877, %v2964
    %v2980 = vmul.f32 %v2878, %v2974
    %v2981 = vperm.slane %v2848, 0
    %v2982 = vmul.f32 %v2975, %v2981
    %v2983 = vmul.f32 %v2976, %v2981
    %v2984 = vmul.f32 %v2977, %v2981
    %v2985 = vmul.f32 %v2978, %v2981
    %v2986 = vmul.f32 %v2979, %v2981
    %v2987 = vmul.f32 %v2980, %v2981
    %v2988 = vperm.slane %v2848, 1
    %v2989 = vadd.f32 %v2982, %v2988
    %v2990 = vadd.f32 %v2983, %v2988
    %v2991 = vadd.f32 %v2984, %v2988
    %v2992 = vadd.f32 %v2985, %v2988
    %v2993 = vadd.f32 %v2986, %v2988
    %v2994 = vadd.f32 %v2987, %v2988
    %v2995 = vsel %vm77, %v2989, -inf
    %v2996 = vrot.slane %v2995, 4
    %v2997 = vmax.f32 %v2995, %v2996
    %v2998 = vrot.slane %v2997, 2
    %v2999 = vmax.f32 %v2997, %v2998
    %v3000 = vrot.slane %v2999, 1
    %v3001 = vmax.f32 %v2999, %v3000
    %v3002 = vsel %vm77, %v2990, -inf
    %v3003 = vrot.slane %v3002, 4
    %v3004 = vmax.f32 %v3002, %v3003
    %v3005 = vrot.slane %v3004, 2
    %v3006 = vmax.f32 %v3004, %v3005
    %v3007 = vrot.slane %v3006, 1
    %v3008 = vmax.f32 %v3006, %v3007
    %v3009 = vsel %vm77, %v2991, -inf
    %v3010 = vrot.slane %v3009, 4
    %v3011 = vmax.f32 %v3009, %v3010
    %v3012 = vrot.slane %v3011, 2
    %v3013 = vmax.f32 %v3011, %v3012
    %v3014 = vrot.slane %v3013, 1
    %v3015 = vmax.f32 %v3013, %v3014
    %v3016 = vsel %vm77, %v2992, -inf
    %v3017 = vrot.slane %v3016, 4
    %v3018 = vmax.f32 %v3016, %v3017
    %v3019 = vrot.slane %v3018, 2
    %v3020 = vmax.f32 %v3018, %v3019
    %v3021 = vrot.slane %v3020, 1
    %v3022 = vmax.f32 %v3020, %v3021
    %v3023 = vsel %vm77, %v2993, -inf
    %v3024 = vrot.slane %v3023, 4
    %v3025 = vmax.f32 %v3023, %v3024
    %v3026 = vrot.slane %v3025, 2
    %v3027 = vmax.f32 %v3025, %v3026
    %v3028 = vrot.slane %v3027, 1
    %v3029 = vmax.f32 %v3027, %v3028
    %v3030 = vsel %vm77, %v2994, -inf
    %v3031 = vrot.slane %v3030, 4
    %v3032 = vmax.f32 %v3030, %v3031
    %v3033 = vrot.slane %v3032, 2
    %v3034 = vmax.f32 %v3032, %v3033
    %v3035 = vrot.slane %v3034, 1
    %v3036 = vmax.f32 %v3034, %v3035
    %v3037 = vld [vmem:[%s14] sm:$0xf]
    %v3038 = vld [vmem:[%s14 + $0x4] sm:$0xf]
    %v3039 = vld [vmem:[%s14 + $0x8] sm:$0xf]
    %v3040 = vld [vmem:[%s14 + $0xc] sm:$0xf]
    %v3041 = vld [vmem:[%s15] sm:$0x1]
    %v3042 = vpack.c.bf16 %v3001, %v3001
    %v3043 = vpack.c.bf16 %v3008, %v3008
    %v3044 = vpack.c.bf16 %v3015, %v3015
    %v3045 = vpack.c.bf16 %v3022, %v3022
    %v3046 = vpack.c.bf16 %v3029, %v3029
    %v3047 = vpack.c.bf16 %v3036, %v3036
    %v3049 = vperm.slane %v3041, 0
    %v3057 = vunpack.c.l.b16 %v3042
    %v3058 = vunpack.c.l.b16 %v3043
    %v3059 = vunpack.c.l.b16 %v3044
    %v3060 = vunpack.c.l.b16 %v3045
    %v3061 = vunpack.c.l.b16 %v3046
    %v3062 = vunpack.c.l.b16 %v3047
    %vm3063 = vcmask 1041409
    %v3064 = vsel %vm3063, %v3058, %v3057
    %vm3065 = vcmask 1042434
    %v3066 = vsel %vm3065, %v3059, %v3064
    %vm3067 = vcmask 1043459
    %v3068 = vsel %vm3067, %v3060, %v3066
    %vm3069 = vcmask 1044484
    %v3070 = vsel %vm3069, %v3061, %v3068
    %vm3071 = vcmask 1045509
    %v3072 = vsel %vm3071, %v3062, %v3070
    %v3073 = vpack.c.b16 %v3072, %v3072
    %v3078 = vunpack.c.l.b16 %v3037
    %v3079 = vunpack.c.l.b16 %v3038
    %v3080 = vunpack.c.l.b16 %v3039
    %v3081 = vunpack.c.l.b16 %v3040
    %v3082 = vpack.c.b16 %v3079, %v3078
    %v3083 = vpack.c.b16 %v3081, %v3080
    %v3087 = vsel %vm77, %v3073, 0
    %3089 = vmatpush.bf16.msra.mxu0 0
    %3090 = vmatpush.bf16.msra.mxu0 0
    %3091 = vmatpush.bf16.msra.mxu0 0
    %3092 = vmatpush.bf16.msra.mxu0 0
    %3093 = vmatpush.bf16.msra.mxu0 0
    %3094 = vmatpush.bf16.msra.mxu0 0
    %3095 = vmatpush.bf16.msra.mxu0 %v3083
    %3096 = vmatpush.bf16.msra.mxu0 %v3082
    %3097 = vmatmul.bf16.gmra.mxu0 %v3087
    %v3098 = vpop.f32.mrf.mxu0
    %v3099 = vadd.f32 %v3049, %v3098
    %v3100 = vpop.f32.mrf.mxu0
    %3101 = vdwg.mxu0
    %v3102 = vpack.c.bf16 %v3099, %v3099
    %v3103 = vld [vmem:[%s16] sm:$0xf]
    %v3104 = vld [vmem:[%s16 + $0x4] sm:$0xf]
    %v3105 = vld [vmem:[%s18] sm:$0x1]
    %v3107 = vperm.slane %v3105, 0
    %v3111 = vunpack.c.l.b16 %v3103
    %v3112 = vunpack.c.l.b16 %v3104
    %v3113 = vpack.c.b16 %v3112, %v3111
    %v3116 = vsel %vm335, %v3102, 0
    %3118 = vmatpush.bf16.msra.mxu0 0
    %3119 = vmatpush.bf16.msra.mxu0 0
    %3120 = vmatpush.bf16.msra.mxu0 0
    %3121 = vmatpush.bf16.msra.mxu0 0
    %3122 = vmatpush.bf16.msra.mxu0 0
    %3123 = vmatpush.bf16.msra.mxu0 0
    %3124 = vmatpush.bf16.msra.mxu0 0
    %3125 = vmatpush.bf16.msra.mxu0 %v3113
    %3126 = vmatmul.bf16.gmra.mxu0 %v3116
    %v3127 = vpop.f32.mrf.mxu0
    %v3128 = vadd.f32 %v3107, %v3127
    %v3129 = vpop.f32.mrf.mxu0
    %3130 = vdwg.mxu0
    %v3132 = vrot.slane %v3128, 2
    %v3133 = vrot.slane %v3128, 4
    %v3136 = vld [vmem:[%s20] sm:$0x1]
    %v3138 = vperm.slane %v3136, 0
    %v3140 = vmul.f32 %v3138, %v3128
    %v3141 = vsub.f32 1.0, %v3136
    %v3143 = vperm.slane %v3141, 0
    %v3145 = vmul.f32 %v3143, %v3133
    %v3146 = vadd.f32 %v3140, %v3145
    %v3147 = vld [vmem:[%s17] sm:$0xf]
    %v3148 = vld [vmem:[%s17 + $0x4] sm:$0xf]
    %v3149 = vld [vmem:[%s17 + $0x8] sm:$0xf]
    %v3150 = vld [vmem:[%s17 + $0xc] sm:$0xf]
    %v3151 = vld [vmem:[%s19] sm:$0x1]
    %v3153 = vperm.slane %v3151, 0
    %v3159 = vunpack.c.l.b16 %v3147
    %v3160 = vunpack.c.l.b16 %v3148
    %v3161 = vunpack.c.l.b16 %v3149
    %v3162 = vunpack.c.l.b16 %v3150
    %v3163 = vpack.c.b16 %v3160, %v3159
    %v3164 = vpack.c.b16 %v3162, %v3161
    %v3168 = vsel %vm77, 0, 0
    %3170 = vmatpush.bf16.msra.mxu0 0
    %3171 = vmatpush.bf16.msra.mxu0 0
    %3172 = vmatpush.bf16.msra.mxu0 0
    %3173 = vmatpush.bf16.msra.mxu0 0
    %3174 = vmatpush.bf16.msra.mxu0 0
    %3175 = vmatpush.bf16.msra.mxu0 0
    %3176 = vmatpush.bf16.msra.mxu0 %v3164
    %3177 = vmatpush.bf16.msra.mxu0 %v3163
    %3178 = vmatmul.bf16.gmra.mxu0 %v3168
    %v3179 = vpop.f32.mrf.mxu0
    %v3180 = vadd.f32 %v3153, %v3179
    %v3181 = vpop.f32.mrf.mxu0
    %3182 = vdwg.mxu0
    %v3183 = vadd.f32 %v3146, %v3180
    %v3184 = vxor.u32 %v3183, 2147483648
    %v3185 = vmul.f32 %v3184, 1.442695
    %v3186 = vpow.pop %v3185
    %v3187 = vadd.f32 %v3186, 1.0
    %v3188 = vrcp.pop %v3187
    %v3189 = vmul.f32 %v3187, %v3188
    %v3190 = vsub.f32 1.0, %v3189
    %v3191 = vmul.f32 %v3188, %v3190
    %v3192 = vadd.f32 %v3188, %v3191
    %vm3193 = vweird.f32 %v3187
    %vm3194 = vweird.f32 %v3188
    %vm3195 = vmor %vm3193, %vm3194
    %v3196 = vsel %vm3195, %v3188, %v3192
    %v3197 = vand.u32 2147483647, %v3187
    %vm3198 = vcmp.eq.f32.partialorder %v3197, 8.507059e+37
    %v3199 = vand.u32 %v3187, 2147483648
    %v3200 = vor.u32 1.1754944e-38, %v3199
    %v3201 = vsel %vm3198, %v3200, %v3196
    %v3202 = vmul.f32 1.0, %v3201
    %3204 = vrot.lane.b32.xlu0 %v3180, 64
    %v3205 = vpop.permute.xlu0 %3204
    %v3207 = vmul.f32 %v3202, %v3205
    %3209 = vrot.lane.b32.xlu0 %v3207, 64
    %v3210 = vpop.permute.xlu0 %3209
    %v3212 = vadd.f32 %v3146, %v3210
    %v3213 = vtanh.pop %v3212
    %v3214 = vsub.f32 1.0, %v3202
    %3216 = vrot.lane.b32.xlu0 %v3213, 96
    %v3217 = vpop.permute.xlu0 %3216
    %v3219 = vmul.f32 %v3214, %v3217
    %v3220 = vmul.f32 %v3202, 0.0
    %v3221 = vadd.f32 %v3219, %v3220
    %v3222 = vld [vmem:[%s2] sm:$0x3]
    %3224 = vrot.lane.b32.xlu0 %v3221, 96
    %v3225 = vpop.permute.xlu0 %3224
    %v3227 = vmul.f32 %v3222, %v3225
    %v3228 = vsub.f32 1.0, %v3222
    %v3229 = vmul.f32 %v3228, 0.0
    %v3230 = vadd.f32 %v3227, %v3229
    %v3231 = vmul.f32 %v3138, %v3132
    %v3232 = vmul.f32 %v3143, %v3132
    %v3233 = vadd.f32 %v3231, %v3232
    %v3234 = vpack.c.bf16 %v3230, %v3230
    %v3236 = vsel %vm77, %v3234, 0
    %3238 = vmatpush.bf16.msra.mxu0 0
    %3239 = vmatpush.bf16.msra.mxu0 0
    %3240 = vmatpush.bf16.msra.mxu0 0
    %3241 = vmatpush.bf16.msra.mxu0 0
    %3242 = vmatpush.bf16.msra.mxu0 0
    %3243 = vmatpush.bf16.msra.mxu0 0
    %3244 = vmatpush.bf16.msra.mxu0 %v3164
    %3245 = vmatpush.bf16.msra.mxu0 %v3163
    %3246 = vmatmul.bf16.gmra.mxu0 %v3236
    %v3247 = vpop.f32.mrf.mxu0
    %v3248 = vadd.f32 %v3153, %v3247
    %v3249 = vpop.f32.mrf.mxu0
    %3250 = vdwg.mxu0
    %v3251 = vadd.f32 %v3233, %v3248
    %v3252 = vxor.u32 %v3251, 2147483648
    %v3253 = vmul.f32 %v3252, 1.442695
    %v3254 = vpow.pop %v3253
    %v3255 = vadd.f32 %v3254, 1.0
    %v3256 = vrcp.pop %v3255
    %v3257 = vmul.f32 %v3255, %v3256
    %v3258 = vsub.f32 1.0, %v3257
    %v3259 = vmul.f32 %v3256, %v3258
    %v3260 = vadd.f32 %v3256, %v3259
    %vm3261 = vweird.f32 %v3255
    %vm3262 = vweird.f32 %v3256
    %vm3263 = vmor %vm3261, %vm3262
    %v3264 = vsel %vm3263, %v3256, %v3260
    %v3265 = vand.u32 2147483647, %v3255
    %vm3266 = vcmp.eq.f32.partialorder %v3265, 8.507059e+37
    %v3267 = vand.u32 %v3255, 2147483648
    %v3268 = vor.u32 1.1754944e-38, %v3267
    %v3269 = vsel %vm3266, %v3268, %v3264
    %v3270 = vmul.f32 1.0, %v3269
    %3272 = vrot.lane.b32.xlu0 %v3248, 64
    %v3273 = vpop.permute.xlu0 %3272
    %v3275 = vmul.f32 %v3270, %v3273
    %3277 = vrot.lane.b32.xlu0 %v3275, 64
    %v3278 = vpop.permute.xlu0 %3277
    %v3280 = vadd.f32 %v3233, %v3278
    %v3281 = vtanh.pop %v3280
    %v3282 = vsub.f32 1.0, %v3270
    %3284 = vrot.lane.b32.xlu0 %v3281, 96
    %v3285 = vpop.permute.xlu0 %3284
    %v3287 = vmul.f32 %v3282, %v3285
    %3289 = vrot.lane.b32.xlu0 %v3230, 32
    %v3290 = vpop.permute.xlu0 %3289
    %v3292 = vmul.f32 %v3270, %v3290
    %v3293 = vadd.f32 %v3287, %v3292
    %s3294 = scalar_lea.vmem %s2, 2
    %v3295 = vld [vmem:[%s3294] sm:$0x3]
    %3297 = vrot.lane.b32.xlu0 %v3293, 96
    %v3298 = vpop.permute.xlu0 %3297
    %v3300 = vmul.f32 %v3295, %v3298
    %v3301 = vsub.f32 1.0, %v3295
    %v3302 = vmul.f32 %v3301, %v3230
    %v3303 = vadd.f32 %v3300, %v3302
    %v3304 = vmul.f32 %v3138, %v3133
    %v3305 = vmul.f32 %v3143, %v3128
    %v3306 = vadd.f32 %v3304, %v3305
    %v3307 = vpack.c.bf16 %v3303, %v3303
    %v3309 = vsel %vm77, %v3307, 0
    %3311 = vmatpush.bf16.msra.mxu0 0
    %3312 = vmatpush.bf16.msra.mxu0 0
    %3313 = vmatpush.bf16.msra.mxu0 0
    %3314 = vmatpush.bf16.msra.mxu0 0
    %3315 = vmatpush.bf16.msra.mxu0 0
    %3316 = vmatpush.bf16.msra.mxu0 0
    %3317 = vmatpush.bf16.msra.mxu0 %v3164
    %3318 = vmatpush.bf16.msra.mxu0 %v3163
    %3319 = vmatmul.bf16.gmra.mxu0 %v3309
    %v3320 = vpop.f32.mrf.mxu0
    %v3321 = vadd.f32 %v3153, %v3320
    %v3322 = vpop.f32.mrf.mxu0
    %3323 = vdwg.mxu0
    %v3324 = vadd.f32 %v3306, %v3321
    %v3325 = vxor.u32 %v3324, 2147483648
    %v3326 = vmul.f32 %v3325, 1.442695
    %v3327 = vpow.pop %v3326
    %v3328 = vadd.f32 %v3327, 1.0
    %v3329 = vrcp.pop %v3328
    %v3330 = vmul.f32 %v3328, %v3329
    %v3331 = vsub.f32 1.0, %v3330
    %v3332 = vmul.f32 %v3329, %v3331
    %v3333 = vadd.f32 %v3329, %v3332
    %vm3334 = vweird.f32 %v3328
    %vm3335 = vweird.f32 %v3329
    %vm3336 = vmor %vm3334, %vm3335
    %v3337 = vsel %vm3336, %v3329, %v3333
    %v3338 = vand.u32 2147483647, %v3328
    %vm3339 = vcmp.eq.f32.partialorder %v3338, 8.507059e+37
    %v3340 = vand.u32 %v3328, 2147483648
    %v3341 = vor.u32 1.1754944e-38, %v3340
    %v3342 = vsel %vm3339, %v3341, %v3337
    %v3343 = vmul.f32 1.0, %v3342
    %3345 = vrot.lane.b32.xlu0 %v3321, 64
    %v3346 = vpop.permute.xlu0 %3345
    %v3348 = vmul.f32 %v3343, %v3346
    %3350 = vrot.lane.b32.xlu0 %v3348, 64
    %v3351 = vpop.permute.xlu0 %3350
    %v3353 = vadd.f32 %v3306, %v3351
    %v3354 = vtanh.pop %v3353
    %v3355 = vsub.f32 1.0, %v3343
    %3357 = vrot.lane.b32.xlu0 %v3354, 96
    %v3358 = vpop.permute.xlu0 %3357
    %v3360 = vmul.f32 %v3355, %v3358
    %3362 = vrot.lane.b32.xlu0 %v3303, 32
    %v3363 = vpop.permute.xlu0 %3362
    %v3365 = vmul.f32 %v3343, %v3363
    %v3366 = vadd.f32 %v3360, %v3365
    %s3367 = scalar_lea.vmem %s2, 4
    %v3368 = vld [vmem:[%s3367] sm:$0x3]
    %3370 = vrot.lane.b32.xlu0 %v3366, 96
    %v3371 = vpop.permute.xlu0 %3370
    %v3373 = vmul.f32 %v3368, %v3371
    %v3374 = vsel %vm335, %v3227, %v3373
    %v3375 = vsel %vm335, %v3373, %v3227
    %vm3376 = vcmask 254976
    %3377 = vst.msk [vmem:[#allocation2] sm:$0x3] %vm3376, %v3374
    %3378 = vst.msk [vmem:[#allocation2 + $0x2] sm:$0x3] %vm3376, %v3300
    %3379 = vst.msk [vmem:[#allocation2 + $0x4] sm:$0x3] %vm3376, %v3375
    // Predicated region
    $region86: #{tpu_custom_call.1} parent=1 // pred_check
      _
    $region87: #{tpu_custom_call.1} parent=1 // pred_check_branch
      %3381 = sbr.rel (0) target = $region89
    $region88: #{tpu_custom_call.1} parent=1 // pred_region
      %3383 = vsyncadd [#allocation3], 0
      %s3384 = sshll.u32 [#allocation2], 4
      %s3385 = int_to_ptr.vmem [resolvable:$true] %s3384
      %s3386 = sshll.u32 %s21, 4
      %s3387 = int_to_ptr.hbm [resolvable:$true] %s3386
      %3392 = dma.vmem_to_hbm [thread:$0]  %s3385, 96, %s3387, [#allocation3], 32, 32, 2
    $region89: #{tpu_custom_call.1} parent=1 // pred_fallthru
      _
    // Predicated region
    $region90: #{tpu_custom_call.1} parent=1 // pred_check
      _
    $region91: #{tpu_custom_call.1} parent=1 // pred_check_branch
      %3394 = sbr.rel (0) target = $region93
    $region92: #{tpu_custom_call.1} parent=1 // pred_region
      %3396 = dma.done [#allocation3], 96
    $region93: #{tpu_custom_call.1} parent=1 // pred_fallthru
      _
    %3397 = vsyncpa [#allocation3], 1

</llo_original>
